<compile_context>
chip_gen: v5e
topology: v5e:2x2
jax: 0.10.0
libtpu: 0.0.40
codegen_flags: <defaults>
</compile_context>

<pallas_src>
import functools
import numpy as np

import jax
import jax.numpy as jnp
from jax.experimental import pallas as pl
from jax.experimental.pallas import tpu as pltpu

TARGET_ROWS = 1024  # target ray-points processed per grid step


def _softplus_beta10(x):
    # torch.nn.Softplus(beta=10.0, threshold=20.0)
    z = 10.0 * x
    return jnp.where(z > 20.0, x, jnp.log1p(jnp.exp(jnp.minimum(z, 20.0))) / 10.0)


def _nerf_kernel(pts_ref, dray_ref, freqs_ref,
                 w1_ref, b1_ref, w2_ref, b2_ref,
                 wc1f_ref, bc1_ref, wc1e_ref,
                 wd_ref, bd_ref, wc2_ref, bc2_ref,
                 out_ref, *, points_per_ray):
    freqs = freqs_ref[...]                       # (1, K) f32

    def hemb(x):
        # HarmonicEmbedding on VPU/EUP only: raw embed column d*K+k == x[:, d]*freqs[k],
        # layout [sin(d0..d2) | cos(d0..d2)] exactly matching the PyTorch module.
        e = jnp.concatenate([x[:, d:d + 1] * freqs for d in range(3)], axis=-1)
        return jnp.concatenate([jnp.sin(e), jnp.cos(e)], axis=-1)

    def bdot(a, w_ref):
        # single-pass bf16 MXU matmul, f32 accumulation (weights already bf16)
        return jnp.dot(a.astype(jnp.bfloat16), w_ref[...],
                       preferred_element_type=jnp.float32)

    # ---- per-ray work (once per ray, not once per point) --------------------
    dir_emb = hemb(dray_ref[...])                               # (rays, EMB)
    dcontrib = bdot(dir_emb, wc1e_ref)                          # (rays, H)

    # ---- per-point trunk -----------------------------------------------------
    pts_emb = hemb(pts_ref[...])                                # (rows, EMB)
    h1 = _softplus_beta10(bdot(pts_emb, w1_ref) + b1_ref[...])  # (rows, H)
    feats = _softplus_beta10(bdot(h1, w2_ref) + b2_ref[...])    # (rows, H)

    # ---- density head: f32 VPU multiply + cross-lane (XLU) reduce -----------
    d_raw = _softplus_beta10(
        jnp.sum(feats * wd_ref[...], axis=-1, keepdims=True) + bd_ref[...])
    dens = 1.0 - jnp.exp(-d_raw)                                # (rows, 1)

    # ---- color branch --------------------------------------------------------
    # Broadcast the per-ray direction term to the P points of each ray
    # (rows are ray-major: P consecutive points per ray).
    pre = bdot(feats, wc1f_ref) + bc1_ref[...]                  # (rows, H)
    rays, hidden = dcontrib.shape
    pre = (pre.reshape(rays, points_per_ray, hidden)
           + dcontrib[:, None, :]).reshape(rays * points_per_ray, hidden)
    c1 = _softplus_beta10(pre)
    rgb = jax.nn.sigmoid(bdot(c1, wc2_ref) + bc2_ref[...])      # (rows, 3)

    # single lane-packed (rows, 4) store: density | rgb
    out_ref[...] = jnp.concatenate([dens, rgb], axis=-1)


def init_params(key, n_harmonic_functions=60, n_hidden_neurons=256, omega0=0.1):
    """Deterministic parameter init mirroring torch.nn.Linear defaults (raw / unfused)."""
    K = n_harmonic_functions
    embed_dim = K * 2 * 3
    ks = jax.random.split(key, 5)

    def lin(k, fan_in, fan_out):
        kw, kb = jax.random.split(k)
        bound = 1.0 / np.sqrt(fan_in)
        w = jax.random.uniform(kw, (fan_in, fan_out), jnp.float32, -bound, bound)
        b = jax.random.uniform(kb, (1, fan_out), jnp.float32, -bound, bound)
        return w, b

    w1, b1 = lin(ks[0], embed_dim, n_hidden_neurons)
    w2, b2 = lin(ks[1], n_hidden_neurons, n_hidden_neurons)
    wc1, bc1 = lin(ks[2], n_hidden_neurons + embed_dim, n_hidden_neurons)
    wc2, bc2 = lin(ks[3], n_hidden_neurons, 3)
    wd, bd = lin(ks[4], n_hidden_neurons, 1)
    bd = bd.at[0, 0].set(-1.5)  # self.density_layer[0].bias.data[0] = -1.5

    freqs = jnp.asarray((omega0 * 2.0 ** np.arange(K)).astype(np.float32))
    return dict(freqs=freqs, w1=w1, b1=b1, w2=w2, b2=b2,
                wc1=wc1, bc1=bc1, wc2=wc2, bc2=bc2, wd=wd, bd=bd)


def pack_params(raw):
    """Split the color layer, transpose the density weight to a row, cast MXU weights to bf16."""
    H = raw['w1'].shape[1]
    bf16 = lambda a: a.astype(jnp.bfloat16)
    return dict(
        freqs=raw['freqs'].reshape(1, -1),          # (1, K) f32
        w1=bf16(raw['w1']), b1=raw['b1'],
        w2=bf16(raw['w2']), b2=raw['b2'],
        wc1f=bf16(raw['wc1'][:H]),                  # (H, H)   features -> color hidden
        bc1=raw['bc1'],
        wc1e=bf16(raw['wc1'][H:]),                  # (EMB, H) dir embedding -> color hidden
        wd=raw['wd'].reshape(1, -1),                # (1, H)   f32 density row (VPU path)
        bd=raw['bd'],                               # (1, 1)   f32
        wc2=bf16(raw['wc2']), bc2=raw['bc2'])       # (H, 3), (1, 3)


def nerf_forward(kp, origins, directions, lengths, *, target_rows=TARGET_ROWS):
    """Forward pass of NeuralRadianceField.

    origins:    (B, R, 3)
    directions: (B, R, 3)
    lengths:    (B, R, P)
    returns (rays_densities (B, R, P, 1), rays_colors (B, R, P, 3))
    """
    embed_dim = kp['w1'].shape[0]
    hidden = kp['w1'].shape[1]
    K = kp['freqs'].shape[-1]
    B, R, _ = origins.shape
    P = lengths.shape[-1]
    n_rays = B * R

    # Tile geometry: whole rays per tile so the direction term is computed once
    # per ray; rays_per_tile multiple of 8 (sublane constraint), capped so small
    # inputs are not over-padded.
    rays_per_tile = max(8, -(-target_rows // P))
    rays_per_tile = ((rays_per_tile + 7) // 8) * 8
    rays_per_tile = min(rays_per_tile, ((n_rays + 7) // 8) * 8)
    tile_rows = rays_per_tile * P
    padded_rays = ((n_rays + rays_per_tile - 1) // rays_per_tile) * rays_per_tile
    n_rows = padded_rays * P
    num_tiles = padded_rays // rays_per_tile

    # ray_bundle_to_ray_points (rows are ray-major: P consecutive points per ray)
    pts = origins[..., None, :] + directions[..., None, :] * lengths[..., :, None]
    pts_flat = pts.reshape(n_rays * P, 3).astype(jnp.float32)
    pts_flat = jnp.pad(pts_flat, ((0, n_rows - n_rays * P), (0, 0)))

    # F.normalize(directions, dim=-1) — one row per ray (NOT per point)
    dnorm = directions / jnp.maximum(
        jnp.linalg.norm(directions, axis=-1, keepdims=True), 1e-12)
    dirs_ray = dnorm.reshape(n_rays, 3).astype(jnp.float32)
    dirs_ray = jnp.pad(dirs_ray, ((0, padded_rays - n_rays), (0, 0)))

    def cspec(shape):
        # grid-invariant operand: DMA'd once, single-buffered to save VMEM
        return pl.BlockSpec(shape, lambda i: (0,) * len(shape),
                            pipeline_mode=pl.Buffered(1))

    out = pl.pallas_call(
        functools.partial(_nerf_kernel, points_per_ray=P),
        out_shape=jax.ShapeDtypeStruct((n_rows, 4), jnp.float32),
        grid_spec=pltpu.PrefetchScalarGridSpec(
            num_scalar_prefetch=0,
            grid=(num_tiles,),
            in_specs=[
                pl.BlockSpec((tile_rows, 3), lambda i: (i, 0)),      # ray points
                pl.BlockSpec((rays_per_tile, 3), lambda i: (i, 0)),  # per-ray dirs
                cspec((1, K)),                                       # harmonic freqs
                cspec((embed_dim, hidden)), cspec((1, hidden)),      # mlp layer 0
                cspec((hidden, hidden)), cspec((1, hidden)),         # mlp layer 1
                cspec((hidden, hidden)), cspec((1, hidden)),         # color hidden (features)
                cspec((embed_dim, hidden)),                          # color hidden (dir emb)
                cspec((1, hidden)), cspec((1, 1)),                   # density row + bias
                cspec((hidden, 3)), cspec((1, 3)),                   # rgb head
            ],
            out_specs=pl.BlockSpec((tile_rows, 4), lambda i: (i, 0)),
        ),
        compiler_params=pltpu.CompilerParams(
            dimension_semantics=("parallel",),
            vmem_limit_bytes=32 * 1024 * 1024),
    )(pts_flat, dirs_ray, kp['freqs'],
      kp['w1'], kp['b1'], kp['w2'], kp['b2'],
      kp['wc1f'], kp['bc1'], kp['wc1e'],
      kp['wd'], kp['bd'], kp['wc2'], kp['bc2'])

    N = n_rays * P
    rays_densities = out[:N, 0:1].reshape(B, R, P, 1)
    rays_colors = out[:N, 1:4].reshape(B, R, P, 3)
    return rays_densities, rays_colors


def nerf_reference(raw, origins, directions, lengths):
    """Pure-JAX f32 reference mirroring the PyTorch module semantics (unfused weights)."""
    hp = functools.partial(jnp.dot, precision=jax.lax.Precision.HIGHEST)
    freqs = raw['freqs']

    def hemb(x):
        e = (x[..., None] * freqs).reshape(*x.shape[:-1], -1)
        return jnp.concatenate([jnp.sin(e), jnp.cos(e)], axis=-1)

    pts = origins[..., None, :] + directions[..., None, :] * lengths[..., :, None]
    emb = hemb(pts)
    h1 = _softplus_beta10(hp(emb, raw['w1']) + raw['b1'])
    feats = _softplus_beta10(hp(h1, raw['w2']) + raw['b2'])
    raw_d = _softplus_beta10(hp(feats, raw['wd']) + raw['bd'])
    dens = 1.0 - jnp.exp(-raw_d)

    dn = directions / jnp.maximum(
        jnp.linalg.norm(directions, axis=-1, keepdims=True), 1e-12)
    demb = hemb(dn)
    demb_e = jnp.broadcast_to(demb[..., None, :],
                              (*feats.shape[:-1], demb.shape[-1]))
    cin = jnp.concatenate([feats, demb_e], axis=-1)
    c1 = _softplus_beta10(hp(cin, raw['wc1']) + raw['bc1'])
    cols = jax.nn.sigmoid(hp(c1, raw['wc2']) + raw['bc2'])
    return dens, cols


if __name__ == "__main__":
    # Small but structurally faithful configuration (module defaults: K=60, H=256).
    N_HARMONIC = 10
    N_HIDDEN = 64
    B, R, P = 2, 4, 8   # minibatch, rays, points-per-ray

    key = jax.random.PRNGKey(0)
    k_o, k_d, k_l, k_p = jax.random.split(key, 4)
    origins = 0.5 * jax.random.normal(k_o, (B, R, 3), jnp.float32)
    directions = jax.random.normal(k_d, (B, R, 3), jnp.float32)
    lengths = jax.random.uniform(k_l, (B, R, P), jnp.float32, 0.1, 1.0)

    raw_params = init_params(k_p, n_harmonic_functions=N_HARMONIC,
                             n_hidden_neurons=N_HIDDEN)
    kernel_params = pack_params(raw_params)

    dens, cols = nerf_forward(kernel_params, origins, directions, lengths)
    jax.block_until_ready((dens, cols))

    ref_dens, ref_cols = nerf_reference(raw_params, origins, directions, lengths)

    assert dens.shape == (B, R, P, 1) and cols.shape == (B, R, P, 3)
    # Trunk matmuls run as single-pass bf16 on the MXU (f32 accumulate); the harmonic
    # embedding and the density head are exact f32, so tolerance reflects bf16 operand
    # rounding through the hidden layers only.
    assert np.allclose(np.asarray(dens), np.asarray(ref_dens), atol=1e-2, rtol=1e-2)
    assert np.allclose(np.asarray(cols), np.asarray(ref_cols), atol=1e-2, rtol=1e-2)
    print("KERNEL_OK")
</pallas_src>

<mosaic_0001>
module attributes {stable_mosaic.version = 11 : i64} {
  func.func @_nerf_kernel(%arg0: i32, %arg1: memref<64x3xf32, #tpu.memory_space<vmem>>, %arg2: memref<8x3xf32, #tpu.memory_space<vmem>>, %arg3: memref<1x10xf32, #tpu.memory_space<vmem>>, %arg4: memref<60x64xbf16, #tpu.memory_space<vmem>>, %arg5: memref<1x64xf32, #tpu.memory_space<vmem>>, %arg6: memref<64x64xbf16, #tpu.memory_space<vmem>>, %arg7: memref<1x64xf32, #tpu.memory_space<vmem>>, %arg8: memref<64x64xbf16, #tpu.memory_space<vmem>>, %arg9: memref<1x64xf32, #tpu.memory_space<vmem>>, %arg10: memref<60x64xbf16, #tpu.memory_space<vmem>>, %arg11: memref<1x64xf32, #tpu.memory_space<vmem>>, %arg12: memref<1x1xf32, #tpu.memory_space<vmem>>, %arg13: memref<64x3xbf16, #tpu.memory_space<vmem>>, %arg14: memref<1x3xf32, #tpu.memory_space<vmem>>, %arg15: memref<64x4xf32, #tpu.memory_space<vmem>>) attributes {dimension_semantics = [#tpu.dimension_semantics<parallel>], iteration_bounds = array<i64: 1>, scalar_prefetch = 0 : i64, scratch_operands = 0 : i64, tpu.core_type = #tpu.core_type<tc>, window_params = [{transform_indices = @transform_0, window_bounds = array<i64: 64, 3>}, {transform_indices = @transform_1, window_bounds = array<i64: 8, 3>}, {pipeline_mode = #tpu.pipeline_mode<synchronous>, transform_indices = @transform_2, window_bounds = array<i64: 1, 10>}, {pipeline_mode = #tpu.pipeline_mode<synchronous>, transform_indices = @transform_3, window_bounds = array<i64: 60, 64>}, {pipeline_mode = #tpu.pipeline_mode<synchronous>, transform_indices = @transform_4, window_bounds = array<i64: 1, 64>}, {pipeline_mode = #tpu.pipeline_mode<synchronous>, transform_indices = @transform_5, window_bounds = array<i64: 64, 64>}, {pipeline_mode = #tpu.pipeline_mode<synchronous>, transform_indices = @transform_6, window_bounds = array<i64: 1, 64>}, {pipeline_mode = #tpu.pipeline_mode<synchronous>, transform_indices = @transform_7, window_bounds = array<i64: 64, 64>}, {pipeline_mode = #tpu.pipeline_mode<synchronous>, transform_indices = @transform_8, window_bounds = array<i64: 1, 64>}, {pipeline_mode = #tpu.pipeline_mode<synchronous>, transform_indices = @transform_9, window_bounds = array<i64: 60, 64>}, {pipeline_mode = #tpu.pipeline_mode<synchronous>, transform_indices = @transform_10, window_bounds = array<i64: 1, 64>}, {pipeline_mode = #tpu.pipeline_mode<synchronous>, transform_indices = @transform_11, window_bounds = array<i64: 1, 1>}, {pipeline_mode = #tpu.pipeline_mode<synchronous>, transform_indices = @transform_12, window_bounds = array<i64: 64, 3>}, {pipeline_mode = #tpu.pipeline_mode<synchronous>, transform_indices = @transform_13, window_bounds = array<i64: 1, 3>}, {transform_indices = @transform_14, window_bounds = array<i64: 64, 4>}]} {
    %c0 = arith.constant 0 : index
    %c0_0 = arith.constant 0 : index
    %0 = vector.load %arg3[%c0, %c0_0] : memref<1x10xf32, #tpu.memory_space<vmem>>, vector<1x10xf32>
    %c0_1 = arith.constant 0 : index
    %c0_2 = arith.constant 0 : index
    %1 = vector.load %arg2[%c0_1, %c0_2] : memref<8x3xf32, #tpu.memory_space<vmem>>, vector<8x3xf32>
    %2 = vector.extract_strided_slice %1 {offsets = [0, 0], sizes = [8, 1], strides = [1, 1]} : vector<8x3xf32> to vector<8x1xf32>
    %3 = vector.broadcast %2 : vector<8x1xf32> to vector<8x10xf32>
    %4 = vector.broadcast %0 : vector<1x10xf32> to vector<8x10xf32>
    %5 = arith.mulf %3, %4 : vector<8x10xf32>
    %6 = vector.extract_strided_slice %1 {offsets = [0, 1], sizes = [8, 1], strides = [1, 1]} : vector<8x3xf32> to vector<8x1xf32>
    %7 = vector.broadcast %6 : vector<8x1xf32> to vector<8x10xf32>
    %8 = vector.broadcast %0 : vector<1x10xf32> to vector<8x10xf32>
    %9 = arith.mulf %7, %8 : vector<8x10xf32>
    %10 = vector.extract_strided_slice %1 {offsets = [0, 2], sizes = [8, 1], strides = [1, 1]} : vector<8x3xf32> to vector<8x1xf32>
    %11 = vector.broadcast %10 : vector<8x1xf32> to vector<8x10xf32>
    %12 = vector.broadcast %0 : vector<1x10xf32> to vector<8x10xf32>
    %13 = arith.mulf %11, %12 : vector<8x10xf32>
    %14 = tpu.concatenate %5, %9, %13 in 1 : vector<8x10xf32>, vector<8x10xf32>, vector<8x10xf32> -> vector<8x30xf32>
    %15 = math.sin %14 : vector<8x30xf32>
    %16 = math.cos %14 : vector<8x30xf32>
    %17 = tpu.concatenate %15, %16 in 1 : vector<8x30xf32>, vector<8x30xf32> -> vector<8x60xf32>
    %18 = arith.truncf %17 : vector<8x60xf32> to vector<8x60xbf16>
    %c0_3 = arith.constant 0 : index
    %c0_4 = arith.constant 0 : index
    %19 = vector.load %arg10[%c0_3, %c0_4] : memref<60x64xbf16, #tpu.memory_space<vmem>>, vector<60x64xbf16>
    %cst = arith.constant dense<0.000000e+00> : vector<8x64xf32>
    %20 = tpu.matmul %18, %19, %cst {dimension_numbers = #tpu.dot_dimension_numbers<[1], [0], [0], [1], [0, 0, 1, 1], [], []>} : vector<8x60xbf16>, vector<60x64xbf16>, vector<8x64xf32> -> vector<8x64xf32>
    %c0_5 = arith.constant 0 : index
    %c0_6 = arith.constant 0 : index
    %21 = vector.load %arg1[%c0_5, %c0_6] : memref<64x3xf32, #tpu.memory_space<vmem>>, vector<64x3xf32>
    %22 = vector.extract_strided_slice %21 {offsets = [0, 0], sizes = [64, 1], strides = [1, 1]} : vector<64x3xf32> to vector<64x1xf32>
    %23 = vector.broadcast %22 : vector<64x1xf32> to vector<64x10xf32>
    %24 = vector.broadcast %0 : vector<1x10xf32> to vector<64x10xf32>
    %25 = arith.mulf %23, %24 : vector<64x10xf32>
    %26 = vector.extract_strided_slice %21 {offsets = [0, 1], sizes = [64, 1], strides = [1, 1]} : vector<64x3xf32> to vector<64x1xf32>
    %27 = vector.broadcast %26 : vector<64x1xf32> to vector<64x10xf32>
    %28 = vector.broadcast %0 : vector<1x10xf32> to vector<64x10xf32>
    %29 = arith.mulf %27, %28 : vector<64x10xf32>
    %30 = vector.extract_strided_slice %21 {offsets = [0, 2], sizes = [64, 1], strides = [1, 1]} : vector<64x3xf32> to vector<64x1xf32>
    %31 = vector.broadcast %30 : vector<64x1xf32> to vector<64x10xf32>
    %32 = vector.broadcast %0 : vector<1x10xf32> to vector<64x10xf32>
    %33 = arith.mulf %31, %32 : vector<64x10xf32>
    %34 = tpu.concatenate %25, %29, %33 in 1 : vector<64x10xf32>, vector<64x10xf32>, vector<64x10xf32> -> vector<64x30xf32>
    %35 = math.sin %34 : vector<64x30xf32>
    %36 = math.cos %34 : vector<64x30xf32>
    %37 = tpu.concatenate %35, %36 in 1 : vector<64x30xf32>, vector<64x30xf32> -> vector<64x60xf32>
    %38 = arith.truncf %37 : vector<64x60xf32> to vector<64x60xbf16>
    %c0_7 = arith.constant 0 : index
    %c0_8 = arith.constant 0 : index
    %39 = vector.load %arg4[%c0_7, %c0_8] : memref<60x64xbf16, #tpu.memory_space<vmem>>, vector<60x64xbf16>
    %cst_9 = arith.constant dense<0.000000e+00> : vector<64x64xf32>
    %40 = tpu.matmul %38, %39, %cst_9 {dimension_numbers = #tpu.dot_dimension_numbers<[1], [0], [0], [1], [0, 0, 1, 1], [], []>} : vector<64x60xbf16>, vector<60x64xbf16>, vector<64x64xf32> -> vector<64x64xf32>
    %c0_10 = arith.constant 0 : index
    %c0_11 = arith.constant 0 : index
    %41 = vector.load %arg5[%c0_10, %c0_11] : memref<1x64xf32, #tpu.memory_space<vmem>>, vector<1x64xf32>
    %42 = vector.broadcast %41 : vector<1x64xf32> to vector<64x64xf32>
    %43 = arith.addf %40, %42 : vector<64x64xf32>
    %cst_12 = arith.constant 1.000000e+01 : f32
    %44 = vector.broadcast %cst_12 : f32 to vector<64x64xf32>
    %45 = arith.mulf %44, %43 : vector<64x64xf32>
    %cst_13 = arith.constant 2.000000e+01 : f32
    %46 = vector.broadcast %cst_13 : f32 to vector<64x64xf32>
    %47 = arith.cmpf ogt, %45, %46 : vector<64x64xf32>
    %cst_14 = arith.constant 2.000000e+01 : f32
    %48 = vector.broadcast %cst_14 : f32 to vector<64x64xf32>
    %49 = arith.minimumf %45, %48 : vector<64x64xf32>
    %50 = math.exp %49 : vector<64x64xf32>
    %51 = math.log1p %50 : vector<64x64xf32>
    %cst_15 = arith.constant 1.000000e+01 : f32
    %52 = vector.broadcast %cst_15 : f32 to vector<64x64xf32>
    %53 = arith.divf %51, %52 : vector<64x64xf32>
    %54 = arith.select %47, %43, %53 : vector<64x64xi1>, vector<64x64xf32>
    %55 = arith.truncf %54 : vector<64x64xf32> to vector<64x64xbf16>
    %c0_16 = arith.constant 0 : index
    %c0_17 = arith.constant 0 : index
    %56 = vector.load %arg6[%c0_16, %c0_17] : memref<64x64xbf16, #tpu.memory_space<vmem>>, vector<64x64xbf16>
    %cst_18 = arith.constant dense<0.000000e+00> : vector<64x64xf32>
    %57 = tpu.matmul %55, %56, %cst_18 {dimension_numbers = #tpu.dot_dimension_numbers<[1], [0], [0], [1], [0, 0, 1, 1], [], []>} : vector<64x64xbf16>, vector<64x64xbf16>, vector<64x64xf32> -> vector<64x64xf32>
    %c0_19 = arith.constant 0 : index
    %c0_20 = arith.constant 0 : index
    %58 = vector.load %arg7[%c0_19, %c0_20] : memref<1x64xf32, #tpu.memory_space<vmem>>, vector<1x64xf32>
    %59 = vector.broadcast %58 : vector<1x64xf32> to vector<64x64xf32>
    %60 = arith.addf %57, %59 : vector<64x64xf32>
    %cst_21 = arith.constant 1.000000e+01 : f32
    %61 = vector.broadcast %cst_21 : f32 to vector<64x64xf32>
    %62 = arith.mulf %61, %60 : vector<64x64xf32>
    %cst_22 = arith.constant 2.000000e+01 : f32
    %63 = vector.broadcast %cst_22 : f32 to vector<64x64xf32>
    %64 = arith.cmpf ogt, %62, %63 : vector<64x64xf32>
    %cst_23 = arith.constant 2.000000e+01 : f32
    %65 = vector.broadcast %cst_23 : f32 to vector<64x64xf32>
    %66 = arith.minimumf %62, %65 : vector<64x64xf32>
    %67 = math.exp %66 : vector<64x64xf32>
    %68 = math.log1p %67 : vector<64x64xf32>
    %cst_24 = arith.constant 1.000000e+01 : f32
    %69 = vector.broadcast %cst_24 : f32 to vector<64x64xf32>
    %70 = arith.divf %68, %69 : vector<64x64xf32>
    %71 = arith.select %64, %60, %70 : vector<64x64xi1>, vector<64x64xf32>
    %c0_25 = arith.constant 0 : index
    %c0_26 = arith.constant 0 : index
    %72 = vector.load %arg11[%c0_25, %c0_26] : memref<1x64xf32, #tpu.memory_space<vmem>>, vector<1x64xf32>
    %73 = vector.broadcast %72 : vector<1x64xf32> to vector<64x64xf32>
    %74 = arith.mulf %71, %73 : vector<64x64xf32>
    %cst_27 = arith.constant dense<0.000000e+00> : vector<64xf32>
    %75 = vector.multi_reduction <add>, %74, %cst_27 [1] : vector<64x64xf32> to vector<64xf32>
    %76 = vector.shape_cast %75 : vector<64xf32> to vector<64x1xf32>
    %c0_28 = arith.constant 0 : index
    %c0_29 = arith.constant 0 : index
    %77 = vector.load %arg12[%c0_28, %c0_29] : memref<1x1xf32, #tpu.memory_space<vmem>>, vector<1x1xf32>
    %78 = vector.broadcast %77 : vector<1x1xf32> to vector<64x1xf32>
    %79 = arith.addf %76, %78 : vector<64x1xf32>
    %cst_30 = arith.constant 1.000000e+01 : f32
    %80 = vector.broadcast %cst_30 : f32 to vector<64x1xf32>
    %81 = arith.mulf %80, %79 : vector<64x1xf32>
    %cst_31 = arith.constant 2.000000e+01 : f32
    %82 = vector.broadcast %cst_31 : f32 to vector<64x1xf32>
    %83 = arith.cmpf ogt, %81, %82 : vector<64x1xf32>
    %cst_32 = arith.constant 2.000000e+01 : f32
    %84 = vector.broadcast %cst_32 : f32 to vector<64x1xf32>
    %85 = arith.minimumf %81, %84 : vector<64x1xf32>
    %86 = math.exp %85 : vector<64x1xf32>
    %87 = math.log1p %86 : vector<64x1xf32>
    %cst_33 = arith.constant 1.000000e+01 : f32
    %88 = vector.broadcast %cst_33 : f32 to vector<64x1xf32>
    %89 = arith.divf %87, %88 : vector<64x1xf32>
    %90 = arith.select %83, %79, %89 : vector<64x1xi1>, vector<64x1xf32>
    %cst_34 = arith.constant 0.000000e+00 : f32
    %91 = vector.broadcast %cst_34 : f32 to vector<64x1xf32>
    %92 = arith.subf %91, %90 : vector<64x1xf32>
    %93 = math.exp %92 : vector<64x1xf32>
    %cst_35 = arith.constant 1.000000e+00 : f32
    %94 = vector.broadcast %cst_35 : f32 to vector<64x1xf32>
    %95 = arith.subf %94, %93 : vector<64x1xf32>
    %96 = arith.truncf %71 : vector<64x64xf32> to vector<64x64xbf16>
    %c0_36 = arith.constant 0 : index
    %c0_37 = arith.constant 0 : index
    %97 = vector.load %arg8[%c0_36, %c0_37] : memref<64x64xbf16, #tpu.memory_space<vmem>>, vector<64x64xbf16>
    %cst_38 = arith.constant dense<0.000000e+00> : vector<64x64xf32>
    %98 = tpu.matmul %96, %97, %cst_38 {dimension_numbers = #tpu.dot_dimension_numbers<[1], [0], [0], [1], [0, 0, 1, 1], [], []>} : vector<64x64xbf16>, vector<64x64xbf16>, vector<64x64xf32> -> vector<64x64xf32>
    %c0_39 = arith.constant 0 : index
    %c0_40 = arith.constant 0 : index
    %99 = vector.load %arg9[%c0_39, %c0_40] : memref<1x64xf32, #tpu.memory_space<vmem>>, vector<1x64xf32>
    %100 = vector.broadcast %99 : vector<1x64xf32> to vector<64x64xf32>
    %101 = arith.addf %98, %100 : vector<64x64xf32>
    %102 = vector.shape_cast %101 : vector<64x64xf32> to vector<8x8x64xf32>
    %103 = vector.shape_cast %20 : vector<8x64xf32> to vector<8x1x64xf32>
    %104 = vector.broadcast %103 : vector<8x1x64xf32> to vector<8x8x64xf32>
    %105 = arith.addf %102, %104 : vector<8x8x64xf32>
    %106 = vector.shape_cast %105 : vector<8x8x64xf32> to vector<64x64xf32>
    %cst_41 = arith.constant 1.000000e+01 : f32
    %107 = vector.broadcast %cst_41 : f32 to vector<64x64xf32>
    %108 = arith.mulf %107, %106 : vector<64x64xf32>
    %cst_42 = arith.constant 2.000000e+01 : f32
    %109 = vector.broadcast %cst_42 : f32 to vector<64x64xf32>
    %110 = arith.cmpf ogt, %108, %109 : vector<64x64xf32>
    %cst_43 = arith.constant 2.000000e+01 : f32
    %111 = vector.broadcast %cst_43 : f32 to vector<64x64xf32>
    %112 = arith.minimumf %108, %111 : vector<64x64xf32>
    %113 = math.exp %112 : vector<64x64xf32>
    %114 = math.log1p %113 : vector<64x64xf32>
    %cst_44 = arith.constant 1.000000e+01 : f32
    %115 = vector.broadcast %cst_44 : f32 to vector<64x64xf32>
    %116 = arith.divf %114, %115 : vector<64x64xf32>
    %117 = arith.select %110, %106, %116 : vector<64x64xi1>, vector<64x64xf32>
    %118 = arith.truncf %117 : vector<64x64xf32> to vector<64x64xbf16>
    %c0_45 = arith.constant 0 : index
    %c0_46 = arith.constant 0 : index
    %119 = vector.load %arg13[%c0_45, %c0_46] : memref<64x3xbf16, #tpu.memory_space<vmem>>, vector<64x3xbf16>
    %cst_47 = arith.constant dense<0.000000e+00> : vector<64x3xf32>
    %120 = tpu.matmul %118, %119, %cst_47 {dimension_numbers = #tpu.dot_dimension_numbers<[1], [0], [0], [1], [0, 0, 1, 1], [], []>} : vector<64x64xbf16>, vector<64x3xbf16>, vector<64x3xf32> -> vector<64x3xf32>
    %c0_48 = arith.constant 0 : index
    %c0_49 = arith.constant 0 : index
    %121 = vector.load %arg14[%c0_48, %c0_49] : memref<1x3xf32, #tpu.memory_space<vmem>>, vector<1x3xf32>
    %122 = vector.broadcast %121 : vector<1x3xf32> to vector<64x3xf32>
    %123 = arith.addf %120, %122 : vector<64x3xf32>
    %124 = arith.negf %123 : vector<64x3xf32>
    %125 = math.exp %124 : vector<64x3xf32>
    %cst_50 = arith.constant 1.000000e+00 : f32
    %126 = vector.broadcast %cst_50 : f32 to vector<64x3xf32>
    %127 = arith.addf %126, %125 : vector<64x3xf32>
    %128 = arith.divf %126, %127 : vector<64x3xf32>
    %129 = tpu.concatenate %95, %128 in 1 : vector<64x1xf32>, vector<64x3xf32> -> vector<64x4xf32>
    %c0_51 = arith.constant 0 : index
    %c0_52 = arith.constant 0 : index
    %130 = vector.load %arg15[%c0_51, %c0_52] : memref<64x4xf32, #tpu.memory_space<vmem>>, vector<64x4xf32>
    tpu.vector_store %arg15[%c0_51, %c0_52], %129 {strides = array<i32>} : memref<64x4xf32, #tpu.memory_space<vmem>>, vector<64x4xf32>,
    return
  }
  func.func @transform_0(%arg0: i32) -> (i32, i32) {
    %c0_i32 = arith.constant 0 : i32
    %c0_i32_0 = arith.constant 0 : i32
    return %arg0, %c0_i32 : i32, i32
  }
  func.func @transform_1(%arg0: i32) -> (i32, i32) {
    %c0_i32 = arith.constant 0 : i32
    %c0_i32_0 = arith.constant 0 : i32
    return %arg0, %c0_i32 : i32, i32
  }
  func.func @transform_2(%arg0: i32) -> (i32, i32) {
    %c0_i32 = arith.constant 0 : i32
    %c0_i32_0 = arith.constant 0 : i32
    %c0_i32_1 = arith.constant 0 : i32
    return %c0_i32, %c0_i32_0 : i32, i32
  }
  func.func @transform_3(%arg0: i32) -> (i32, i32) {
    %c0_i32 = arith.constant 0 : i32
    %c0_i32_0 = arith.constant 0 : i32
    %c0_i32_1 = arith.constant 0 : i32
    return %c0_i32, %c0_i32_0 : i32, i32
  }
  func.func @transform_4(%arg0: i32) -> (i32, i32) {
    %c0_i32 = arith.constant 0 : i32
    %c0_i32_0 = arith.constant 0 : i32
    %c0_i32_1 = arith.constant 0 : i32
    return %c0_i32, %c0_i32_0 : i32, i32
  }
  func.func @transform_5(%arg0: i32) -> (i32, i32) {
    %c0_i32 = arith.constant 0 : i32
    %c0_i32_0 = arith.constant 0 : i32
    %c0_i32_1 = arith.constant 0 : i32
    return %c0_i32, %c0_i32_0 : i32, i32
  }
  func.func @transform_6(%arg0: i32) -> (i32, i32) {
    %c0_i32 = arith.constant 0 : i32
    %c0_i32_0 = arith.constant 0 : i32
    %c0_i32_1 = arith.constant 0 : i32
    return %c0_i32, %c0_i32_0 : i32, i32
  }
  func.func @transform_7(%arg0: i32) -> (i32, i32) {
    %c0_i32 = arith.constant 0 : i32
    %c0_i32_0 = arith.constant 0 : i32
    %c0_i32_1 = arith.constant 0 : i32
    return %c0_i32, %c0_i32_0 : i32, i32
  }
  func.func @transform_8(%arg0: i32) -> (i32, i32) {
    %c0_i32 = arith.constant 0 : i32
    %c0_i32_0 = arith.constant 0 : i32
    %c0_i32_1 = arith.constant 0 : i32
    return %c0_i32, %c0_i32_0 : i32, i32
  }
  func.func @transform_9(%arg0: i32) -> (i32, i32) {
    %c0_i32 = arith.constant 0 : i32
    %c0_i32_0 = arith.constant 0 : i32
    %c0_i32_1 = arith.constant 0 : i32
    return %c0_i32, %c0_i32_0 : i32, i32
  }
  func.func @transform_10(%arg0: i32) -> (i32, i32) {
    %c0_i32 = arith.constant 0 : i32
    %c0_i32_0 = arith.constant 0 : i32
    %c0_i32_1 = arith.constant 0 : i32
    return %c0_i32, %c0_i32_0 : i32, i32
  }
  func.func @transform_11(%arg0: i32) -> (i32, i32) {
    %c0_i32 = arith.constant 0 : i32
    %c0_i32_0 = arith.constant 0 : i32
    %c0_i32_1 = arith.constant 0 : i32
    return %c0_i32, %c0_i32_0 : i32, i32
  }
  func.func @transform_12(%arg0: i32) -> (i32, i32) {
    %c0_i32 = arith.constant 0 : i32
    %c0_i32_0 = arith.constant 0 : i32
    %c0_i32_1 = arith.constant 0 : i32
    return %c0_i32, %c0_i32_0 : i32, i32
  }
  func.func @transform_13(%arg0: i32) -> (i32, i32) {
    %c0_i32 = arith.constant 0 : i32
    %c0_i32_0 = arith.constant 0 : i32
    %c0_i32_1 = arith.constant 0 : i32
    return %c0_i32, %c0_i32_0 : i32, i32
  }
  func.func @transform_14(%arg0: i32) -> (i32, i32) {
    %c0_i32 = arith.constant 0 : i32
    %c0_i32_0 = arith.constant 0 : i32
    return %arg0, %c0_i32 : i32, i32
  }
}

</mosaic_0001>

<llo_original>
// kernel: tpu_custom_call.1
$region0: #{tpu_custom_call.1}
  #allocation0 [shape = 'u32[]', space=smem, size = 0x4, offset = 0x4, fixed_abs, tag = 'smem constant byte address 0x4 - core index']
  #allocation1 [shape = 'u32[72,128]{1,0:T(1,128)}', space=vmem, size = 0x9000, scoped, tag = 'internal scratch']
  #allocation2 [shape = 'f32[1,1]{1,0:T(1,128)S(1)}', space=vmem, size = 0x200, scoped, tag = 'scoped memory for tpu_custom_call.1']
  %s0 = inlined_call_operand.vmem [shape: f32[64,3], index: 0, kind: input, shape index: {}]
  %s1 = inlined_call_operand.vmem [shape: f32[8,3], index: 1, kind: input, shape index: {}]
  %s2 = inlined_call_operand.vmem [shape: f32[1,10], index: 2, kind: input, shape index: {}]
  %s3 = inlined_call_operand.vmem [shape: bf16[60,64], index: 3, kind: input, shape index: {}]
  %s4 = inlined_call_operand.vmem [shape: f32[1,64], index: 4, kind: input, shape index: {}]
  %s5 = inlined_call_operand.vmem [shape: bf16[64,64], index: 5, kind: input, shape index: {}]
  %s6 = inlined_call_operand.vmem [shape: f32[1,64], index: 6, kind: input, shape index: {}]
  %s7 = inlined_call_operand.vmem [shape: bf16[64,64], index: 7, kind: input, shape index: {}]
  %s8 = inlined_call_operand.vmem [shape: f32[1,64], index: 8, kind: input, shape index: {}]
  %s9 = inlined_call_operand.hbm [shape: bf16[60,64], index: 9, kind: input, shape index: {}]
  %s10 = inlined_call_operand.vmem [shape: f32[1,64], index: 10, kind: input, shape index: {}]
  %s11 = inlined_call_operand.<no memory space> [shape: f32[1,1], index: 11, kind: input, shape index: {}]
  %s12 = inlined_call_operand.vmem [shape: bf16[64,3], index: 12, kind: input, shape index: {}]
  %s13 = inlined_call_operand.vmem [shape: f32[1,3], index: 13, kind: input, shape index: {}]
  %s14 = inlined_call_operand.vmem [shape: f32[64,4], index: 14, kind: output, shape index: {}]
  %s15 = sld [smem:[#allocation0]]
  $region70: #{tpu_custom_call.1} parent=0
    _
  %s17 = ssub.s32 1, %s15
  %s18 = scalar_select 0, %s17, %s15
  %v19 = vstv %s11
  %20 = vst [vmem:[#allocation2] sm:$0x1] %v19
  $region1: #{tpu_custom_call.1} parent=0
    #allocation3 [shape = 'u8[16384]{0}', space=vmem, size = 0x4000, scoped, tag = 'input window, operand 9, single buffered']
    #allocation4 [shape = 's32[1]{0}', space=sflag, size = 0x4, scoped, tag = 'scoped memory for tpu_custom_call.1']
    %21 = vsyncpa [#allocation4], 0
    // Predicated region
    $region2: #{tpu_custom_call.1} parent=1 // pred_check
      _
    $region3: #{tpu_custom_call.1} parent=1 // pred_check_branch
      %23 = sbr.rel (0) target = $region5
    $region4: #{tpu_custom_call.1} parent=1 // pred_region
      _
    $region5: #{tpu_custom_call.1} parent=1 // pred_fallthru
      _
    // Predicated region
    $region6: #{tpu_custom_call.1} parent=1 // pred_check
      _
    $region7: #{tpu_custom_call.1} parent=1 // pred_check_branch
      %25 = sbr.rel (0) target = $region9
    $region8: #{tpu_custom_call.1} parent=1 // pred_region
      _
    $region9: #{tpu_custom_call.1} parent=1 // pred_fallthru
      _
    // Predicated region
    $region10: #{tpu_custom_call.1} parent=1 // pred_check
      _
    $region11: #{tpu_custom_call.1} parent=1 // pred_check_branch
      %27 = sbr.rel (0) target = $region13
    $region12: #{tpu_custom_call.1} parent=1 // pred_region
      _
    $region13: #{tpu_custom_call.1} parent=1 // pred_fallthru
      _
    // Predicated region
    $region14: #{tpu_custom_call.1} parent=1 // pred_check
      _
    $region15: #{tpu_custom_call.1} parent=1 // pred_check_branch
      %29 = sbr.rel (0) target = $region17
    $region16: #{tpu_custom_call.1} parent=1 // pred_region
      _
    $region17: #{tpu_custom_call.1} parent=1 // pred_fallthru
      _
    // Predicated region
    $region18: #{tpu_custom_call.1} parent=1 // pred_check
      _
    $region19: #{tpu_custom_call.1} parent=1 // pred_check_branch
      %31 = sbr.rel (0) target = $region21
    $region20: #{tpu_custom_call.1} parent=1 // pred_region
      _
    $region21: #{tpu_custom_call.1} parent=1 // pred_fallthru
      _
    // Predicated region
    $region22: #{tpu_custom_call.1} parent=1 // pred_check
      _
    $region23: #{tpu_custom_call.1} parent=1 // pred_check_branch
      %33 = sbr.rel (0) target = $region25
    $region24: #{tpu_custom_call.1} parent=1 // pred_region
      _
    $region25: #{tpu_custom_call.1} parent=1 // pred_fallthru
      _
    // Predicated region
    $region26: #{tpu_custom_call.1} parent=1 // pred_check
      _
    $region27: #{tpu_custom_call.1} parent=1 // pred_check_branch
      %35 = sbr.rel (0) target = $region29
    $region28: #{tpu_custom_call.1} parent=1 // pred_region
      _
    $region29: #{tpu_custom_call.1} parent=1 // pred_fallthru
      _
    // Predicated region
    $region30: #{tpu_custom_call.1} parent=1 // pred_check
      _
    $region31: #{tpu_custom_call.1} parent=1 // pred_check_branch
      %37 = sbr.rel (0) target = $region33
    $region32: #{tpu_custom_call.1} parent=1 // pred_region
      _
    $region33: #{tpu_custom_call.1} parent=1 // pred_fallthru
      _
    // Predicated region
    $region34: #{tpu_custom_call.1} parent=1 // pred_check
      _
    $region35: #{tpu_custom_call.1} parent=1 // pred_check_branch
      %39 = sbr.rel (0) target = $region37
    $region36: #{tpu_custom_call.1} parent=1 // pred_region
      _
    $region37: #{tpu_custom_call.1} parent=1 // pred_fallthru
      _
    // Predicated region
    $region38: #{tpu_custom_call.1} parent=1 // pred_check
      _
    $region39: #{tpu_custom_call.1} parent=1 // pred_check_branch
      %41 = sbr.rel (0) target = $region41
    $region40: #{tpu_custom_call.1} parent=1 // pred_region
      %43 = vsyncadd [#allocation4], 0
      %s44 = sshll.u32 %s9, 4
      %s45 = int_to_ptr.hbm [resolvable:$true] %s44
      %s46 = sshll.u32 [#allocation3], 4
      %s47 = int_to_ptr.vmem [resolvable:$true] %s46
      %52 = dma.hbm_to_vmem [thread:$0]  %s45, 512, %s47, [#allocation4], 64, 64, 4
    $region41: #{tpu_custom_call.1} parent=1 // pred_fallthru
      _
    // Predicated region
    $region42: #{tpu_custom_call.1} parent=1 // pred_check
      _
    $region43: #{tpu_custom_call.1} parent=1 // pred_check_branch
      %54 = sbr.rel (0) target = $region45
    $region44: #{tpu_custom_call.1} parent=1 // pred_region
      _
    $region45: #{tpu_custom_call.1} parent=1 // pred_fallthru
      _
    // Predicated region
    $region46: #{tpu_custom_call.1} parent=1 // pred_check
      _
    $region47: #{tpu_custom_call.1} parent=1 // pred_check_branch
      %56 = sbr.rel (0) target = $region49
    $region48: #{tpu_custom_call.1} parent=1 // pred_region
      _
    $region49: #{tpu_custom_call.1} parent=1 // pred_fallthru
      _
    // Predicated region
    $region50: #{tpu_custom_call.1} parent=1 // pred_check
      _
    $region51: #{tpu_custom_call.1} parent=1 // pred_check_branch
      %58 = sbr.rel (0) target = $region53
    $region52: #{tpu_custom_call.1} parent=1 // pred_region
      _
    $region53: #{tpu_custom_call.1} parent=1 // pred_fallthru
      _
    // Predicated region
    $region54: #{tpu_custom_call.1} parent=1 // pred_check
      _
    $region55: #{tpu_custom_call.1} parent=1 // pred_check_branch
      %60 = sbr.rel (0) target = $region57
    $region56: #{tpu_custom_call.1} parent=1 // pred_region
      _
    $region57: #{tpu_custom_call.1} parent=1 // pred_fallthru
      _
    // Predicated region
    $region58: #{tpu_custom_call.1} parent=1 // pred_check
      _
    $region59: #{tpu_custom_call.1} parent=1 // pred_check_branch
      %62 = sbr.rel (0) target = $region61
    $region60: #{tpu_custom_call.1} parent=1 // pred_region
      %64 = dma.done [#allocation4], 512
    $region61: #{tpu_custom_call.1} parent=1 // pred_fallthru
      _
    %v66 = vld [vmem:[%s2] sm:$0x1]
    %v67 = vld [vmem:[%s1] sm:$0xff]
    %69 = vset.pattern.permute.xlu0 0
    %70 = vperm.xlu0 %69, %v67
    %v71 = vpop.permute.xlu0 %70
    %v74 = vperm.slane %v66, 0
    %v76 = vmul.f32 %v71, %v74
    %77 = vset.pattern.permute.xlu0 1
    %78 = vperm.xlu0 %77, %v67
    %v79 = vpop.permute.xlu0 %78
    %v81 = vmul.f32 %v79, %v74
    %82 = vset.pattern.permute.xlu0 2
    %83 = vperm.xlu0 %82, %v67
    %v84 = vpop.permute.xlu0 %83
    %v86 = vmul.f32 %v84, %v74
    %88 = vrot.lane.b32.xlu0 %v81, 10
    %v89 = vpop.permute.xlu0 %88
    %92 = vrot.lane.b32.xlu0 %v86, 20
    %v93 = vpop.permute.xlu0 %92
    %vm95 = vcmask 80896
    %v96 = vsel %vm95, %v76, %v89
    %vm97 = vcmask 162816
    %v98 = vsel %vm97, %v96, %v93
    %v99 = vand.u32 2147483647, %v98
    %vm100 = vcmp.le.f32.partialorder %v99, 0.7853982
    %vm101 = vcmp.lt.s32.totalorder %v98, 0
    %v102 = vand.u32 %v98, 2139095040
    %v103 = vshrl.u32 %v102, 23
    %v104 = vsub.s32 %v103, 127
    %v105 = vand.u32 2147483647, %v98
    %v106 = vand.u32 %v105, 8388607
    %v107 = vor.u32 %v106, 8388608
    %v108 = vsub.s32 0, %v107
    %v109 = vadd.s32 %v104, 1
    %vm110 = vcmp.gt.s32.totalorder %v109, 0
    %v111 = vsel %vm110, %v109, 0
    %v112 = vshrl.u32 %v111, 5
    %v113 = vand.u32 %v111, 31
    %v114 = vsub.s32 32, %v113
    %v115 = vshrl.u32 683565275, %v114
    %v116 = vshll.u32 683565275, %v113
    %v117 = vshrl.u32 2475754826, %v114
    %v118 = vor.u32 %v116, %v117
    %v119 = vshll.u32 2475754826, %v113
    %v120 = vshrl.u32 2131351028, %v114
    %v121 = vor.u32 %v119, %v120
    %v122 = vshll.u32 2131351028, %v113
    %v123 = vshrl.u32 2102212464, %v114
    %v124 = vor.u32 %v122, %v123
    %v125 = vshll.u32 2102212464, %v113
    %v126 = vshrl.u32 920167782, %v114
    %v127 = vor.u32 %v125, %v126
    %v128 = vshll.u32 920167782, %v113
    %v129 = vshrl.u32 1326507024, %v114
    %v130 = vor.u32 %v128, %v129
    %vm131 = vcmp.lt.s32.totalorder %v112, 1
    %vm132 = vcmp.lt.s32.totalorder %v112, 2
    %vm133 = vcmp.lt.s32.totalorder %v112, 3
    %vm134 = vcmp.lt.s32.totalorder %v112, 4
    %v135 = vsel %vm131, %v115, %v118
    %v136 = vsel %vm134, %v124, 2102212464
    %v137 = vsel %vm133, %v121, %v136
    %v138 = vsel %vm132, %v135, %v137
    %v139 = vsel %vm131, %v118, %v121
    %v140 = vsel %vm134, %v127, 920167782
    %v141 = vsel %vm133, %v124, %v140
    %v142 = vsel %vm132, %v139, %v141
    %v143 = vsel %vm131, %v121, %v124
    %v144 = vsel %vm134, %v130, 1326507024
    %v145 = vsel %vm133, %v127, %v144
    %v146 = vsel %vm132, %v143, %v145
    %v147 = vshll.u32 %v107, 8
    %v148 = vand.u32 %v147, 65535
    %v149 = vshrl.u32 %v147, 16
    %v150 = vand.u32 %v146, 65535
    %v151 = vshrl.u32 %v146, 16
    %v152 = vmul.u32 %v148, %v150
    %v153 = vmul.u32 %v148, %v151
    %v154 = vmul.u32 %v149, %v150
    %v155 = vmul.u32 %v149, %v151
    %v156 = vshll.u32 %v153, 16
    %v157 = vshrl.u32 %v153, 16
    %v158 = vshll.u32 %v154, 16
    %v159 = vshrl.u32 %v154, 16
    %vm160 = vc.u32 %v152, %v156
    %v161 = vsel %vm160, 1, 0
    %v162 = vadd.s32 %v152, %v156
    %v163 = vadd.s32 %v155, %v161
    %vm164 = vc.u32 %v162, %v158
    %v165 = vsel %vm164, 1, 0
    %v166 = vadd.s32 %v162, %v158
    %v167 = vadd.s32 %v163, %v165
    %v168 = vadd.s32 %v167, %v157
    %v169 = vadd.s32 %v168, %v159
    %v170 = vand.u32 %v147, 65535
    %v171 = vshrl.u32 %v147, 16
    %v172 = vand.u32 %v142, 65535
    %v173 = vshrl.u32 %v142, 16
    %v174 = vmul.u32 %v170, %v172
    %v175 = vmul.u32 %v170, %v173
    %v176 = vmul.u32 %v171, %v172
    %v177 = vmul.u32 %v171, %v173
    %v178 = vshll.u32 %v175, 16
    %v179 = vshrl.u32 %v175, 16
    %v180 = vshll.u32 %v176, 16
    %v181 = vshrl.u32 %v176, 16
    %vm182 = vc.u32 %v174, %v178
    %v183 = vsel %vm182, 1, 0
    %v184 = vadd.s32 %v174, %v178
    %v185 = vadd.s32 %v177, %v183
    %vm186 = vc.u32 %v184, %v180
    %v187 = vsel %vm186, 1, 0
    %v188 = vadd.s32 %v184, %v180
    %v189 = vadd.s32 %v185, %v187
    %v190 = vadd.s32 %v189, %v179
    %v191 = vadd.s32 %v190, %v181
    %v192 = vmul.u32 %v147, %v138
    %v193 = vadd.s32 %v169, %v188
    %vm194 = vc.u32 %v169, %v188
    %v195 = vadd.s32 %v191, 1
    %v196 = vsel %vm194, %v195, %v191
    %v197 = vadd.s32 %v192, %v196
    %v198 = vadd.s32 %v197, 536870912
    %v199 = vshrl.u32 %v198, 30
    %v200 = vshll.u32 %v199, 30
    %v201 = vsub.s32 %v197, %v200
    %vm202 = vcmp.lt.s32.totalorder %v201, 0
    %v203 = vsub.s32 0, %v201
    %v204 = vsel %vm202, %v203, %v201
    %v205 = vclz %v204
    %v206 = vsub.s32 %v205, 2
    %vm207 = vcmp.gt.s32.totalorder 0, %v206
    %v208 = vsel %vm207, 0, %v206
    %v209 = vsub.s32 32, %v208
    %v210 = vshll.u32 %v201, %v208
    %v211 = vshrl.u32 %v193, %v209
    %v212 = vor.u32 %v210, %v211
    %v213 = vsub.s32 4294967266, %v208
    %v214 = vadd.s32 %v213, 127
    %v215 = vshll.u32 %v214, 23
    %v216 = vor.u32 4788187, %v215
    %v217 = vand.u32 2147483647, %v216
    %v219 = vcvt.s32.f32 %v212
    %v220 = vmul.f32 %v219, %v217
    %v221 = vxor.u32 %v220, 2147483648
    %v222 = vsel %vm101, %v221, %v220
    %v223 = vsub.s32 4, %v199
    %v224 = vsel %vm101, %v223, %v199
    %v225 = vsel %vm100, %v98, %v222
    %v226 = vsel %vm100, 0, %v224
    %v227 = vmul.f32 %v225, %v225
    %v228 = vmul.f32 %v227, -0.001358992
    %v229 = vadd.f32 %v228, 0.041655596
    %v230 = vmul.f32 %v227, %v229
    %v231 = vadd.f32 %v230, -0.4999988
    %v232 = vmul.f32 %v227, %v231
    %v233 = vadd.f32 1.0, %v232
    %v234 = vmul.f32 %v225, %v225
    %v235 = vmul.f32 %v234, -0.00019511016
    %v236 = vadd.f32 %v235, 0.008332121
    %v237 = vmul.f32 %v234, %v236
    %v238 = vadd.f32 %v237, -0.16666654
    %v239 = vmul.f32 %v234, %v238
    %v240 = vadd.f32 %v239, 1.0
    %v241 = vmul.f32 %v240, %v225
    %vm242 = vweird.f32 %v98
    %v243 = vadd.s32 %v226, 3
    %v244 = vand.u32 %v243, 3
    %vm245 = vcmp.lt.s32.totalorder %v244, 2
    %vm246 = vcmp.eq.s32.totalorder %v244, 0
    %v247 = vxor.u32 %v241, 2147483648
    %v248 = vsel %vm246, %v233, %v247
    %vm249 = vcmp.eq.s32.totalorder %v244, 2
    %v250 = vxor.u32 %v233, 2147483648
    %v251 = vsel %vm249, %v250, %v241
    %v252 = vsel %vm245, %v248, %v251
    %v253 = vsel %vm242, nan, %v252
    %v254 = vand.u32 2147483647, %v98
    %vm255 = vcmp.le.f32.partialorder %v254, 0.7853982
    %vm256 = vcmp.lt.s32.totalorder %v98, 0
    %v257 = vand.u32 %v98, 2139095040
    %v258 = vshrl.u32 %v257, 23
    %v259 = vsub.s32 %v258, 127
    %v260 = vand.u32 2147483647, %v98
    %v261 = vand.u32 %v260, 8388607
    %v262 = vor.u32 %v261, 8388608
    %v263 = vsub.s32 0, %v262
    %v264 = vadd.s32 %v259, 1
    %vm265 = vcmp.gt.s32.totalorder %v264, 0
    %v266 = vsel %vm265, %v264, 0
    %v267 = vshrl.u32 %v266, 5
    %v268 = vand.u32 %v266, 31
    %v269 = vsub.s32 32, %v268
    %v270 = vshrl.u32 683565275, %v269
    %v271 = vshll.u32 683565275, %v268
    %v272 = vshrl.u32 2475754826, %v269
    %v273 = vor.u32 %v271, %v272
    %v274 = vshll.u32 2475754826, %v268
    %v275 = vshrl.u32 2131351028, %v269
    %v276 = vor.u32 %v274, %v275
    %v277 = vshll.u32 2131351028, %v268
    %v278 = vshrl.u32 2102212464, %v269
    %v279 = vor.u32 %v277, %v278
    %v280 = vshll.u32 2102212464, %v268
    %v281 = vshrl.u32 920167782, %v269
    %v282 = vor.u32 %v280, %v281
    %v283 = vshll.u32 920167782, %v268
    %v284 = vshrl.u32 1326507024, %v269
    %v285 = vor.u32 %v283, %v284
    %vm286 = vcmp.lt.s32.totalorder %v267, 1
    %vm287 = vcmp.lt.s32.totalorder %v267, 2
    %vm288 = vcmp.lt.s32.totalorder %v267, 3
    %vm289 = vcmp.lt.s32.totalorder %v267, 4
    %v290 = vsel %vm286, %v270, %v273
    %v291 = vsel %vm289, %v279, 2102212464
    %v292 = vsel %vm288, %v276, %v291
    %v293 = vsel %vm287, %v290, %v292
    %v294 = vsel %vm286, %v273, %v276
    %v295 = vsel %vm289, %v282, 920167782
    %v296 = vsel %vm288, %v279, %v295
    %v297 = vsel %vm287, %v294, %v296
    %v298 = vsel %vm286, %v276, %v279
    %v299 = vsel %vm289, %v285, 1326507024
    %v300 = vsel %vm288, %v282, %v299
    %v301 = vsel %vm287, %v298, %v300
    %v302 = vshll.u32 %v262, 8
    %v303 = vand.u32 %v302, 65535
    %v304 = vshrl.u32 %v302, 16
    %v305 = vand.u32 %v301, 65535
    %v306 = vshrl.u32 %v301, 16
    %v307 = vmul.u32 %v303, %v305
    %v308 = vmul.u32 %v303, %v306
    %v309 = vmul.u32 %v304, %v305
    %v310 = vmul.u32 %v304, %v306
    %v311 = vshll.u32 %v308, 16
    %v312 = vshrl.u32 %v308, 16
    %v313 = vshll.u32 %v309, 16
    %v314 = vshrl.u32 %v309, 16
    %vm315 = vc.u32 %v307, %v311
    %v316 = vsel %vm315, 1, 0
    %v317 = vadd.s32 %v307, %v311
    %v318 = vadd.s32 %v310, %v316
    %vm319 = vc.u32 %v317, %v313
    %v320 = vsel %vm319, 1, 0
    %v321 = vadd.s32 %v317, %v313
    %v322 = vadd.s32 %v318, %v320
    %v323 = vadd.s32 %v322, %v312
    %v324 = vadd.s32 %v323, %v314
    %v325 = vand.u32 %v302, 65535
    %v326 = vshrl.u32 %v302, 16
    %v327 = vand.u32 %v297, 65535
    %v328 = vshrl.u32 %v297, 16
    %v329 = vmul.u32 %v325, %v327
    %v330 = vmul.u32 %v325, %v328
    %v331 = vmul.u32 %v326, %v327
    %v332 = vmul.u32 %v326, %v328
    %v333 = vshll.u32 %v330, 16
    %v334 = vshrl.u32 %v330, 16
    %v335 = vshll.u32 %v331, 16
    %v336 = vshrl.u32 %v331, 16
    %vm337 = vc.u32 %v329, %v333
    %v338 = vsel %vm337, 1, 0
    %v339 = vadd.s32 %v329, %v333
    %v340 = vadd.s32 %v332, %v338
    %vm341 = vc.u32 %v339, %v335
    %v342 = vsel %vm341, 1, 0
    %v343 = vadd.s32 %v339, %v335
    %v344 = vadd.s32 %v340, %v342
    %v345 = vadd.s32 %v344, %v334
    %v346 = vadd.s32 %v345, %v336
    %v347 = vmul.u32 %v302, %v293
    %v348 = vadd.s32 %v324, %v343
    %vm349 = vc.u32 %v324, %v343
    %v350 = vadd.s32 %v346, 1
    %v351 = vsel %vm349, %v350, %v346
    %v352 = vadd.s32 %v347, %v351
    %v353 = vadd.s32 %v352, 536870912
    %v354 = vshrl.u32 %v353, 30
    %v355 = vshll.u32 %v354, 30
    %v356 = vsub.s32 %v352, %v355
    %vm357 = vcmp.lt.s32.totalorder %v356, 0
    %v358 = vsub.s32 0, %v356
    %v359 = vsel %vm357, %v358, %v356
    %v360 = vclz %v359
    %v361 = vsub.s32 %v360, 2
    %vm362 = vcmp.gt.s32.totalorder 0, %v361
    %v363 = vsel %vm362, 0, %v361
    %v364 = vsub.s32 32, %v363
    %v365 = vshll.u32 %v356, %v363
    %v366 = vshrl.u32 %v348, %v364
    %v367 = vor.u32 %v365, %v366
    %v368 = vsub.s32 4294967266, %v363
    %v369 = vadd.s32 %v368, 127
    %v370 = vshll.u32 %v369, 23
    %v371 = vor.u32 4788187, %v370
    %v372 = vand.u32 2147483647, %v371
    %v374 = vcvt.s32.f32 %v367
    %v375 = vmul.f32 %v374, %v372
    %v376 = vxor.u32 %v375, 2147483648
    %v377 = vsel %vm256, %v376, %v375
    %v378 = vsub.s32 4, %v354
    %v379 = vsel %vm256, %v378, %v354
    %v380 = vsel %vm255, %v98, %v377
    %v381 = vsel %vm255, 0, %v379
    %v382 = vmul.f32 %v380, %v380
    %v383 = vmul.f32 %v382, -0.001358992
    %v384 = vadd.f32 %v383, 0.041655596
    %v385 = vmul.f32 %v382, %v384
    %v386 = vadd.f32 %v385, -0.4999988
    %v387 = vmul.f32 %v382, %v386
    %v388 = vadd.f32 1.0, %v387
    %v389 = vmul.f32 %v380, %v380
    %v390 = vmul.f32 %v389, -0.00019511016
    %v391 = vadd.f32 %v390, 0.008332121
    %v392 = vmul.f32 %v389, %v391
    %v393 = vadd.f32 %v392, -0.16666654
    %v394 = vmul.f32 %v389, %v393
    %v395 = vadd.f32 %v394, 1.0
    %v396 = vmul.f32 %v395, %v380
    %vm397 = vweird.f32 %v98
    %v398 = vand.u32 %v381, 3
    %vm399 = vcmp.lt.s32.totalorder %v398, 2
    %vm400 = vcmp.eq.s32.totalorder %v398, 0
    %v401 = vxor.u32 %v396, 2147483648
    %v402 = vsel %vm400, %v388, %v401
    %vm403 = vcmp.eq.s32.totalorder %v398, 2
    %v404 = vxor.u32 %v388, 2147483648
    %v405 = vsel %vm403, %v404, %v396
    %v406 = vsel %vm399, %v402, %v405
    %v407 = vsel %vm397, nan, %v406
    %409 = vrot.lane.b32.xlu0 %v407, 30
    %v410 = vpop.permute.xlu0 %409
    %vm412 = vcmask 244736
    %v413 = vsel %vm412, %v253, %v410
    %v414 = vpack.c.bf16 %v413, %v413
    %v415 = vld [vmem:[#allocation3] sm:$0xf]
    %v416 = vld [vmem:[#allocation3 + $0x4] sm:$0xf]
    %v417 = vld [vmem:[#allocation3 + $0x8] sm:$0xf]
    %v418 = vld [vmem:[#allocation3 + $0xc] sm:$0xf]
    %v419 = vld [vmem:[#allocation3 + $0x10] sm:$0xf]
    %v420 = vld [vmem:[#allocation3 + $0x14] sm:$0xf]
    %v421 = vld [vmem:[#allocation3 + $0x18] sm:$0xf]
    %v422 = vld [vmem:[#allocation3 + $0x1c] sm:$0x3]
    %v431 = vunpack.c.l.b16 %v415
    %v432 = vunpack.c.l.b16 %v416
    %v433 = vunpack.c.l.b16 %v417
    %v434 = vunpack.c.l.b16 %v418
    %v435 = vunpack.c.l.b16 %v419
    %v436 = vunpack.c.l.b16 %v420
    %v437 = vunpack.c.l.b16 %v421
    %v438 = vunpack.c.l.b16 %v422
    %v439 = vpack.c.b16 %v432, %v431
    %v440 = vpack.c.b16 %v434, %v433
    %v441 = vpack.c.b16 %v436, %v435
    %v442 = vpack.c.b16 %v438, %v437
    %vm446 = vcmask 490496
    %v448 = vsel %vm446, %v414, 0
    %vm450 = vcmask 1045504
    %v452 = vsel %vm450, %v442, 0
    %454 = vmatpush.bf16.msra.mxu0 0
    %455 = vmatpush.bf16.msra.mxu0 0
    %456 = vmatpush.bf16.msra.mxu0 0
    %457 = vmatpush.bf16.msra.mxu0 0
    %458 = vmatpush.bf16.msra.mxu0 %v452
    %459 = vmatpush.bf16.msra.mxu0 %v441
    %460 = vmatpush.bf16.msra.mxu0 %v440
    %461 = vmatpush.bf16.msra.mxu0 %v439
    %462 = vmatmul.bf16.gmra.mxu0 %v448
    %v463 = vpop.f32.mrf.mxu0
    %v464 = vadd.f32 0.0, %v463
    %v465 = vpop.f32.mrf.mxu0
    %466 = vdwg.mxu0
    %v467 = vld [vmem:[%s0] sm:$0xff]
    %v468 = vld [vmem:[%s0 + $0x8] sm:$0xff]
    %v469 = vld [vmem:[%s0 + $0x10] sm:$0xff]
    %v470 = vld [vmem:[%s0 + $0x18] sm:$0xff]
    %v471 = vld [vmem:[%s0 + $0x20] sm:$0xff]
    %v472 = vld [vmem:[%s0 + $0x28] sm:$0xff]
    %v473 = vld [vmem:[%s0 + $0x30] sm:$0xff]
    %v474 = vld [vmem:[%s0 + $0x38] sm:$0xff]
    %476 = vset.pattern.permute.xlu0 0
    %477 = vperm.xlu0 %476, %v467
    %v478 = vpop.permute.xlu0 %477
    %481 = vset.pattern.permute.xlu0 0
    %482 = vperm.xlu0 %481, %v468
    %v483 = vpop.permute.xlu0 %482
    %486 = vset.pattern.permute.xlu0 0
    %487 = vperm.xlu0 %486, %v469
    %v488 = vpop.permute.xlu0 %487
    %491 = vset.pattern.permute.xlu0 0
    %492 = vperm.xlu0 %491, %v470
    %v493 = vpop.permute.xlu0 %492
    %496 = vset.pattern.permute.xlu0 0
    %497 = vperm.xlu0 %496, %v471
    %v498 = vpop.permute.xlu0 %497
    %501 = vset.pattern.permute.xlu0 0
    %502 = vperm.xlu0 %501, %v472
    %v503 = vpop.permute.xlu0 %502
    %506 = vset.pattern.permute.xlu0 0
    %507 = vperm.xlu0 %506, %v473
    %v508 = vpop.permute.xlu0 %507
    %511 = vset.pattern.permute.xlu0 0
    %512 = vperm.xlu0 %511, %v474
    %v513 = vpop.permute.xlu0 %512
    %v515 = vmul.f32 %v478, %v74
    %v516 = vmul.f32 %v483, %v74
    %v517 = vmul.f32 %v488, %v74
    %v518 = vmul.f32 %v493, %v74
    %v519 = vmul.f32 %v498, %v74
    %v520 = vmul.f32 %v503, %v74
    %v521 = vmul.f32 %v508, %v74
    %v522 = vmul.f32 %v513, %v74
    %523 = vset.pattern.permute.xlu0 1
    %524 = vperm.xlu0 %523, %v467
    %v525 = vpop.permute.xlu0 %524
    %527 = vset.pattern.permute.xlu0 1
    %528 = vperm.xlu0 %527, %v468
    %v529 = vpop.permute.xlu0 %528
    %531 = vset.pattern.permute.xlu0 1
    %532 = vperm.xlu0 %531, %v469
    %v533 = vpop.permute.xlu0 %532
    %535 = vset.pattern.permute.xlu0 1
    %536 = vperm.xlu0 %535, %v470
    %v537 = vpop.permute.xlu0 %536
    %539 = vset.pattern.permute.xlu0 1
    %540 = vperm.xlu0 %539, %v471
    %v541 = vpop.permute.xlu0 %540
    %543 = vset.pattern.permute.xlu0 1
    %544 = vperm.xlu0 %543, %v472
    %v545 = vpop.permute.xlu0 %544
    %547 = vset.pattern.permute.xlu0 1
    %548 = vperm.xlu0 %547, %v473
    %v549 = vpop.permute.xlu0 %548
    %551 = vset.pattern.permute.xlu0 1
    %552 = vperm.xlu0 %551, %v474
    %v553 = vpop.permute.xlu0 %552
    %v555 = vmul.f32 %v525, %v74
    %v556 = vmul.f32 %v529, %v74
    %v557 = vmul.f32 %v533, %v74
    %v558 = vmul.f32 %v537, %v74
    %v559 = vmul.f32 %v541, %v74
    %v560 = vmul.f32 %v545, %v74
    %v561 = vmul.f32 %v549, %v74
    %v562 = vmul.f32 %v553, %v74
    %563 = vset.pattern.permute.xlu0 2
    %564 = vperm.xlu0 %563, %v467
    %v565 = vpop.permute.xlu0 %564
    %567 = vset.pattern.permute.xlu0 2
    %568 = vperm.xlu0 %567, %v468
    %v569 = vpop.permute.xlu0 %568
    %571 = vset.pattern.permute.xlu0 2
    %572 = vperm.xlu0 %571, %v469
    %v573 = vpop.permute.xlu0 %572
    %575 = vset.pattern.permute.xlu0 2
    %576 = vperm.xlu0 %575, %v470
    %v577 = vpop.permute.xlu0 %576
    %579 = vset.pattern.permute.xlu0 2
    %580 = vperm.xlu0 %579, %v471
    %v581 = vpop.permute.xlu0 %580
    %583 = vset.pattern.permute.xlu0 2
    %584 = vperm.xlu0 %583, %v472
    %v585 = vpop.permute.xlu0 %584
    %587 = vset.pattern.permute.xlu0 2
    %588 = vperm.xlu0 %587, %v473
    %v589 = vpop.permute.xlu0 %588
    %591 = vset.pattern.permute.xlu0 2
    %592 = vperm.xlu0 %591, %v474
    %v593 = vpop.permute.xlu0 %592
    %v595 = vmul.f32 %v565, %v74
    %v596 = vmul.f32 %v569, %v74
    %v597 = vmul.f32 %v573, %v74
    %v598 = vmul.f32 %v577, %v74
    %v599 = vmul.f32 %v581, %v74
    %v600 = vmul.f32 %v585, %v74
    %v601 = vmul.f32 %v589, %v74
    %v602 = vmul.f32 %v593, %v74
    %611 = vrot.lane.b32.xlu0 %v555, 10
    %v612 = vpop.permute.xlu0 %611
    %613 = vrot.lane.b32.xlu0 %v556, 10
    %v614 = vpop.permute.xlu0 %613
    %615 = vrot.lane.b32.xlu0 %v557, 10
    %v616 = vpop.permute.xlu0 %615
    %617 = vrot.lane.b32.xlu0 %v558, 10
    %v618 = vpop.permute.xlu0 %617
    %619 = vrot.lane.b32.xlu0 %v559, 10
    %v620 = vpop.permute.xlu0 %619
    %621 = vrot.lane.b32.xlu0 %v560, 10
    %v622 = vpop.permute.xlu0 %621
    %623 = vrot.lane.b32.xlu0 %v561, 10
    %v624 = vpop.permute.xlu0 %623
    %625 = vrot.lane.b32.xlu0 %v562, 10
    %v626 = vpop.permute.xlu0 %625
    %643 = vrot.lane.b32.xlu0 %v595, 20
    %v644 = vpop.permute.xlu0 %643
    %645 = vrot.lane.b32.xlu0 %v596, 20
    %v646 = vpop.permute.xlu0 %645
    %647 = vrot.lane.b32.xlu0 %v597, 20
    %v648 = vpop.permute.xlu0 %647
    %649 = vrot.lane.b32.xlu0 %v598, 20
    %v650 = vpop.permute.xlu0 %649
    %651 = vrot.lane.b32.xlu0 %v599, 20
    %v652 = vpop.permute.xlu0 %651
    %653 = vrot.lane.b32.xlu0 %v600, 20
    %v654 = vpop.permute.xlu0 %653
    %655 = vrot.lane.b32.xlu0 %v601, 20
    %v656 = vpop.permute.xlu0 %655
    %657 = vrot.lane.b32.xlu0 %v602, 20
    %v658 = vpop.permute.xlu0 %657
    %v667 = vsel %vm95, %v515, %v612
    %v668 = vsel %vm95, %v516, %v614
    %v669 = vsel %vm95, %v517, %v616
    %v670 = vsel %vm95, %v518, %v618
    %v671 = vsel %vm95, %v519, %v620
    %v672 = vsel %vm95, %v520, %v622
    %v673 = vsel %vm95, %v521, %v624
    %v674 = vsel %vm95, %v522, %v626
    %v675 = vsel %vm97, %v667, %v644
    %v676 = vsel %vm97, %v668, %v646
    %v677 = vsel %vm97, %v669, %v648
    %v678 = vsel %vm97, %v670, %v650
    %v679 = vsel %vm97, %v671, %v652
    %v680 = vsel %vm97, %v672, %v654
    %v681 = vsel %vm97, %v673, %v656
    %v682 = vsel %vm97, %v674, %v658
    %v683 = vand.u32 2147483647, %v675
    %vm684 = vcmp.le.f32.partialorder %v683, 0.7853982
    %vm685 = vcmp.lt.s32.totalorder %v675, 0
    %v686 = vand.u32 %v675, 2139095040
    %v687 = vshrl.u32 %v686, 23
    %v688 = vsub.s32 %v687, 127
    %v689 = vand.u32 2147483647, %v675
    %v690 = vand.u32 %v689, 8388607
    %v691 = vor.u32 %v690, 8388608
    %v692 = vsub.s32 0, %v691
    %v693 = vadd.s32 %v688, 1
    %vm694 = vcmp.gt.s32.totalorder %v693, 0
    %v695 = vsel %vm694, %v693, 0
    %v696 = vshrl.u32 %v695, 5
    %v697 = vand.u32 %v695, 31
    %v698 = vsub.s32 32, %v697
    %v699 = vshrl.u32 683565275, %v698
    %v700 = vshll.u32 683565275, %v697
    %v701 = vshrl.u32 2475754826, %v698
    %v702 = vor.u32 %v700, %v701
    %v703 = vshll.u32 2475754826, %v697
    %v704 = vshrl.u32 2131351028, %v698
    %v705 = vor.u32 %v703, %v704
    %v706 = vshll.u32 2131351028, %v697
    %v707 = vshrl.u32 2102212464, %v698
    %v708 = vor.u32 %v706, %v707
    %v709 = vshll.u32 2102212464, %v697
    %v710 = vshrl.u32 920167782, %v698
    %v711 = vor.u32 %v709, %v710
    %v712 = vshll.u32 920167782, %v697
    %v713 = vshrl.u32 1326507024, %v698
    %v714 = vor.u32 %v712, %v713
    %vm715 = vcmp.lt.s32.totalorder %v696, 1
    %vm716 = vcmp.lt.s32.totalorder %v696, 2
    %vm717 = vcmp.lt.s32.totalorder %v696, 3
    %vm718 = vcmp.lt.s32.totalorder %v696, 4
    %v719 = vsel %vm715, %v699, %v702
    %v720 = vsel %vm718, %v708, 2102212464
    %v721 = vsel %vm717, %v705, %v720
    %v722 = vsel %vm716, %v719, %v721
    %v723 = vsel %vm715, %v702, %v705
    %v724 = vsel %vm718, %v711, 920167782
    %v725 = vsel %vm717, %v708, %v724
    %v726 = vsel %vm716, %v723, %v725
    %v727 = vsel %vm715, %v705, %v708
    %v728 = vsel %vm718, %v714, 1326507024
    %v729 = vsel %vm717, %v711, %v728
    %v730 = vsel %vm716, %v727, %v729
    %v731 = vshll.u32 %v691, 8
    %v732 = vand.u32 %v731, 65535
    %v733 = vshrl.u32 %v731, 16
    %v734 = vand.u32 %v730, 65535
    %v735 = vshrl.u32 %v730, 16
    %v736 = vmul.u32 %v732, %v734
    %v737 = vmul.u32 %v732, %v735
    %v738 = vmul.u32 %v733, %v734
    %v739 = vmul.u32 %v733, %v735
    %v740 = vshll.u32 %v737, 16
    %v741 = vshrl.u32 %v737, 16
    %v742 = vshll.u32 %v738, 16
    %v743 = vshrl.u32 %v738, 16
    %vm744 = vc.u32 %v736, %v740
    %v745 = vsel %vm744, 1, 0
    %v746 = vadd.s32 %v736, %v740
    %v747 = vadd.s32 %v739, %v745
    %vm748 = vc.u32 %v746, %v742
    %v749 = vsel %vm748, 1, 0
    %v750 = vadd.s32 %v746, %v742
    %v751 = vadd.s32 %v747, %v749
    %v752 = vadd.s32 %v751, %v741
    %v753 = vadd.s32 %v752, %v743
    %v754 = vand.u32 %v731, 65535
    %v755 = vshrl.u32 %v731, 16
    %v756 = vand.u32 %v726, 65535
    %v757 = vshrl.u32 %v726, 16
    %v758 = vmul.u32 %v754, %v756
    %v759 = vmul.u32 %v754, %v757
    %v760 = vmul.u32 %v755, %v756
    %v761 = vmul.u32 %v755, %v757
    %v762 = vshll.u32 %v759, 16
    %v763 = vshrl.u32 %v759, 16
    %v764 = vshll.u32 %v760, 16
    %v765 = vshrl.u32 %v760, 16
    %vm766 = vc.u32 %v758, %v762
    %v767 = vsel %vm766, 1, 0
    %v768 = vadd.s32 %v758, %v762
    %v769 = vadd.s32 %v761, %v767
    %vm770 = vc.u32 %v768, %v764
    %v771 = vsel %vm770, 1, 0
    %v772 = vadd.s32 %v768, %v764
    %v773 = vadd.s32 %v769, %v771
    %v774 = vadd.s32 %v773, %v763
    %v775 = vadd.s32 %v774, %v765
    %v776 = vmul.u32 %v731, %v722
    %v777 = vadd.s32 %v753, %v772
    %vm778 = vc.u32 %v753, %v772
    %v779 = vadd.s32 %v775, 1
    %v780 = vsel %vm778, %v779, %v775
    %v781 = vadd.s32 %v776, %v780
    %v782 = vadd.s32 %v781, 536870912
    %v783 = vshrl.u32 %v782, 30
    %v784 = vshll.u32 %v783, 30
    %v785 = vsub.s32 %v781, %v784
    %vm786 = vcmp.lt.s32.totalorder %v785, 0
    %v787 = vsub.s32 0, %v785
    %v788 = vsel %vm786, %v787, %v785
    %v789 = vclz %v788
    %v790 = vsub.s32 %v789, 2
    %vm791 = vcmp.gt.s32.totalorder 0, %v790
    %v792 = vsel %vm791, 0, %v790
    %v793 = vsub.s32 32, %v792
    %v794 = vshll.u32 %v785, %v792
    %v795 = vshrl.u32 %v777, %v793
    %v796 = vor.u32 %v794, %v795
    %v797 = vsub.s32 4294967266, %v792
    %v798 = vadd.s32 %v797, 127
    %v799 = vshll.u32 %v798, 23
    %v800 = vor.u32 4788187, %v799
    %v801 = vand.u32 2147483647, %v800
    %v803 = vcvt.s32.f32 %v796
    %v804 = vmul.f32 %v803, %v801
    %v805 = vxor.u32 %v804, 2147483648
    %v806 = vsel %vm685, %v805, %v804
    %v807 = vsub.s32 4, %v783
    %v808 = vsel %vm685, %v807, %v783
    %v809 = vsel %vm684, %v675, %v806
    %v810 = vsel %vm684, 0, %v808
    %v811 = vmul.f32 %v809, %v809
    %v812 = vmul.f32 %v811, -0.001358992
    %v813 = vadd.f32 %v812, 0.041655596
    %v814 = vmul.f32 %v811, %v813
    %v815 = vadd.f32 %v814, -0.4999988
    %v816 = vmul.f32 %v811, %v815
    %v817 = vadd.f32 1.0, %v816
    %v818 = vmul.f32 %v809, %v809
    %v819 = vmul.f32 %v818, -0.00019511016
    %v820 = vadd.f32 %v819, 0.008332121
    %v821 = vmul.f32 %v818, %v820
    %v822 = vadd.f32 %v821, -0.16666654
    %v823 = vmul.f32 %v818, %v822
    %v824 = vadd.f32 %v823, 1.0
    %v825 = vmul.f32 %v824, %v809
    %vm826 = vweird.f32 %v675
    %v827 = vadd.s32 %v810, 3
    %v828 = vand.u32 %v827, 3
    %vm829 = vcmp.lt.s32.totalorder %v828, 2
    %vm830 = vcmp.eq.s32.totalorder %v828, 0
    %v831 = vxor.u32 %v825, 2147483648
    %v832 = vsel %vm830, %v817, %v831
    %vm833 = vcmp.eq.s32.totalorder %v828, 2
    %v834 = vxor.u32 %v817, 2147483648
    %v835 = vsel %vm833, %v834, %v825
    %v836 = vsel %vm829, %v832, %v835
    %v837 = vsel %vm826, nan, %v836
    %v838 = vand.u32 2147483647, %v676
    %vm839 = vcmp.le.f32.partialorder %v838, 0.7853982
    %vm840 = vcmp.lt.s32.totalorder %v676, 0
    %v841 = vand.u32 %v676, 2139095040
    %v842 = vshrl.u32 %v841, 23
    %v843 = vsub.s32 %v842, 127
    %v844 = vand.u32 2147483647, %v676
    %v845 = vand.u32 %v844, 8388607
    %v846 = vor.u32 %v845, 8388608
    %v847 = vsub.s32 0, %v846
    %v848 = vadd.s32 %v843, 1
    %vm849 = vcmp.gt.s32.totalorder %v848, 0
    %v850 = vsel %vm849, %v848, 0
    %v851 = vshrl.u32 %v850, 5
    %v852 = vand.u32 %v850, 31
    %v853 = vsub.s32 32, %v852
    %v854 = vshrl.u32 683565275, %v853
    %v855 = vshll.u32 683565275, %v852
    %v856 = vshrl.u32 2475754826, %v853
    %v857 = vor.u32 %v855, %v856
    %v858 = vshll.u32 2475754826, %v852
    %v859 = vshrl.u32 2131351028, %v853
    %v860 = vor.u32 %v858, %v859
    %v861 = vshll.u32 2131351028, %v852
    %v862 = vshrl.u32 2102212464, %v853
    %v863 = vor.u32 %v861, %v862
    %v864 = vshll.u32 2102212464, %v852
    %v865 = vshrl.u32 920167782, %v853
    %v866 = vor.u32 %v864, %v865
    %v867 = vshll.u32 920167782, %v852
    %v868 = vshrl.u32 1326507024, %v853
    %v869 = vor.u32 %v867, %v868
    %vm870 = vcmp.lt.s32.totalorder %v851, 1
    %vm871 = vcmp.lt.s32.totalorder %v851, 2
    %vm872 = vcmp.lt.s32.totalorder %v851, 3
    %vm873 = vcmp.lt.s32.totalorder %v851, 4
    %v874 = vsel %vm870, %v854, %v857
    %v875 = vsel %vm873, %v863, 2102212464
    %v876 = vsel %vm872, %v860, %v875
    %v877 = vsel %vm871, %v874, %v876
    %v878 = vsel %vm870, %v857, %v860
    %v879 = vsel %vm873, %v866, 920167782
    %v880 = vsel %vm872, %v863, %v879
    %v881 = vsel %vm871, %v878, %v880
    %v882 = vsel %vm870, %v860, %v863
    %v883 = vsel %vm873, %v869, 1326507024
    %v884 = vsel %vm872, %v866, %v883
    %v885 = vsel %vm871, %v882, %v884
    %v886 = vshll.u32 %v846, 8
    %v887 = vand.u32 %v886, 65535
    %v888 = vshrl.u32 %v886, 16
    %v889 = vand.u32 %v885, 65535
    %v890 = vshrl.u32 %v885, 16
    %v891 = vmul.u32 %v887, %v889
    %v892 = vmul.u32 %v887, %v890
    %v893 = vmul.u32 %v888, %v889
    %v894 = vmul.u32 %v888, %v890
    %v895 = vshll.u32 %v892, 16
    %v896 = vshrl.u32 %v892, 16
    %v897 = vshll.u32 %v893, 16
    %v898 = vshrl.u32 %v893, 16
    %vm899 = vc.u32 %v891, %v895
    %v900 = vsel %vm899, 1, 0
    %v901 = vadd.s32 %v891, %v895
    %v902 = vadd.s32 %v894, %v900
    %vm903 = vc.u32 %v901, %v897
    %v904 = vsel %vm903, 1, 0
    %v905 = vadd.s32 %v901, %v897
    %v906 = vadd.s32 %v902, %v904
    %v907 = vadd.s32 %v906, %v896
    %v908 = vadd.s32 %v907, %v898
    %v909 = vand.u32 %v886, 65535
    %v910 = vshrl.u32 %v886, 16
    %v911 = vand.u32 %v881, 65535
    %v912 = vshrl.u32 %v881, 16
    %v913 = vmul.u32 %v909, %v911
    %v914 = vmul.u32 %v909, %v912
    %v915 = vmul.u32 %v910, %v911
    %v916 = vmul.u32 %v910, %v912
    %v917 = vshll.u32 %v914, 16
    %v918 = vshrl.u32 %v914, 16
    %v919 = vshll.u32 %v915, 16
    %v920 = vshrl.u32 %v915, 16
    %vm921 = vc.u32 %v913, %v917
    %v922 = vsel %vm921, 1, 0
    %v923 = vadd.s32 %v913, %v917
    %v924 = vadd.s32 %v916, %v922
    %vm925 = vc.u32 %v923, %v919
    %v926 = vsel %vm925, 1, 0
    %v927 = vadd.s32 %v923, %v919
    %v928 = vadd.s32 %v924, %v926
    %v929 = vadd.s32 %v928, %v918
    %v930 = vadd.s32 %v929, %v920
    %v931 = vmul.u32 %v886, %v877
    %v932 = vadd.s32 %v908, %v927
    %vm933 = vc.u32 %v908, %v927
    %v934 = vadd.s32 %v930, 1
    %v935 = vsel %vm933, %v934, %v930
    %v936 = vadd.s32 %v931, %v935
    %v937 = vadd.s32 %v936, 536870912
    %v938 = vshrl.u32 %v937, 30
    %v939 = vshll.u32 %v938, 30
    %v940 = vsub.s32 %v936, %v939
    %vm941 = vcmp.lt.s32.totalorder %v940, 0
    %v942 = vsub.s32 0, %v940
    %v943 = vsel %vm941, %v942, %v940
    %v944 = vclz %v943
    %v945 = vsub.s32 %v944, 2
    %vm946 = vcmp.gt.s32.totalorder 0, %v945
    %v947 = vsel %vm946, 0, %v945
    %v948 = vsub.s32 32, %v947
    %v949 = vshll.u32 %v940, %v947
    %v950 = vshrl.u32 %v932, %v948
    %v951 = vor.u32 %v949, %v950
    %v952 = vsub.s32 4294967266, %v947
    %v953 = vadd.s32 %v952, 127
    %v954 = vshll.u32 %v953, 23
    %v955 = vor.u32 4788187, %v954
    %v956 = vand.u32 2147483647, %v955
    %v958 = vcvt.s32.f32 %v951
    %v959 = vmul.f32 %v958, %v956
    %v960 = vxor.u32 %v959, 2147483648
    %v961 = vsel %vm840, %v960, %v959
    %v962 = vsub.s32 4, %v938
    %v963 = vsel %vm840, %v962, %v938
    %v964 = vsel %vm839, %v676, %v961
    %v965 = vsel %vm839, 0, %v963
    %v966 = vmul.f32 %v964, %v964
    %v967 = vmul.f32 %v966, -0.001358992
    %v968 = vadd.f32 %v967, 0.041655596
    %v969 = vmul.f32 %v966, %v968
    %v970 = vadd.f32 %v969, -0.4999988
    %v971 = vmul.f32 %v966, %v970
    %v972 = vadd.f32 1.0, %v971
    %v973 = vmul.f32 %v964, %v964
    %v974 = vmul.f32 %v973, -0.00019511016
    %v975 = vadd.f32 %v974, 0.008332121
    %v976 = vmul.f32 %v973, %v975
    %v977 = vadd.f32 %v976, -0.16666654
    %v978 = vmul.f32 %v973, %v977
    %v979 = vadd.f32 %v978, 1.0
    %v980 = vmul.f32 %v979, %v964
    %vm981 = vweird.f32 %v676
    %v982 = vadd.s32 %v965, 3
    %v983 = vand.u32 %v982, 3
    %vm984 = vcmp.lt.s32.totalorder %v983, 2
    %vm985 = vcmp.eq.s32.totalorder %v983, 0
    %v986 = vxor.u32 %v980, 2147483648
    %v987 = vsel %vm985, %v972, %v986
    %vm988 = vcmp.eq.s32.totalorder %v983, 2
    %v989 = vxor.u32 %v972, 2147483648
    %v990 = vsel %vm988, %v989, %v980
    %v991 = vsel %vm984, %v987, %v990
    %v992 = vsel %vm981, nan, %v991
    %v993 = vand.u32 2147483647, %v677
    %vm994 = vcmp.le.f32.partialorder %v993, 0.7853982
    %vm995 = vcmp.lt.s32.totalorder %v677, 0
    %v996 = vand.u32 %v677, 2139095040
    %v997 = vshrl.u32 %v996, 23
    %v998 = vsub.s32 %v997, 127
    %v999 = vand.u32 2147483647, %v677
    %v1000 = vand.u32 %v999, 8388607
    %v1001 = vor.u32 %v1000, 8388608
    %v1002 = vsub.s32 0, %v1001
    %v1003 = vadd.s32 %v998, 1
    %vm1004 = vcmp.gt.s32.totalorder %v1003, 0
    %v1005 = vsel %vm1004, %v1003, 0
    %v1006 = vshrl.u32 %v1005, 5
    %v1007 = vand.u32 %v1005, 31
    %v1008 = vsub.s32 32, %v1007
    %v1009 = vshrl.u32 683565275, %v1008
    %v1010 = vshll.u32 683565275, %v1007
    %v1011 = vshrl.u32 2475754826, %v1008
    %v1012 = vor.u32 %v1010, %v1011
    %v1013 = vshll.u32 2475754826, %v1007
    %v1014 = vshrl.u32 2131351028, %v1008
    %v1015 = vor.u32 %v1013, %v1014
    %v1016 = vshll.u32 2131351028, %v1007
    %v1017 = vshrl.u32 2102212464, %v1008
    %v1018 = vor.u32 %v1016, %v1017
    %v1019 = vshll.u32 2102212464, %v1007
    %v1020 = vshrl.u32 920167782, %v1008
    %v1021 = vor.u32 %v1019, %v1020
    %v1022 = vshll.u32 920167782, %v1007
    %v1023 = vshrl.u32 1326507024, %v1008
    %v1024 = vor.u32 %v1022, %v1023
    %vm1025 = vcmp.lt.s32.totalorder %v1006, 1
    %vm1026 = vcmp.lt.s32.totalorder %v1006, 2
    %vm1027 = vcmp.lt.s32.totalorder %v1006, 3
    %vm1028 = vcmp.lt.s32.totalorder %v1006, 4
    %v1029 = vsel %vm1025, %v1009, %v1012
    %v1030 = vsel %vm1028, %v1018, 2102212464
    %v1031 = vsel %vm1027, %v1015, %v1030
    %v1032 = vsel %vm1026, %v1029, %v1031
    %v1033 = vsel %vm1025, %v1012, %v1015
    %v1034 = vsel %vm1028, %v1021, 920167782
    %v1035 = vsel %vm1027, %v1018, %v1034
    %v1036 = vsel %vm1026, %v1033, %v1035
    %v1037 = vsel %vm1025, %v1015, %v1018
    %v1038 = vsel %vm1028, %v1024, 1326507024
    %v1039 = vsel %vm1027, %v1021, %v1038
    %v1040 = vsel %vm1026, %v1037, %v1039
    %v1041 = vshll.u32 %v1001, 8
    %v1042 = vand.u32 %v1041, 65535
    %v1043 = vshrl.u32 %v1041, 16
    %v1044 = vand.u32 %v1040, 65535
    %v1045 = vshrl.u32 %v1040, 16
    %v1046 = vmul.u32 %v1042, %v1044
    %v1047 = vmul.u32 %v1042, %v1045
    %v1048 = vmul.u32 %v1043, %v1044
    %v1049 = vmul.u32 %v1043, %v1045
    %v1050 = vshll.u32 %v1047, 16
    %v1051 = vshrl.u32 %v1047, 16
    %v1052 = vshll.u32 %v1048, 16
    %v1053 = vshrl.u32 %v1048, 16
    %vm1054 = vc.u32 %v1046, %v1050
    %v1055 = vsel %vm1054, 1, 0
    %v1056 = vadd.s32 %v1046, %v1050
    %v1057 = vadd.s32 %v1049, %v1055
    %vm1058 = vc.u32 %v1056, %v1052
    %v1059 = vsel %vm1058, 1, 0
    %v1060 = vadd.s32 %v1056, %v1052
    %v1061 = vadd.s32 %v1057, %v1059
    %v1062 = vadd.s32 %v1061, %v1051
    %v1063 = vadd.s32 %v1062, %v1053
    %v1064 = vand.u32 %v1041, 65535
    %v1065 = vshrl.u32 %v1041, 16
    %v1066 = vand.u32 %v1036, 65535
    %v1067 = vshrl.u32 %v1036, 16
    %v1068 = vmul.u32 %v1064, %v1066
    %v1069 = vmul.u32 %v1064, %v1067
    %v1070 = vmul.u32 %v1065, %v1066
    %v1071 = vmul.u32 %v1065, %v1067
    %v1072 = vshll.u32 %v1069, 16
    %v1073 = vshrl.u32 %v1069, 16
    %v1074 = vshll.u32 %v1070, 16
    %v1075 = vshrl.u32 %v1070, 16
    %vm1076 = vc.u32 %v1068, %v1072
    %v1077 = vsel %vm1076, 1, 0
    %v1078 = vadd.s32 %v1068, %v1072
    %v1079 = vadd.s32 %v1071, %v1077
    %vm1080 = vc.u32 %v1078, %v1074
    %v1081 = vsel %vm1080, 1, 0
    %v1082 = vadd.s32 %v1078, %v1074
    %v1083 = vadd.s32 %v1079, %v1081
    %v1084 = vadd.s32 %v1083, %v1073
    %v1085 = vadd.s32 %v1084, %v1075
    %v1086 = vmul.u32 %v1041, %v1032
    %v1087 = vadd.s32 %v1063, %v1082
    %vm1088 = vc.u32 %v1063, %v1082
    %v1089 = vadd.s32 %v1085, 1
    %v1090 = vsel %vm1088, %v1089, %v1085
    %v1091 = vadd.s32 %v1086, %v1090
    %v1092 = vadd.s32 %v1091, 536870912
    %v1093 = vshrl.u32 %v1092, 30
    %v1094 = vshll.u32 %v1093, 30
    %v1095 = vsub.s32 %v1091, %v1094
    %vm1096 = vcmp.lt.s32.totalorder %v1095, 0
    %v1097 = vsub.s32 0, %v1095
    %v1098 = vsel %vm1096, %v1097, %v1095
    %v1099 = vclz %v1098
    %v1100 = vsub.s32 %v1099, 2
    %vm1101 = vcmp.gt.s32.totalorder 0, %v1100
    %v1102 = vsel %vm1101, 0, %v1100
    %v1103 = vsub.s32 32, %v1102
    %v1104 = vshll.u32 %v1095, %v1102
    %v1105 = vshrl.u32 %v1087, %v1103
    %v1106 = vor.u32 %v1104, %v1105
    %v1107 = vsub.s32 4294967266, %v1102
    %v1108 = vadd.s32 %v1107, 127
    %v1109 = vshll.u32 %v1108, 23
    %v1110 = vor.u32 4788187, %v1109
    %v1111 = vand.u32 2147483647, %v1110
    %v1113 = vcvt.s32.f32 %v1106
    %v1114 = vmul.f32 %v1113, %v1111
    %v1115 = vxor.u32 %v1114, 2147483648
    %v1116 = vsel %vm995, %v1115, %v1114
    %v1117 = vsub.s32 4, %v1093
    %v1118 = vsel %vm995, %v1117, %v1093
    %v1119 = vsel %vm994, %v677, %v1116
    %v1120 = vsel %vm994, 0, %v1118
    %v1121 = vmul.f32 %v1119, %v1119
    %v1122 = vmul.f32 %v1121, -0.001358992
    %v1123 = vadd.f32 %v1122, 0.041655596
    %v1124 = vmul.f32 %v1121, %v1123
    %v1125 = vadd.f32 %v1124, -0.4999988
    %v1126 = vmul.f32 %v1121, %v1125
    %v1127 = vadd.f32 1.0, %v1126
    %v1128 = vmul.f32 %v1119, %v1119
    %v1129 = vmul.f32 %v1128, -0.00019511016
    %v1130 = vadd.f32 %v1129, 0.008332121
    %v1131 = vmul.f32 %v1128, %v1130
    %v1132 = vadd.f32 %v1131, -0.16666654
    %v1133 = vmul.f32 %v1128, %v1132
    %v1134 = vadd.f32 %v1133, 1.0
    %v1135 = vmul.f32 %v1134, %v1119
    %vm1136 = vweird.f32 %v677
    %v1137 = vadd.s32 %v1120, 3
    %v1138 = vand.u32 %v1137, 3
    %vm1139 = vcmp.lt.s32.totalorder %v1138, 2
    %vm1140 = vcmp.eq.s32.totalorder %v1138, 0
    %v1141 = vxor.u32 %v1135, 2147483648
    %v1142 = vsel %vm1140, %v1127, %v1141
    %vm1143 = vcmp.eq.s32.totalorder %v1138, 2
    %v1144 = vxor.u32 %v1127, 2147483648
    %v1145 = vsel %vm1143, %v1144, %v1135
    %v1146 = vsel %vm1139, %v1142, %v1145
    %v1147 = vsel %vm1136, nan, %v1146
    %v1148 = vand.u32 2147483647, %v678
    %vm1149 = vcmp.le.f32.partialorder %v1148, 0.7853982
    %vm1150 = vcmp.lt.s32.totalorder %v678, 0
    %v1151 = vand.u32 %v678, 2139095040
    %v1152 = vshrl.u32 %v1151, 23
    %v1153 = vsub.s32 %v1152, 127
    %v1154 = vand.u32 2147483647, %v678
    %v1155 = vand.u32 %v1154, 8388607
    %v1156 = vor.u32 %v1155, 8388608
    %v1157 = vsub.s32 0, %v1156
    %v1158 = vadd.s32 %v1153, 1
    %vm1159 = vcmp.gt.s32.totalorder %v1158, 0
    %v1160 = vsel %vm1159, %v1158, 0
    %v1161 = vshrl.u32 %v1160, 5
    %v1162 = vand.u32 %v1160, 31
    %v1163 = vsub.s32 32, %v1162
    %v1164 = vshrl.u32 683565275, %v1163
    %v1165 = vshll.u32 683565275, %v1162
    %v1166 = vshrl.u32 2475754826, %v1163
    %v1167 = vor.u32 %v1165, %v1166
    %v1168 = vshll.u32 2475754826, %v1162
    %v1169 = vshrl.u32 2131351028, %v1163
    %v1170 = vor.u32 %v1168, %v1169
    %v1171 = vshll.u32 2131351028, %v1162
    %v1172 = vshrl.u32 2102212464, %v1163
    %v1173 = vor.u32 %v1171, %v1172
    %v1174 = vshll.u32 2102212464, %v1162
    %v1175 = vshrl.u32 920167782, %v1163
    %v1176 = vor.u32 %v1174, %v1175
    %v1177 = vshll.u32 920167782, %v1162
    %v1178 = vshrl.u32 1326507024, %v1163
    %v1179 = vor.u32 %v1177, %v1178
    %vm1180 = vcmp.lt.s32.totalorder %v1161, 1
    %vm1181 = vcmp.lt.s32.totalorder %v1161, 2
    %vm1182 = vcmp.lt.s32.totalorder %v1161, 3
    %vm1183 = vcmp.lt.s32.totalorder %v1161, 4
    %v1184 = vsel %vm1180, %v1164, %v1167
    %v1185 = vsel %vm1183, %v1173, 2102212464
    %v1186 = vsel %vm1182, %v1170, %v1185
    %v1187 = vsel %vm1181, %v1184, %v1186
    %v1188 = vsel %vm1180, %v1167, %v1170
    %v1189 = vsel %vm1183, %v1176, 920167782
    %v1190 = vsel %vm1182, %v1173, %v1189
    %v1191 = vsel %vm1181, %v1188, %v1190
    %v1192 = vsel %vm1180, %v1170, %v1173
    %v1193 = vsel %vm1183, %v1179, 1326507024
    %v1194 = vsel %vm1182, %v1176, %v1193
    %v1195 = vsel %vm1181, %v1192, %v1194
    %v1196 = vshll.u32 %v1156, 8
    %v1197 = vand.u32 %v1196, 65535
    %v1198 = vshrl.u32 %v1196, 16
    %v1199 = vand.u32 %v1195, 65535
    %v1200 = vshrl.u32 %v1195, 16
    %v1201 = vmul.u32 %v1197, %v1199
    %v1202 = vmul.u32 %v1197, %v1200
    %v1203 = vmul.u32 %v1198, %v1199
    %v1204 = vmul.u32 %v1198, %v1200
    %v1205 = vshll.u32 %v1202, 16
    %v1206 = vshrl.u32 %v1202, 16
    %v1207 = vshll.u32 %v1203, 16
    %v1208 = vshrl.u32 %v1203, 16
    %vm1209 = vc.u32 %v1201, %v1205
    %v1210 = vsel %vm1209, 1, 0
    %v1211 = vadd.s32 %v1201, %v1205
    %v1212 = vadd.s32 %v1204, %v1210
    %vm1213 = vc.u32 %v1211, %v1207
    %v1214 = vsel %vm1213, 1, 0
    %v1215 = vadd.s32 %v1211, %v1207
    %v1216 = vadd.s32 %v1212, %v1214
    %v1217 = vadd.s32 %v1216, %v1206
    %v1218 = vadd.s32 %v1217, %v1208
    %v1219 = vand.u32 %v1196, 65535
    %v1220 = vshrl.u32 %v1196, 16
    %v1221 = vand.u32 %v1191, 65535
    %v1222 = vshrl.u32 %v1191, 16
    %v1223 = vmul.u32 %v1219, %v1221
    %v1224 = vmul.u32 %v1219, %v1222
    %v1225 = vmul.u32 %v1220, %v1221
    %v1226 = vmul.u32 %v1220, %v1222
    %v1227 = vshll.u32 %v1224, 16
    %v1228 = vshrl.u32 %v1224, 16
    %v1229 = vshll.u32 %v1225, 16
    %v1230 = vshrl.u32 %v1225, 16
    %vm1231 = vc.u32 %v1223, %v1227
    %v1232 = vsel %vm1231, 1, 0
    %v1233 = vadd.s32 %v1223, %v1227
    %v1234 = vadd.s32 %v1226, %v1232
    %vm1235 = vc.u32 %v1233, %v1229
    %v1236 = vsel %vm1235, 1, 0
    %v1237 = vadd.s32 %v1233, %v1229
    %v1238 = vadd.s32 %v1234, %v1236
    %v1239 = vadd.s32 %v1238, %v1228
    %v1240 = vadd.s32 %v1239, %v1230
    %v1241 = vmul.u32 %v1196, %v1187
    %v1242 = vadd.s32 %v1218, %v1237
    %vm1243 = vc.u32 %v1218, %v1237
    %v1244 = vadd.s32 %v1240, 1
    %v1245 = vsel %vm1243, %v1244, %v1240
    %v1246 = vadd.s32 %v1241, %v1245
    %v1247 = vadd.s32 %v1246, 536870912
    %v1248 = vshrl.u32 %v1247, 30
    %v1249 = vshll.u32 %v1248, 30
    %v1250 = vsub.s32 %v1246, %v1249
    %vm1251 = vcmp.lt.s32.totalorder %v1250, 0
    %v1252 = vsub.s32 0, %v1250
    %v1253 = vsel %vm1251, %v1252, %v1250
    %v1254 = vclz %v1253
    %v1255 = vsub.s32 %v1254, 2
    %vm1256 = vcmp.gt.s32.totalorder 0, %v1255
    %v1257 = vsel %vm1256, 0, %v1255
    %v1258 = vsub.s32 32, %v1257
    %v1259 = vshll.u32 %v1250, %v1257
    %v1260 = vshrl.u32 %v1242, %v1258
    %v1261 = vor.u32 %v1259, %v1260
    %v1262 = vsub.s32 4294967266, %v1257
    %v1263 = vadd.s32 %v1262, 127
    %v1264 = vshll.u32 %v1263, 23
    %v1265 = vor.u32 4788187, %v1264
    %v1266 = vand.u32 2147483647, %v1265
    %v1268 = vcvt.s32.f32 %v1261
    %v1269 = vmul.f32 %v1268, %v1266
    %v1270 = vxor.u32 %v1269, 2147483648
    %v1271 = vsel %vm1150, %v1270, %v1269
    %v1272 = vsub.s32 4, %v1248
    %v1273 = vsel %vm1150, %v1272, %v1248
    %v1274 = vsel %vm1149, %v678, %v1271
    %v1275 = vsel %vm1149, 0, %v1273
    %v1276 = vmul.f32 %v1274, %v1274
    %v1277 = vmul.f32 %v1276, -0.001358992
    %v1278 = vadd.f32 %v1277, 0.041655596
    %v1279 = vmul.f32 %v1276, %v1278
    %v1280 = vadd.f32 %v1279, -0.4999988
    %v1281 = vmul.f32 %v1276, %v1280
    %v1282 = vadd.f32 1.0, %v1281
    %v1283 = vmul.f32 %v1274, %v1274
    %v1284 = vmul.f32 %v1283, -0.00019511016
    %v1285 = vadd.f32 %v1284, 0.008332121
    %v1286 = vmul.f32 %v1283, %v1285
    %v1287 = vadd.f32 %v1286, -0.16666654
    %v1288 = vmul.f32 %v1283, %v1287
    %v1289 = vadd.f32 %v1288, 1.0
    %v1290 = vmul.f32 %v1289, %v1274
    %vm1291 = vweird.f32 %v678
    %v1292 = vadd.s32 %v1275, 3
    %v1293 = vand.u32 %v1292, 3
    %vm1294 = vcmp.lt.s32.totalorder %v1293, 2
    %vm1295 = vcmp.eq.s32.totalorder %v1293, 0
    %v1296 = vxor.u32 %v1290, 2147483648
    %v1297 = vsel %vm1295, %v1282, %v1296
    %vm1298 = vcmp.eq.s32.totalorder %v1293, 2
    %v1299 = vxor.u32 %v1282, 2147483648
    %v1300 = vsel %vm1298, %v1299, %v1290
    %v1301 = vsel %vm1294, %v1297, %v1300
    %v1302 = vsel %vm1291, nan, %v1301
    %v1303 = vand.u32 2147483647, %v679
    %vm1304 = vcmp.le.f32.partialorder %v1303, 0.7853982
    %vm1305 = vcmp.lt.s32.totalorder %v679, 0
    %v1306 = vand.u32 %v679, 2139095040
    %v1307 = vshrl.u32 %v1306, 23
    %v1308 = vsub.s32 %v1307, 127
    %v1309 = vand.u32 2147483647, %v679
    %v1310 = vand.u32 %v1309, 8388607
    %v1311 = vor.u32 %v1310, 8388608
    %v1312 = vsub.s32 0, %v1311
    %v1313 = vadd.s32 %v1308, 1
    %vm1314 = vcmp.gt.s32.totalorder %v1313, 0
    %v1315 = vsel %vm1314, %v1313, 0
    %v1316 = vshrl.u32 %v1315, 5
    %v1317 = vand.u32 %v1315, 31
    %v1318 = vsub.s32 32, %v1317
    %v1319 = vshrl.u32 683565275, %v1318
    %v1320 = vshll.u32 683565275, %v1317
    %v1321 = vshrl.u32 2475754826, %v1318
    %v1322 = vor.u32 %v1320, %v1321
    %v1323 = vshll.u32 2475754826, %v1317
    %v1324 = vshrl.u32 2131351028, %v1318
    %v1325 = vor.u32 %v1323, %v1324
    %v1326 = vshll.u32 2131351028, %v1317
    %v1327 = vshrl.u32 2102212464, %v1318
    %v1328 = vor.u32 %v1326, %v1327
    %v1329 = vshll.u32 2102212464, %v1317
    %v1330 = vshrl.u32 920167782, %v1318
    %v1331 = vor.u32 %v1329, %v1330
    %v1332 = vshll.u32 920167782, %v1317
    %v1333 = vshrl.u32 1326507024, %v1318
    %v1334 = vor.u32 %v1332, %v1333
    %vm1335 = vcmp.lt.s32.totalorder %v1316, 1
    %vm1336 = vcmp.lt.s32.totalorder %v1316, 2
    %vm1337 = vcmp.lt.s32.totalorder %v1316, 3
    %vm1338 = vcmp.lt.s32.totalorder %v1316, 4
    %v1339 = vsel %vm1335, %v1319, %v1322
    %v1340 = vsel %vm1338, %v1328, 2102212464
    %v1341 = vsel %vm1337, %v1325, %v1340
    %v1342 = vsel %vm1336, %v1339, %v1341
    %v1343 = vsel %vm1335, %v1322, %v1325
    %v1344 = vsel %vm1338, %v1331, 920167782
    %v1345 = vsel %vm1337, %v1328, %v1344
    %v1346 = vsel %vm1336, %v1343, %v1345
    %v1347 = vsel %vm1335, %v1325, %v1328
    %v1348 = vsel %vm1338, %v1334, 1326507024
    %v1349 = vsel %vm1337, %v1331, %v1348
    %v1350 = vsel %vm1336, %v1347, %v1349
    %v1351 = vshll.u32 %v1311, 8
    %v1352 = vand.u32 %v1351, 65535
    %v1353 = vshrl.u32 %v1351, 16
    %v1354 = vand.u32 %v1350, 65535
    %v1355 = vshrl.u32 %v1350, 16
    %v1356 = vmul.u32 %v1352, %v1354
    %v1357 = vmul.u32 %v1352, %v1355
    %v1358 = vmul.u32 %v1353, %v1354
    %v1359 = vmul.u32 %v1353, %v1355
    %v1360 = vshll.u32 %v1357, 16
    %v1361 = vshrl.u32 %v1357, 16
    %v1362 = vshll.u32 %v1358, 16
    %v1363 = vshrl.u32 %v1358, 16
    %vm1364 = vc.u32 %v1356, %v1360
    %v1365 = vsel %vm1364, 1, 0
    %v1366 = vadd.s32 %v1356, %v1360
    %v1367 = vadd.s32 %v1359, %v1365
    %vm1368 = vc.u32 %v1366, %v1362
    %v1369 = vsel %vm1368, 1, 0
    %v1370 = vadd.s32 %v1366, %v1362
    %v1371 = vadd.s32 %v1367, %v1369
    %v1372 = vadd.s32 %v1371, %v1361
    %v1373 = vadd.s32 %v1372, %v1363
    %v1374 = vand.u32 %v1351, 65535
    %v1375 = vshrl.u32 %v1351, 16
    %v1376 = vand.u32 %v1346, 65535
    %v1377 = vshrl.u32 %v1346, 16
    %v1378 = vmul.u32 %v1374, %v1376
    %v1379 = vmul.u32 %v1374, %v1377
    %v1380 = vmul.u32 %v1375, %v1376
    %v1381 = vmul.u32 %v1375, %v1377
    %v1382 = vshll.u32 %v1379, 16
    %v1383 = vshrl.u32 %v1379, 16
    %v1384 = vshll.u32 %v1380, 16
    %v1385 = vshrl.u32 %v1380, 16
    %vm1386 = vc.u32 %v1378, %v1382
    %v1387 = vsel %vm1386, 1, 0
    %v1388 = vadd.s32 %v1378, %v1382
    %v1389 = vadd.s32 %v1381, %v1387
    %vm1390 = vc.u32 %v1388, %v1384
    %v1391 = vsel %vm1390, 1, 0
    %v1392 = vadd.s32 %v1388, %v1384
    %v1393 = vadd.s32 %v1389, %v1391
    %v1394 = vadd.s32 %v1393, %v1383
    %v1395 = vadd.s32 %v1394, %v1385
    %v1396 = vmul.u32 %v1351, %v1342
    %v1397 = vadd.s32 %v1373, %v1392
    %vm1398 = vc.u32 %v1373, %v1392
    %v1399 = vadd.s32 %v1395, 1
    %v1400 = vsel %vm1398, %v1399, %v1395
    %v1401 = vadd.s32 %v1396, %v1400
    %v1402 = vadd.s32 %v1401, 536870912
    %v1403 = vshrl.u32 %v1402, 30
    %v1404 = vshll.u32 %v1403, 30
    %v1405 = vsub.s32 %v1401, %v1404
    %vm1406 = vcmp.lt.s32.totalorder %v1405, 0
    %v1407 = vsub.s32 0, %v1405
    %v1408 = vsel %vm1406, %v1407, %v1405
    %v1409 = vclz %v1408
    %v1410 = vsub.s32 %v1409, 2
    %vm1411 = vcmp.gt.s32.totalorder 0, %v1410
    %v1412 = vsel %vm1411, 0, %v1410
    %v1413 = vsub.s32 32, %v1412
    %v1414 = vshll.u32 %v1405, %v1412
    %v1415 = vshrl.u32 %v1397, %v1413
    %v1416 = vor.u32 %v1414, %v1415
    %v1417 = vsub.s32 4294967266, %v1412
    %v1418 = vadd.s32 %v1417, 127
    %v1419 = vshll.u32 %v1418, 23
    %v1420 = vor.u32 4788187, %v1419
    %v1421 = vand.u32 2147483647, %v1420
    %v1423 = vcvt.s32.f32 %v1416
    %v1424 = vmul.f32 %v1423, %v1421
    %v1425 = vxor.u32 %v1424, 2147483648
    %v1426 = vsel %vm1305, %v1425, %v1424
    %v1427 = vsub.s32 4, %v1403
    %v1428 = vsel %vm1305, %v1427, %v1403
    %v1429 = vsel %vm1304, %v679, %v1426
    %v1430 = vsel %vm1304, 0, %v1428
    %v1431 = vmul.f32 %v1429, %v1429
    %v1432 = vmul.f32 %v1431, -0.001358992
    %v1433 = vadd.f32 %v1432, 0.041655596
    %v1434 = vmul.f32 %v1431, %v1433
    %v1435 = vadd.f32 %v1434, -0.4999988
    %v1436 = vmul.f32 %v1431, %v1435
    %v1437 = vadd.f32 1.0, %v1436
    %v1438 = vmul.f32 %v1429, %v1429
    %v1439 = vmul.f32 %v1438, -0.00019511016
    %v1440 = vadd.f32 %v1439, 0.008332121
    %v1441 = vmul.f32 %v1438, %v1440
    %v1442 = vadd.f32 %v1441, -0.16666654
    %v1443 = vmul.f32 %v1438, %v1442
    %v1444 = vadd.f32 %v1443, 1.0
    %v1445 = vmul.f32 %v1444, %v1429
    %vm1446 = vweird.f32 %v679
    %v1447 = vadd.s32 %v1430, 3
    %v1448 = vand.u32 %v1447, 3
    %vm1449 = vcmp.lt.s32.totalorder %v1448, 2
    %vm1450 = vcmp.eq.s32.totalorder %v1448, 0
    %v1451 = vxor.u32 %v1445, 2147483648
    %v1452 = vsel %vm1450, %v1437, %v1451
    %vm1453 = vcmp.eq.s32.totalorder %v1448, 2
    %v1454 = vxor.u32 %v1437, 2147483648
    %v1455 = vsel %vm1453, %v1454, %v1445
    %v1456 = vsel %vm1449, %v1452, %v1455
    %v1457 = vsel %vm1446, nan, %v1456
    %v1458 = vand.u32 2147483647, %v680
    %vm1459 = vcmp.le.f32.partialorder %v1458, 0.7853982
    %vm1460 = vcmp.lt.s32.totalorder %v680, 0
    %v1461 = vand.u32 %v680, 2139095040
    %v1462 = vshrl.u32 %v1461, 23
    %v1463 = vsub.s32 %v1462, 127
    %v1464 = vand.u32 2147483647, %v680
    %v1465 = vand.u32 %v1464, 8388607
    %v1466 = vor.u32 %v1465, 8388608
    %v1467 = vsub.s32 0, %v1466
    %v1468 = vadd.s32 %v1463, 1
    %vm1469 = vcmp.gt.s32.totalorder %v1468, 0
    %v1470 = vsel %vm1469, %v1468, 0
    %v1471 = vshrl.u32 %v1470, 5
    %v1472 = vand.u32 %v1470, 31
    %v1473 = vsub.s32 32, %v1472
    %v1474 = vshrl.u32 683565275, %v1473
    %v1475 = vshll.u32 683565275, %v1472
    %v1476 = vshrl.u32 2475754826, %v1473
    %v1477 = vor.u32 %v1475, %v1476
    %v1478 = vshll.u32 2475754826, %v1472
    %v1479 = vshrl.u32 2131351028, %v1473
    %v1480 = vor.u32 %v1478, %v1479
    %v1481 = vshll.u32 2131351028, %v1472
    %v1482 = vshrl.u32 2102212464, %v1473
    %v1483 = vor.u32 %v1481, %v1482
    %v1484 = vshll.u32 2102212464, %v1472
    %v1485 = vshrl.u32 920167782, %v1473
    %v1486 = vor.u32 %v1484, %v1485
    %v1487 = vshll.u32 920167782, %v1472
    %v1488 = vshrl.u32 1326507024, %v1473
    %v1489 = vor.u32 %v1487, %v1488
    %vm1490 = vcmp.lt.s32.totalorder %v1471, 1
    %vm1491 = vcmp.lt.s32.totalorder %v1471, 2
    %vm1492 = vcmp.lt.s32.totalorder %v1471, 3
    %vm1493 = vcmp.lt.s32.totalorder %v1471, 4
    %v1494 = vsel %vm1490, %v1474, %v1477
    %v1495 = vsel %vm1493, %v1483, 2102212464
    %v1496 = vsel %vm1492, %v1480, %v1495
    %v1497 = vsel %vm1491, %v1494, %v1496
    %v1498 = vsel %vm1490, %v1477, %v1480
    %v1499 = vsel %vm1493, %v1486, 920167782
    %v1500 = vsel %vm1492, %v1483, %v1499
    %v1501 = vsel %vm1491, %v1498, %v1500
    %v1502 = vsel %vm1490, %v1480, %v1483
    %v1503 = vsel %vm1493, %v1489, 1326507024
    %v1504 = vsel %vm1492, %v1486, %v1503
    %v1505 = vsel %vm1491, %v1502, %v1504
    %v1506 = vshll.u32 %v1466, 8
    %v1507 = vand.u32 %v1506, 65535
    %v1508 = vshrl.u32 %v1506, 16
    %v1509 = vand.u32 %v1505, 65535
    %v1510 = vshrl.u32 %v1505, 16
    %v1511 = vmul.u32 %v1507, %v1509
    %v1512 = vmul.u32 %v1507, %v1510
    %v1513 = vmul.u32 %v1508, %v1509
    %v1514 = vmul.u32 %v1508, %v1510
    %v1515 = vshll.u32 %v1512, 16
    %v1516 = vshrl.u32 %v1512, 16
    %v1517 = vshll.u32 %v1513, 16
    %v1518 = vshrl.u32 %v1513, 16
    %vm1519 = vc.u32 %v1511, %v1515
    %v1520 = vsel %vm1519, 1, 0
    %v1521 = vadd.s32 %v1511, %v1515
    %v1522 = vadd.s32 %v1514, %v1520
    %vm1523 = vc.u32 %v1521, %v1517
    %v1524 = vsel %vm1523, 1, 0
    %v1525 = vadd.s32 %v1521, %v1517
    %v1526 = vadd.s32 %v1522, %v1524
    %v1527 = vadd.s32 %v1526, %v1516
    %v1528 = vadd.s32 %v1527, %v1518
    %v1529 = vand.u32 %v1506, 65535
    %v1530 = vshrl.u32 %v1506, 16
    %v1531 = vand.u32 %v1501, 65535
    %v1532 = vshrl.u32 %v1501, 16
    %v1533 = vmul.u32 %v1529, %v1531
    %v1534 = vmul.u32 %v1529, %v1532
    %v1535 = vmul.u32 %v1530, %v1531
    %v1536 = vmul.u32 %v1530, %v1532
    %v1537 = vshll.u32 %v1534, 16
    %v1538 = vshrl.u32 %v1534, 16
    %v1539 = vshll.u32 %v1535, 16
    %v1540 = vshrl.u32 %v1535, 16
    %vm1541 = vc.u32 %v1533, %v1537
    %v1542 = vsel %vm1541, 1, 0
    %v1543 = vadd.s32 %v1533, %v1537
    %v1544 = vadd.s32 %v1536, %v1542
    %vm1545 = vc.u32 %v1543, %v1539
    %v1546 = vsel %vm1545, 1, 0
    %v1547 = vadd.s32 %v1543, %v1539
    %v1548 = vadd.s32 %v1544, %v1546
    %v1549 = vadd.s32 %v1548, %v1538
    %v1550 = vadd.s32 %v1549, %v1540
    %v1551 = vmul.u32 %v1506, %v1497
    %v1552 = vadd.s32 %v1528, %v1547
    %vm1553 = vc.u32 %v1528, %v1547
    %v1554 = vadd.s32 %v1550, 1
    %v1555 = vsel %vm1553, %v1554, %v1550
    %v1556 = vadd.s32 %v1551, %v1555
    %v1557 = vadd.s32 %v1556, 536870912
    %v1558 = vshrl.u32 %v1557, 30
    %v1559 = vshll.u32 %v1558, 30
    %v1560 = vsub.s32 %v1556, %v1559
    %vm1561 = vcmp.lt.s32.totalorder %v1560, 0
    %v1562 = vsub.s32 0, %v1560
    %v1563 = vsel %vm1561, %v1562, %v1560
    %v1564 = vclz %v1563
    %v1565 = vsub.s32 %v1564, 2
    %vm1566 = vcmp.gt.s32.totalorder 0, %v1565
    %v1567 = vsel %vm1566, 0, %v1565
    %v1568 = vsub.s32 32, %v1567
    %v1569 = vshll.u32 %v1560, %v1567
    %v1570 = vshrl.u32 %v1552, %v1568
    %v1571 = vor.u32 %v1569, %v1570
    %v1572 = vsub.s32 4294967266, %v1567
    %v1573 = vadd.s32 %v1572, 127
    %v1574 = vshll.u32 %v1573, 23
    %v1575 = vor.u32 4788187, %v1574
    %v1576 = vand.u32 2147483647, %v1575
    %v1578 = vcvt.s32.f32 %v1571
    %v1579 = vmul.f32 %v1578, %v1576
    %v1580 = vxor.u32 %v1579, 2147483648
    %v1581 = vsel %vm1460, %v1580, %v1579
    %v1582 = vsub.s32 4, %v1558
    %v1583 = vsel %vm1460, %v1582, %v1558
    %v1584 = vsel %vm1459, %v680, %v1581
    %v1585 = vsel %vm1459, 0, %v1583
    %v1586 = vmul.f32 %v1584, %v1584
    %v1587 = vmul.f32 %v1586, -0.001358992
    %v1588 = vadd.f32 %v1587, 0.041655596
    %v1589 = vmul.f32 %v1586, %v1588
    %v1590 = vadd.f32 %v1589, -0.4999988
    %v1591 = vmul.f32 %v1586, %v1590
    %v1592 = vadd.f32 1.0, %v1591
    %v1593 = vmul.f32 %v1584, %v1584
    %v1594 = vmul.f32 %v1593, -0.00019511016
    %v1595 = vadd.f32 %v1594, 0.008332121
    %v1596 = vmul.f32 %v1593, %v1595
    %v1597 = vadd.f32 %v1596, -0.16666654
    %v1598 = vmul.f32 %v1593, %v1597
    %v1599 = vadd.f32 %v1598, 1.0
    %v1600 = vmul.f32 %v1599, %v1584
    %vm1601 = vweird.f32 %v680
    %v1602 = vadd.s32 %v1585, 3
    %v1603 = vand.u32 %v1602, 3
    %vm1604 = vcmp.lt.s32.totalorder %v1603, 2
    %vm1605 = vcmp.eq.s32.totalorder %v1603, 0
    %v1606 = vxor.u32 %v1600, 2147483648
    %v1607 = vsel %vm1605, %v1592, %v1606
    %vm1608 = vcmp.eq.s32.totalorder %v1603, 2
    %v1609 = vxor.u32 %v1592, 2147483648
    %v1610 = vsel %vm1608, %v1609, %v1600
    %v1611 = vsel %vm1604, %v1607, %v1610
    %v1612 = vsel %vm1601, nan, %v1611
    %v1613 = vand.u32 2147483647, %v681
    %vm1614 = vcmp.le.f32.partialorder %v1613, 0.7853982
    %vm1615 = vcmp.lt.s32.totalorder %v681, 0
    %v1616 = vand.u32 %v681, 2139095040
    %v1617 = vshrl.u32 %v1616, 23
    %v1618 = vsub.s32 %v1617, 127
    %v1619 = vand.u32 2147483647, %v681
    %v1620 = vand.u32 %v1619, 8388607
    %v1621 = vor.u32 %v1620, 8388608
    %v1622 = vsub.s32 0, %v1621
    %v1623 = vadd.s32 %v1618, 1
    %vm1624 = vcmp.gt.s32.totalorder %v1623, 0
    %v1625 = vsel %vm1624, %v1623, 0
    %v1626 = vshrl.u32 %v1625, 5
    %v1627 = vand.u32 %v1625, 31
    %v1628 = vsub.s32 32, %v1627
    %v1629 = vshrl.u32 683565275, %v1628
    %v1630 = vshll.u32 683565275, %v1627
    %v1631 = vshrl.u32 2475754826, %v1628
    %v1632 = vor.u32 %v1630, %v1631
    %v1633 = vshll.u32 2475754826, %v1627
    %v1634 = vshrl.u32 2131351028, %v1628
    %v1635 = vor.u32 %v1633, %v1634
    %v1636 = vshll.u32 2131351028, %v1627
    %v1637 = vshrl.u32 2102212464, %v1628
    %v1638 = vor.u32 %v1636, %v1637
    %v1639 = vshll.u32 2102212464, %v1627
    %v1640 = vshrl.u32 920167782, %v1628
    %v1641 = vor.u32 %v1639, %v1640
    %v1642 = vshll.u32 920167782, %v1627
    %v1643 = vshrl.u32 1326507024, %v1628
    %v1644 = vor.u32 %v1642, %v1643
    %vm1645 = vcmp.lt.s32.totalorder %v1626, 1
    %vm1646 = vcmp.lt.s32.totalorder %v1626, 2
    %vm1647 = vcmp.lt.s32.totalorder %v1626, 3
    %vm1648 = vcmp.lt.s32.totalorder %v1626, 4
    %v1649 = vsel %vm1645, %v1629, %v1632
    %v1650 = vsel %vm1648, %v1638, 2102212464
    %v1651 = vsel %vm1647, %v1635, %v1650
    %v1652 = vsel %vm1646, %v1649, %v1651
    %v1653 = vsel %vm1645, %v1632, %v1635
    %v1654 = vsel %vm1648, %v1641, 920167782
    %v1655 = vsel %vm1647, %v1638, %v1654
    %v1656 = vsel %vm1646, %v1653, %v1655
    %v1657 = vsel %vm1645, %v1635, %v1638
    %v1658 = vsel %vm1648, %v1644, 1326507024
    %v1659 = vsel %vm1647, %v1641, %v1658
    %v1660 = vsel %vm1646, %v1657, %v1659
    %v1661 = vshll.u32 %v1621, 8
    %v1662 = vand.u32 %v1661, 65535
    %v1663 = vshrl.u32 %v1661, 16
    %v1664 = vand.u32 %v1660, 65535
    %v1665 = vshrl.u32 %v1660, 16
    %v1666 = vmul.u32 %v1662, %v1664
    %v1667 = vmul.u32 %v1662, %v1665
    %v1668 = vmul.u32 %v1663, %v1664
    %v1669 = vmul.u32 %v1663, %v1665
    %v1670 = vshll.u32 %v1667, 16
    %v1671 = vshrl.u32 %v1667, 16
    %v1672 = vshll.u32 %v1668, 16
    %v1673 = vshrl.u32 %v1668, 16
    %vm1674 = vc.u32 %v1666, %v1670
    %v1675 = vsel %vm1674, 1, 0
    %v1676 = vadd.s32 %v1666, %v1670
    %v1677 = vadd.s32 %v1669, %v1675
    %vm1678 = vc.u32 %v1676, %v1672
    %v1679 = vsel %vm1678, 1, 0
    %v1680 = vadd.s32 %v1676, %v1672
    %v1681 = vadd.s32 %v1677, %v1679
    %v1682 = vadd.s32 %v1681, %v1671
    %v1683 = vadd.s32 %v1682, %v1673
    %v1684 = vand.u32 %v1661, 65535
    %v1685 = vshrl.u32 %v1661, 16
    %v1686 = vand.u32 %v1656, 65535
    %v1687 = vshrl.u32 %v1656, 16
    %v1688 = vmul.u32 %v1684, %v1686
    %v1689 = vmul.u32 %v1684, %v1687
    %v1690 = vmul.u32 %v1685, %v1686
    %v1691 = vmul.u32 %v1685, %v1687
    %v1692 = vshll.u32 %v1689, 16
    %v1693 = vshrl.u32 %v1689, 16
    %v1694 = vshll.u32 %v1690, 16
    %v1695 = vshrl.u32 %v1690, 16
    %vm1696 = vc.u32 %v1688, %v1692
    %v1697 = vsel %vm1696, 1, 0
    %v1698 = vadd.s32 %v1688, %v1692
    %v1699 = vadd.s32 %v1691, %v1697
    %vm1700 = vc.u32 %v1698, %v1694
    %v1701 = vsel %vm1700, 1, 0
    %v1702 = vadd.s32 %v1698, %v1694
    %v1703 = vadd.s32 %v1699, %v1701
    %v1704 = vadd.s32 %v1703, %v1693
    %v1705 = vadd.s32 %v1704, %v1695
    %v1706 = vmul.u32 %v1661, %v1652
    %v1707 = vadd.s32 %v1683, %v1702
    %vm1708 = vc.u32 %v1683, %v1702
    %v1709 = vadd.s32 %v1705, 1
    %v1710 = vsel %vm1708, %v1709, %v1705
    %v1711 = vadd.s32 %v1706, %v1710
    %v1712 = vadd.s32 %v1711, 536870912
    %v1713 = vshrl.u32 %v1712, 30
    %v1714 = vshll.u32 %v1713, 30
    %v1715 = vsub.s32 %v1711, %v1714
    %vm1716 = vcmp.lt.s32.totalorder %v1715, 0
    %v1717 = vsub.s32 0, %v1715
    %v1718 = vsel %vm1716, %v1717, %v1715
    %v1719 = vclz %v1718
    %v1720 = vsub.s32 %v1719, 2
    %vm1721 = vcmp.gt.s32.totalorder 0, %v1720
    %v1722 = vsel %vm1721, 0, %v1720
    %v1723 = vsub.s32 32, %v1722
    %v1724 = vshll.u32 %v1715, %v1722
    %v1725 = vshrl.u32 %v1707, %v1723
    %v1726 = vor.u32 %v1724, %v1725
    %v1727 = vsub.s32 4294967266, %v1722
    %v1728 = vadd.s32 %v1727, 127
    %v1729 = vshll.u32 %v1728, 23
    %v1730 = vor.u32 4788187, %v1729
    %v1731 = vand.u32 2147483647, %v1730
    %v1733 = vcvt.s32.f32 %v1726
    %v1734 = vmul.f32 %v1733, %v1731
    %v1735 = vxor.u32 %v1734, 2147483648
    %v1736 = vsel %vm1615, %v1735, %v1734
    %v1737 = vsub.s32 4, %v1713
    %v1738 = vsel %vm1615, %v1737, %v1713
    %v1739 = vsel %vm1614, %v681, %v1736
    %v1740 = vsel %vm1614, 0, %v1738
    %v1741 = vmul.f32 %v1739, %v1739
    %v1742 = vmul.f32 %v1741, -0.001358992
    %v1743 = vadd.f32 %v1742, 0.041655596
    %v1744 = vmul.f32 %v1741, %v1743
    %v1745 = vadd.f32 %v1744, -0.4999988
    %v1746 = vmul.f32 %v1741, %v1745
    %v1747 = vadd.f32 1.0, %v1746
    %v1748 = vmul.f32 %v1739, %v1739
    %v1749 = vmul.f32 %v1748, -0.00019511016
    %v1750 = vadd.f32 %v1749, 0.008332121
    %v1751 = vmul.f32 %v1748, %v1750
    %v1752 = vadd.f32 %v1751, -0.16666654
    %v1753 = vmul.f32 %v1748, %v1752
    %v1754 = vadd.f32 %v1753, 1.0
    %v1755 = vmul.f32 %v1754, %v1739
    %vm1756 = vweird.f32 %v681
    %v1757 = vadd.s32 %v1740, 3
    %v1758 = vand.u32 %v1757, 3
    %vm1759 = vcmp.lt.s32.totalorder %v1758, 2
    %vm1760 = vcmp.eq.s32.totalorder %v1758, 0
    %v1761 = vxor.u32 %v1755, 2147483648
    %v1762 = vsel %vm1760, %v1747, %v1761
    %vm1763 = vcmp.eq.s32.totalorder %v1758, 2
    %v1764 = vxor.u32 %v1747, 2147483648
    %v1765 = vsel %vm1763, %v1764, %v1755
    %v1766 = vsel %vm1759, %v1762, %v1765
    %v1767 = vsel %vm1756, nan, %v1766
    %v1768 = vand.u32 2147483647, %v682
    %vm1769 = vcmp.le.f32.partialorder %v1768, 0.7853982
    %vm1770 = vcmp.lt.s32.totalorder %v682, 0
    %v1771 = vand.u32 %v682, 2139095040
    %v1772 = vshrl.u32 %v1771, 23
    %v1773 = vsub.s32 %v1772, 127
    %v1774 = vand.u32 2147483647, %v682
    %v1775 = vand.u32 %v1774, 8388607
    %v1776 = vor.u32 %v1775, 8388608
    %v1777 = vsub.s32 0, %v1776
    %v1778 = vadd.s32 %v1773, 1
    %vm1779 = vcmp.gt.s32.totalorder %v1778, 0
    %v1780 = vsel %vm1779, %v1778, 0
    %v1781 = vshrl.u32 %v1780, 5
    %v1782 = vand.u32 %v1780, 31
    %v1783 = vsub.s32 32, %v1782
    %v1784 = vshrl.u32 683565275, %v1783
    %v1785 = vshll.u32 683565275, %v1782
    %v1786 = vshrl.u32 2475754826, %v1783
    %v1787 = vor.u32 %v1785, %v1786
    %v1788 = vshll.u32 2475754826, %v1782
    %v1789 = vshrl.u32 2131351028, %v1783
    %v1790 = vor.u32 %v1788, %v1789
    %v1791 = vshll.u32 2131351028, %v1782
    %v1792 = vshrl.u32 2102212464, %v1783
    %v1793 = vor.u32 %v1791, %v1792
    %v1794 = vshll.u32 2102212464, %v1782
    %v1795 = vshrl.u32 920167782, %v1783
    %v1796 = vor.u32 %v1794, %v1795
    %v1797 = vshll.u32 920167782, %v1782
    %v1798 = vshrl.u32 1326507024, %v1783
    %v1799 = vor.u32 %v1797, %v1798
    %vm1800 = vcmp.lt.s32.totalorder %v1781, 1
    %vm1801 = vcmp.lt.s32.totalorder %v1781, 2
    %vm1802 = vcmp.lt.s32.totalorder %v1781, 3
    %vm1803 = vcmp.lt.s32.totalorder %v1781, 4
    %v1804 = vsel %vm1800, %v1784, %v1787
    %v1805 = vsel %vm1803, %v1793, 2102212464
    %v1806 = vsel %vm1802, %v1790, %v1805
    %v1807 = vsel %vm1801, %v1804, %v1806
    %v1808 = vsel %vm1800, %v1787, %v1790
    %v1809 = vsel %vm1803, %v1796, 920167782
    %v1810 = vsel %vm1802, %v1793, %v1809
    %v1811 = vsel %vm1801, %v1808, %v1810
    %v1812 = vsel %vm1800, %v1790, %v1793
    %v1813 = vsel %vm1803, %v1799, 1326507024
    %v1814 = vsel %vm1802, %v1796, %v1813
    %v1815 = vsel %vm1801, %v1812, %v1814
    %v1816 = vshll.u32 %v1776, 8
    %v1817 = vand.u32 %v1816, 65535
    %v1818 = vshrl.u32 %v1816, 16
    %v1819 = vand.u32 %v1815, 65535
    %v1820 = vshrl.u32 %v1815, 16
    %v1821 = vmul.u32 %v1817, %v1819
    %v1822 = vmul.u32 %v1817, %v1820
    %v1823 = vmul.u32 %v1818, %v1819
    %v1824 = vmul.u32 %v1818, %v1820
    %v1825 = vshll.u32 %v1822, 16
    %v1826 = vshrl.u32 %v1822, 16
    %v1827 = vshll.u32 %v1823, 16
    %v1828 = vshrl.u32 %v1823, 16
    %vm1829 = vc.u32 %v1821, %v1825
    %v1830 = vsel %vm1829, 1, 0
    %v1831 = vadd.s32 %v1821, %v1825
    %v1832 = vadd.s32 %v1824, %v1830
    %vm1833 = vc.u32 %v1831, %v1827
    %v1834 = vsel %vm1833, 1, 0
    %v1835 = vadd.s32 %v1831, %v1827
    %v1836 = vadd.s32 %v1832, %v1834
    %v1837 = vadd.s32 %v1836, %v1826
    %v1838 = vadd.s32 %v1837, %v1828
    %v1839 = vand.u32 %v1816, 65535
    %v1840 = vshrl.u32 %v1816, 16
    %v1841 = vand.u32 %v1811, 65535
    %v1842 = vshrl.u32 %v1811, 16
    %v1843 = vmul.u32 %v1839, %v1841
    %v1844 = vmul.u32 %v1839, %v1842
    %v1845 = vmul.u32 %v1840, %v1841
    %v1846 = vmul.u32 %v1840, %v1842
    %v1847 = vshll.u32 %v1844, 16
    %v1848 = vshrl.u32 %v1844, 16
    %v1849 = vshll.u32 %v1845, 16
    %v1850 = vshrl.u32 %v1845, 16
    %vm1851 = vc.u32 %v1843, %v1847
    %v1852 = vsel %vm1851, 1, 0
    %v1853 = vadd.s32 %v1843, %v1847
    %v1854 = vadd.s32 %v1846, %v1852
    %vm1855 = vc.u32 %v1853, %v1849
    %v1856 = vsel %vm1855, 1, 0
    %v1857 = vadd.s32 %v1853, %v1849
    %v1858 = vadd.s32 %v1854, %v1856
    %v1859 = vadd.s32 %v1858, %v1848
    %v1860 = vadd.s32 %v1859, %v1850
    %v1861 = vmul.u32 %v1816, %v1807
    %v1862 = vadd.s32 %v1838, %v1857
    %vm1863 = vc.u32 %v1838, %v1857
    %v1864 = vadd.s32 %v1860, 1
    %v1865 = vsel %vm1863, %v1864, %v1860
    %v1866 = vadd.s32 %v1861, %v1865
    %v1867 = vadd.s32 %v1866, 536870912
    %v1868 = vshrl.u32 %v1867, 30
    %v1869 = vshll.u32 %v1868, 30
    %v1870 = vsub.s32 %v1866, %v1869
    %vm1871 = vcmp.lt.s32.totalorder %v1870, 0
    %v1872 = vsub.s32 0, %v1870
    %v1873 = vsel %vm1871, %v1872, %v1870
    %v1874 = vclz %v1873
    %v1875 = vsub.s32 %v1874, 2
    %vm1876 = vcmp.gt.s32.totalorder 0, %v1875
    %v1877 = vsel %vm1876, 0, %v1875
    %v1878 = vsub.s32 32, %v1877
    %v1879 = vshll.u32 %v1870, %v1877
    %v1880 = vshrl.u32 %v1862, %v1878
    %v1881 = vor.u32 %v1879, %v1880
    %v1882 = vsub.s32 4294967266, %v1877
    %v1883 = vadd.s32 %v1882, 127
    %v1884 = vshll.u32 %v1883, 23
    %v1885 = vor.u32 4788187, %v1884
    %v1886 = vand.u32 2147483647, %v1885
    %v1888 = vcvt.s32.f32 %v1881
    %v1889 = vmul.f32 %v1888, %v1886
    %v1890 = vxor.u32 %v1889, 2147483648
    %v1891 = vsel %vm1770, %v1890, %v1889
    %v1892 = vsub.s32 4, %v1868
    %v1893 = vsel %vm1770, %v1892, %v1868
    %v1894 = vsel %vm1769, %v682, %v1891
    %v1895 = vsel %vm1769, 0, %v1893
    %v1896 = vmul.f32 %v1894, %v1894
    %v1897 = vmul.f32 %v1896, -0.001358992
    %v1898 = vadd.f32 %v1897, 0.041655596
    %v1899 = vmul.f32 %v1896, %v1898
    %v1900 = vadd.f32 %v1899, -0.4999988
    %v1901 = vmul.f32 %v1896, %v1900
    %v1902 = vadd.f32 1.0, %v1901
    %v1903 = vmul.f32 %v1894, %v1894
    %v1904 = vmul.f32 %v1903, -0.00019511016
    %v1905 = vadd.f32 %v1904, 0.008332121
    %v1906 = vmul.f32 %v1903, %v1905
    %v1907 = vadd.f32 %v1906, -0.16666654
    %v1908 = vmul.f32 %v1903, %v1907
    %v1909 = vadd.f32 %v1908, 1.0
    %v1910 = vmul.f32 %v1909, %v1894
    %vm1911 = vweird.f32 %v682
    %v1912 = vadd.s32 %v1895, 3
    %v1913 = vand.u32 %v1912, 3
    %vm1914 = vcmp.lt.s32.totalorder %v1913, 2
    %vm1915 = vcmp.eq.s32.totalorder %v1913, 0
    %v1916 = vxor.u32 %v1910, 2147483648
    %v1917 = vsel %vm1915, %v1902, %v1916
    %vm1918 = vcmp.eq.s32.totalorder %v1913, 2
    %v1919 = vxor.u32 %v1902, 2147483648
    %v1920 = vsel %vm1918, %v1919, %v1910
    %v1921 = vsel %vm1914, %v1917, %v1920
    %v1922 = vsel %vm1911, nan, %v1921
    %v1923 = vand.u32 2147483647, %v675
    %vm1924 = vcmp.le.f32.partialorder %v1923, 0.7853982
    %vm1925 = vcmp.lt.s32.totalorder %v675, 0
    %v1926 = vand.u32 %v675, 2139095040
    %v1927 = vshrl.u32 %v1926, 23
    %v1928 = vsub.s32 %v1927, 127
    %v1929 = vand.u32 2147483647, %v675
    %v1930 = vand.u32 %v1929, 8388607
    %v1931 = vor.u32 %v1930, 8388608
    %v1932 = vsub.s32 0, %v1931
    %v1933 = vadd.s32 %v1928, 1
    %vm1934 = vcmp.gt.s32.totalorder %v1933, 0
    %v1935 = vsel %vm1934, %v1933, 0
    %v1936 = vshrl.u32 %v1935, 5
    %v1937 = vand.u32 %v1935, 31
    %v1938 = vsub.s32 32, %v1937
    %v1939 = vshrl.u32 683565275, %v1938
    %v1940 = vshll.u32 683565275, %v1937
    %v1941 = vshrl.u32 2475754826, %v1938
    %v1942 = vor.u32 %v1940, %v1941
    %v1943 = vshll.u32 2475754826, %v1937
    %v1944 = vshrl.u32 2131351028, %v1938
    %v1945 = vor.u32 %v1943, %v1944
    %v1946 = vshll.u32 2131351028, %v1937
    %v1947 = vshrl.u32 2102212464, %v1938
    %v1948 = vor.u32 %v1946, %v1947
    %v1949 = vshll.u32 2102212464, %v1937
    %v1950 = vshrl.u32 920167782, %v1938
    %v1951 = vor.u32 %v1949, %v1950
    %v1952 = vshll.u32 920167782, %v1937
    %v1953 = vshrl.u32 1326507024, %v1938
    %v1954 = vor.u32 %v1952, %v1953
    %vm1955 = vcmp.lt.s32.totalorder %v1936, 1
    %vm1956 = vcmp.lt.s32.totalorder %v1936, 2
    %vm1957 = vcmp.lt.s32.totalorder %v1936, 3
    %vm1958 = vcmp.lt.s32.totalorder %v1936, 4
    %v1959 = vsel %vm1955, %v1939, %v1942
    %v1960 = vsel %vm1958, %v1948, 2102212464
    %v1961 = vsel %vm1957, %v1945, %v1960
    %v1962 = vsel %vm1956, %v1959, %v1961
    %v1963 = vsel %vm1955, %v1942, %v1945
    %v1964 = vsel %vm1958, %v1951, 920167782
    %v1965 = vsel %vm1957, %v1948, %v1964
    %v1966 = vsel %vm1956, %v1963, %v1965
    %v1967 = vsel %vm1955, %v1945, %v1948
    %v1968 = vsel %vm1958, %v1954, 1326507024
    %v1969 = vsel %vm1957, %v1951, %v1968
    %v1970 = vsel %vm1956, %v1967, %v1969
    %v1971 = vshll.u32 %v1931, 8
    %v1972 = vand.u32 %v1971, 65535
    %v1973 = vshrl.u32 %v1971, 16
    %v1974 = vand.u32 %v1970, 65535
    %v1975 = vshrl.u32 %v1970, 16
    %v1976 = vmul.u32 %v1972, %v1974
    %v1977 = vmul.u32 %v1972, %v1975
    %v1978 = vmul.u32 %v1973, %v1974
    %v1979 = vmul.u32 %v1973, %v1975
    %v1980 = vshll.u32 %v1977, 16
    %v1981 = vshrl.u32 %v1977, 16
    %v1982 = vshll.u32 %v1978, 16
    %v1983 = vshrl.u32 %v1978, 16
    %vm1984 = vc.u32 %v1976, %v1980
    %v1985 = vsel %vm1984, 1, 0
    %v1986 = vadd.s32 %v1976, %v1980
    %v1987 = vadd.s32 %v1979, %v1985
    %vm1988 = vc.u32 %v1986, %v1982
    %v1989 = vsel %vm1988, 1, 0
    %v1990 = vadd.s32 %v1986, %v1982
    %v1991 = vadd.s32 %v1987, %v1989
    %v1992 = vadd.s32 %v1991, %v1981
    %v1993 = vadd.s32 %v1992, %v1983
    %v1994 = vand.u32 %v1971, 65535
    %v1995 = vshrl.u32 %v1971, 16
    %v1996 = vand.u32 %v1966, 65535
    %v1997 = vshrl.u32 %v1966, 16
    %v1998 = vmul.u32 %v1994, %v1996
    %v1999 = vmul.u32 %v1994, %v1997
    %v2000 = vmul.u32 %v1995, %v1996
    %v2001 = vmul.u32 %v1995, %v1997
    %v2002 = vshll.u32 %v1999, 16
    %v2003 = vshrl.u32 %v1999, 16
    %v2004 = vshll.u32 %v2000, 16
    %v2005 = vshrl.u32 %v2000, 16
    %vm2006 = vc.u32 %v1998, %v2002
    %v2007 = vsel %vm2006, 1, 0
    %v2008 = vadd.s32 %v1998, %v2002
    %v2009 = vadd.s32 %v2001, %v2007
    %vm2010 = vc.u32 %v2008, %v2004
    %v2011 = vsel %vm2010, 1, 0
    %v2012 = vadd.s32 %v2008, %v2004
    %v2013 = vadd.s32 %v2009, %v2011
    %v2014 = vadd.s32 %v2013, %v2003
    %v2015 = vadd.s32 %v2014, %v2005
    %v2016 = vmul.u32 %v1971, %v1962
    %v2017 = vadd.s32 %v1993, %v2012
    %vm2018 = vc.u32 %v1993, %v2012
    %v2019 = vadd.s32 %v2015, 1
    %v2020 = vsel %vm2018, %v2019, %v2015
    %v2021 = vadd.s32 %v2016, %v2020
    %v2022 = vadd.s32 %v2021, 536870912
    %v2023 = vshrl.u32 %v2022, 30
    %v2024 = vshll.u32 %v2023, 30
    %v2025 = vsub.s32 %v2021, %v2024
    %vm2026 = vcmp.lt.s32.totalorder %v2025, 0
    %v2027 = vsub.s32 0, %v2025
    %v2028 = vsel %vm2026, %v2027, %v2025
    %v2029 = vclz %v2028
    %v2030 = vsub.s32 %v2029, 2
    %vm2031 = vcmp.gt.s32.totalorder 0, %v2030
    %v2032 = vsel %vm2031, 0, %v2030
    %v2033 = vsub.s32 32, %v2032
    %v2034 = vshll.u32 %v2025, %v2032
    %v2035 = vshrl.u32 %v2017, %v2033
    %v2036 = vor.u32 %v2034, %v2035
    %v2037 = vsub.s32 4294967266, %v2032
    %v2038 = vadd.s32 %v2037, 127
    %v2039 = vshll.u32 %v2038, 23
    %v2040 = vor.u32 4788187, %v2039
    %v2041 = vand.u32 2147483647, %v2040
    %v2043 = vcvt.s32.f32 %v2036
    %v2044 = vmul.f32 %v2043, %v2041
    %v2045 = vxor.u32 %v2044, 2147483648
    %v2046 = vsel %vm1925, %v2045, %v2044
    %v2047 = vsub.s32 4, %v2023
    %v2048 = vsel %vm1925, %v2047, %v2023
    %v2049 = vsel %vm1924, %v675, %v2046
    %v2050 = vsel %vm1924, 0, %v2048
    %v2051 = vmul.f32 %v2049, %v2049
    %v2052 = vmul.f32 %v2051, -0.001358992
    %v2053 = vadd.f32 %v2052, 0.041655596
    %v2054 = vmul.f32 %v2051, %v2053
    %v2055 = vadd.f32 %v2054, -0.4999988
    %v2056 = vmul.f32 %v2051, %v2055
    %v2057 = vadd.f32 1.0, %v2056
    %v2058 = vmul.f32 %v2049, %v2049
    %v2059 = vmul.f32 %v2058, -0.00019511016
    %v2060 = vadd.f32 %v2059, 0.008332121
    %v2061 = vmul.f32 %v2058, %v2060
    %v2062 = vadd.f32 %v2061, -0.16666654
    %v2063 = vmul.f32 %v2058, %v2062
    %v2064 = vadd.f32 %v2063, 1.0
    %v2065 = vmul.f32 %v2064, %v2049
    %vm2066 = vweird.f32 %v675
    %v2067 = vand.u32 %v2050, 3
    %vm2068 = vcmp.lt.s32.totalorder %v2067, 2
    %vm2069 = vcmp.eq.s32.totalorder %v2067, 0
    %v2070 = vxor.u32 %v2065, 2147483648
    %v2071 = vsel %vm2069, %v2057, %v2070
    %vm2072 = vcmp.eq.s32.totalorder %v2067, 2
    %v2073 = vxor.u32 %v2057, 2147483648
    %v2074 = vsel %vm2072, %v2073, %v2065
    %v2075 = vsel %vm2068, %v2071, %v2074
    %v2076 = vsel %vm2066, nan, %v2075
    %v2077 = vand.u32 2147483647, %v676
    %vm2078 = vcmp.le.f32.partialorder %v2077, 0.7853982
    %vm2079 = vcmp.lt.s32.totalorder %v676, 0
    %v2080 = vand.u32 %v676, 2139095040
    %v2081 = vshrl.u32 %v2080, 23
    %v2082 = vsub.s32 %v2081, 127
    %v2083 = vand.u32 2147483647, %v676
    %v2084 = vand.u32 %v2083, 8388607
    %v2085 = vor.u32 %v2084, 8388608
    %v2086 = vsub.s32 0, %v2085
    %v2087 = vadd.s32 %v2082, 1
    %vm2088 = vcmp.gt.s32.totalorder %v2087, 0
    %v2089 = vsel %vm2088, %v2087, 0
    %v2090 = vshrl.u32 %v2089, 5
    %v2091 = vand.u32 %v2089, 31
    %v2092 = vsub.s32 32, %v2091
    %v2093 = vshrl.u32 683565275, %v2092
    %v2094 = vshll.u32 683565275, %v2091
    %v2095 = vshrl.u32 2475754826, %v2092
    %v2096 = vor.u32 %v2094, %v2095
    %v2097 = vshll.u32 2475754826, %v2091
    %v2098 = vshrl.u32 2131351028, %v2092
    %v2099 = vor.u32 %v2097, %v2098
    %v2100 = vshll.u32 2131351028, %v2091
    %v2101 = vshrl.u32 2102212464, %v2092
    %v2102 = vor.u32 %v2100, %v2101
    %v2103 = vshll.u32 2102212464, %v2091
    %v2104 = vshrl.u32 920167782, %v2092
    %v2105 = vor.u32 %v2103, %v2104
    %v2106 = vshll.u32 920167782, %v2091
    %v2107 = vshrl.u32 1326507024, %v2092
    %v2108 = vor.u32 %v2106, %v2107
    %vm2109 = vcmp.lt.s32.totalorder %v2090, 1
    %vm2110 = vcmp.lt.s32.totalorder %v2090, 2
    %vm2111 = vcmp.lt.s32.totalorder %v2090, 3
    %vm2112 = vcmp.lt.s32.totalorder %v2090, 4
    %v2113 = vsel %vm2109, %v2093, %v2096
    %v2114 = vsel %vm2112, %v2102, 2102212464
    %v2115 = vsel %vm2111, %v2099, %v2114
    %v2116 = vsel %vm2110, %v2113, %v2115
    %v2117 = vsel %vm2109, %v2096, %v2099
    %v2118 = vsel %vm2112, %v2105, 920167782
    %v2119 = vsel %vm2111, %v2102, %v2118
    %v2120 = vsel %vm2110, %v2117, %v2119
    %v2121 = vsel %vm2109, %v2099, %v2102
    %v2122 = vsel %vm2112, %v2108, 1326507024
    %v2123 = vsel %vm2111, %v2105, %v2122
    %v2124 = vsel %vm2110, %v2121, %v2123
    %v2125 = vshll.u32 %v2085, 8
    %v2126 = vand.u32 %v2125, 65535
    %v2127 = vshrl.u32 %v2125, 16
    %v2128 = vand.u32 %v2124, 65535
    %v2129 = vshrl.u32 %v2124, 16
    %v2130 = vmul.u32 %v2126, %v2128
    %v2131 = vmul.u32 %v2126, %v2129
    %v2132 = vmul.u32 %v2127, %v2128
    %v2133 = vmul.u32 %v2127, %v2129
    %v2134 = vshll.u32 %v2131, 16
    %v2135 = vshrl.u32 %v2131, 16
    %v2136 = vshll.u32 %v2132, 16
    %v2137 = vshrl.u32 %v2132, 16
    %vm2138 = vc.u32 %v2130, %v2134
    %v2139 = vsel %vm2138, 1, 0
    %v2140 = vadd.s32 %v2130, %v2134
    %v2141 = vadd.s32 %v2133, %v2139
    %vm2142 = vc.u32 %v2140, %v2136
    %v2143 = vsel %vm2142, 1, 0
    %v2144 = vadd.s32 %v2140, %v2136
    %v2145 = vadd.s32 %v2141, %v2143
    %v2146 = vadd.s32 %v2145, %v2135
    %v2147 = vadd.s32 %v2146, %v2137
    %v2148 = vand.u32 %v2125, 65535
    %v2149 = vshrl.u32 %v2125, 16
    %v2150 = vand.u32 %v2120, 65535
    %v2151 = vshrl.u32 %v2120, 16
    %v2152 = vmul.u32 %v2148, %v2150
    %v2153 = vmul.u32 %v2148, %v2151
    %v2154 = vmul.u32 %v2149, %v2150
    %v2155 = vmul.u32 %v2149, %v2151
    %v2156 = vshll.u32 %v2153, 16
    %v2157 = vshrl.u32 %v2153, 16
    %v2158 = vshll.u32 %v2154, 16
    %v2159 = vshrl.u32 %v2154, 16
    %vm2160 = vc.u32 %v2152, %v2156
    %v2161 = vsel %vm2160, 1, 0
    %v2162 = vadd.s32 %v2152, %v2156
    %v2163 = vadd.s32 %v2155, %v2161
    %vm2164 = vc.u32 %v2162, %v2158
    %v2165 = vsel %vm2164, 1, 0
    %v2166 = vadd.s32 %v2162, %v2158
    %v2167 = vadd.s32 %v2163, %v2165
    %v2168 = vadd.s32 %v2167, %v2157
    %v2169 = vadd.s32 %v2168, %v2159
    %v2170 = vmul.u32 %v2125, %v2116
    %v2171 = vadd.s32 %v2147, %v2166
    %vm2172 = vc.u32 %v2147, %v2166
    %v2173 = vadd.s32 %v2169, 1
    %v2174 = vsel %vm2172, %v2173, %v2169
    %v2175 = vadd.s32 %v2170, %v2174
    %v2176 = vadd.s32 %v2175, 536870912
    %v2177 = vshrl.u32 %v2176, 30
    %v2178 = vshll.u32 %v2177, 30
    %v2179 = vsub.s32 %v2175, %v2178
    %vm2180 = vcmp.lt.s32.totalorder %v2179, 0
    %v2181 = vsub.s32 0, %v2179
    %v2182 = vsel %vm2180, %v2181, %v2179
    %v2183 = vclz %v2182
    %v2184 = vsub.s32 %v2183, 2
    %vm2185 = vcmp.gt.s32.totalorder 0, %v2184
    %v2186 = vsel %vm2185, 0, %v2184
    %v2187 = vsub.s32 32, %v2186
    %v2188 = vshll.u32 %v2179, %v2186
    %v2189 = vshrl.u32 %v2171, %v2187
    %v2190 = vor.u32 %v2188, %v2189
    %v2191 = vsub.s32 4294967266, %v2186
    %v2192 = vadd.s32 %v2191, 127
    %v2193 = vshll.u32 %v2192, 23
    %v2194 = vor.u32 4788187, %v2193
    %v2195 = vand.u32 2147483647, %v2194
    %v2197 = vcvt.s32.f32 %v2190
    %v2198 = vmul.f32 %v2197, %v2195
    %v2199 = vxor.u32 %v2198, 2147483648
    %v2200 = vsel %vm2079, %v2199, %v2198
    %v2201 = vsub.s32 4, %v2177
    %v2202 = vsel %vm2079, %v2201, %v2177
    %v2203 = vsel %vm2078, %v676, %v2200
    %v2204 = vsel %vm2078, 0, %v2202
    %v2205 = vmul.f32 %v2203, %v2203
    %v2206 = vmul.f32 %v2205, -0.001358992
    %v2207 = vadd.f32 %v2206, 0.041655596
    %v2208 = vmul.f32 %v2205, %v2207
    %v2209 = vadd.f32 %v2208, -0.4999988
    %v2210 = vmul.f32 %v2205, %v2209
    %v2211 = vadd.f32 1.0, %v2210
    %v2212 = vmul.f32 %v2203, %v2203
    %v2213 = vmul.f32 %v2212, -0.00019511016
    %v2214 = vadd.f32 %v2213, 0.008332121
    %v2215 = vmul.f32 %v2212, %v2214
    %v2216 = vadd.f32 %v2215, -0.16666654
    %v2217 = vmul.f32 %v2212, %v2216
    %v2218 = vadd.f32 %v2217, 1.0
    %v2219 = vmul.f32 %v2218, %v2203
    %vm2220 = vweird.f32 %v676
    %v2221 = vand.u32 %v2204, 3
    %vm2222 = vcmp.lt.s32.totalorder %v2221, 2
    %vm2223 = vcmp.eq.s32.totalorder %v2221, 0
    %v2224 = vxor.u32 %v2219, 2147483648
    %v2225 = vsel %vm2223, %v2211, %v2224
    %vm2226 = vcmp.eq.s32.totalorder %v2221, 2
    %v2227 = vxor.u32 %v2211, 2147483648
    %v2228 = vsel %vm2226, %v2227, %v2219
    %v2229 = vsel %vm2222, %v2225, %v2228
    %v2230 = vsel %vm2220, nan, %v2229
    %v2231 = vand.u32 2147483647, %v677
    %vm2232 = vcmp.le.f32.partialorder %v2231, 0.7853982
    %vm2233 = vcmp.lt.s32.totalorder %v677, 0
    %v2234 = vand.u32 %v677, 2139095040
    %v2235 = vshrl.u32 %v2234, 23
    %v2236 = vsub.s32 %v2235, 127
    %v2237 = vand.u32 2147483647, %v677
    %v2238 = vand.u32 %v2237, 8388607
    %v2239 = vor.u32 %v2238, 8388608
    %v2240 = vsub.s32 0, %v2239
    %v2241 = vadd.s32 %v2236, 1
    %vm2242 = vcmp.gt.s32.totalorder %v2241, 0
    %v2243 = vsel %vm2242, %v2241, 0
    %v2244 = vshrl.u32 %v2243, 5
    %v2245 = vand.u32 %v2243, 31
    %v2246 = vsub.s32 32, %v2245
    %v2247 = vshrl.u32 683565275, %v2246
    %v2248 = vshll.u32 683565275, %v2245
    %v2249 = vshrl.u32 2475754826, %v2246
    %v2250 = vor.u32 %v2248, %v2249
    %v2251 = vshll.u32 2475754826, %v2245
    %v2252 = vshrl.u32 2131351028, %v2246
    %v2253 = vor.u32 %v2251, %v2252
    %v2254 = vshll.u32 2131351028, %v2245
    %v2255 = vshrl.u32 2102212464, %v2246
    %v2256 = vor.u32 %v2254, %v2255
    %v2257 = vshll.u32 2102212464, %v2245
    %v2258 = vshrl.u32 920167782, %v2246
    %v2259 = vor.u32 %v2257, %v2258
    %v2260 = vshll.u32 920167782, %v2245
    %v2261 = vshrl.u32 1326507024, %v2246
    %v2262 = vor.u32 %v2260, %v2261
    %vm2263 = vcmp.lt.s32.totalorder %v2244, 1
    %vm2264 = vcmp.lt.s32.totalorder %v2244, 2
    %vm2265 = vcmp.lt.s32.totalorder %v2244, 3
    %vm2266 = vcmp.lt.s32.totalorder %v2244, 4
    %v2267 = vsel %vm2263, %v2247, %v2250
    %v2268 = vsel %vm2266, %v2256, 2102212464
    %v2269 = vsel %vm2265, %v2253, %v2268
    %v2270 = vsel %vm2264, %v2267, %v2269
    %v2271 = vsel %vm2263, %v2250, %v2253
    %v2272 = vsel %vm2266, %v2259, 920167782
    %v2273 = vsel %vm2265, %v2256, %v2272
    %v2274 = vsel %vm2264, %v2271, %v2273
    %v2275 = vsel %vm2263, %v2253, %v2256
    %v2276 = vsel %vm2266, %v2262, 1326507024
    %v2277 = vsel %vm2265, %v2259, %v2276
    %v2278 = vsel %vm2264, %v2275, %v2277
    %v2279 = vshll.u32 %v2239, 8
    %v2280 = vand.u32 %v2279, 65535
    %v2281 = vshrl.u32 %v2279, 16
    %v2282 = vand.u32 %v2278, 65535
    %v2283 = vshrl.u32 %v2278, 16
    %v2284 = vmul.u32 %v2280, %v2282
    %v2285 = vmul.u32 %v2280, %v2283
    %v2286 = vmul.u32 %v2281, %v2282
    %v2287 = vmul.u32 %v2281, %v2283
    %v2288 = vshll.u32 %v2285, 16
    %v2289 = vshrl.u32 %v2285, 16
    %v2290 = vshll.u32 %v2286, 16
    %v2291 = vshrl.u32 %v2286, 16
    %vm2292 = vc.u32 %v2284, %v2288
    %v2293 = vsel %vm2292, 1, 0
    %v2294 = vadd.s32 %v2284, %v2288
    %v2295 = vadd.s32 %v2287, %v2293
    %vm2296 = vc.u32 %v2294, %v2290
    %v2297 = vsel %vm2296, 1, 0
    %v2298 = vadd.s32 %v2294, %v2290
    %v2299 = vadd.s32 %v2295, %v2297
    %v2300 = vadd.s32 %v2299, %v2289
    %v2301 = vadd.s32 %v2300, %v2291
    %v2302 = vand.u32 %v2279, 65535
    %v2303 = vshrl.u32 %v2279, 16
    %v2304 = vand.u32 %v2274, 65535
    %v2305 = vshrl.u32 %v2274, 16
    %v2306 = vmul.u32 %v2302, %v2304
    %v2307 = vmul.u32 %v2302, %v2305
    %v2308 = vmul.u32 %v2303, %v2304
    %v2309 = vmul.u32 %v2303, %v2305
    %v2310 = vshll.u32 %v2307, 16
    %v2311 = vshrl.u32 %v2307, 16
    %v2312 = vshll.u32 %v2308, 16
    %v2313 = vshrl.u32 %v2308, 16
    %vm2314 = vc.u32 %v2306, %v2310
    %v2315 = vsel %vm2314, 1, 0
    %v2316 = vadd.s32 %v2306, %v2310
    %v2317 = vadd.s32 %v2309, %v2315
    %vm2318 = vc.u32 %v2316, %v2312
    %v2319 = vsel %vm2318, 1, 0
    %v2320 = vadd.s32 %v2316, %v2312
    %v2321 = vadd.s32 %v2317, %v2319
    %v2322 = vadd.s32 %v2321, %v2311
    %v2323 = vadd.s32 %v2322, %v2313
    %v2324 = vmul.u32 %v2279, %v2270
    %v2325 = vadd.s32 %v2301, %v2320
    %vm2326 = vc.u32 %v2301, %v2320
    %v2327 = vadd.s32 %v2323, 1
    %v2328 = vsel %vm2326, %v2327, %v2323
    %v2329 = vadd.s32 %v2324, %v2328
    %v2330 = vadd.s32 %v2329, 536870912
    %v2331 = vshrl.u32 %v2330, 30
    %v2332 = vshll.u32 %v2331, 30
    %v2333 = vsub.s32 %v2329, %v2332
    %vm2334 = vcmp.lt.s32.totalorder %v2333, 0
    %v2335 = vsub.s32 0, %v2333
    %v2336 = vsel %vm2334, %v2335, %v2333
    %v2337 = vclz %v2336
    %v2338 = vsub.s32 %v2337, 2
    %vm2339 = vcmp.gt.s32.totalorder 0, %v2338
    %v2340 = vsel %vm2339, 0, %v2338
    %v2341 = vsub.s32 32, %v2340
    %v2342 = vshll.u32 %v2333, %v2340
    %v2343 = vshrl.u32 %v2325, %v2341
    %v2344 = vor.u32 %v2342, %v2343
    %v2345 = vsub.s32 4294967266, %v2340
    %v2346 = vadd.s32 %v2345, 127
    %v2347 = vshll.u32 %v2346, 23
    %v2348 = vor.u32 4788187, %v2347
    %v2349 = vand.u32 2147483647, %v2348
    %v2351 = vcvt.s32.f32 %v2344
    %v2352 = vmul.f32 %v2351, %v2349
    %v2353 = vxor.u32 %v2352, 2147483648
    %v2354 = vsel %vm2233, %v2353, %v2352
    %v2355 = vsub.s32 4, %v2331
    %v2356 = vsel %vm2233, %v2355, %v2331
    %v2357 = vsel %vm2232, %v677, %v2354
    %v2358 = vsel %vm2232, 0, %v2356
    %v2359 = vmul.f32 %v2357, %v2357
    %v2360 = vmul.f32 %v2359, -0.001358992
    %v2361 = vadd.f32 %v2360, 0.041655596
    %v2362 = vmul.f32 %v2359, %v2361
    %v2363 = vadd.f32 %v2362, -0.4999988
    %v2364 = vmul.f32 %v2359, %v2363
    %v2365 = vadd.f32 1.0, %v2364
    %v2366 = vmul.f32 %v2357, %v2357
    %v2367 = vmul.f32 %v2366, -0.00019511016
    %v2368 = vadd.f32 %v2367, 0.008332121
    %v2369 = vmul.f32 %v2366, %v2368
    %v2370 = vadd.f32 %v2369, -0.16666654
    %v2371 = vmul.f32 %v2366, %v2370
    %v2372 = vadd.f32 %v2371, 1.0
    %v2373 = vmul.f32 %v2372, %v2357
    %vm2374 = vweird.f32 %v677
    %v2375 = vand.u32 %v2358, 3
    %vm2376 = vcmp.lt.s32.totalorder %v2375, 2
    %vm2377 = vcmp.eq.s32.totalorder %v2375, 0
    %v2378 = vxor.u32 %v2373, 2147483648
    %v2379 = vsel %vm2377, %v2365, %v2378
    %vm2380 = vcmp.eq.s32.totalorder %v2375, 2
    %v2381 = vxor.u32 %v2365, 2147483648
    %v2382 = vsel %vm2380, %v2381, %v2373
    %v2383 = vsel %vm2376, %v2379, %v2382
    %v2384 = vsel %vm2374, nan, %v2383
    %v2385 = vand.u32 2147483647, %v678
    %vm2386 = vcmp.le.f32.partialorder %v2385, 0.7853982
    %vm2387 = vcmp.lt.s32.totalorder %v678, 0
    %v2388 = vand.u32 %v678, 2139095040
    %v2389 = vshrl.u32 %v2388, 23
    %v2390 = vsub.s32 %v2389, 127
    %v2391 = vand.u32 2147483647, %v678
    %v2392 = vand.u32 %v2391, 8388607
    %v2393 = vor.u32 %v2392, 8388608
    %v2394 = vsub.s32 0, %v2393
    %v2395 = vadd.s32 %v2390, 1
    %vm2396 = vcmp.gt.s32.totalorder %v2395, 0
    %v2397 = vsel %vm2396, %v2395, 0
    %v2398 = vshrl.u32 %v2397, 5
    %v2399 = vand.u32 %v2397, 31
    %v2400 = vsub.s32 32, %v2399
    %v2401 = vshrl.u32 683565275, %v2400
    %v2402 = vshll.u32 683565275, %v2399
    %v2403 = vshrl.u32 2475754826, %v2400
    %v2404 = vor.u32 %v2402, %v2403
    %v2405 = vshll.u32 2475754826, %v2399
    %v2406 = vshrl.u32 2131351028, %v2400
    %v2407 = vor.u32 %v2405, %v2406
    %v2408 = vshll.u32 2131351028, %v2399
    %v2409 = vshrl.u32 2102212464, %v2400
    %v2410 = vor.u32 %v2408, %v2409
    %v2411 = vshll.u32 2102212464, %v2399
    %v2412 = vshrl.u32 920167782, %v2400
    %v2413 = vor.u32 %v2411, %v2412
    %v2414 = vshll.u32 920167782, %v2399
    %v2415 = vshrl.u32 1326507024, %v2400
    %v2416 = vor.u32 %v2414, %v2415
    %vm2417 = vcmp.lt.s32.totalorder %v2398, 1
    %vm2418 = vcmp.lt.s32.totalorder %v2398, 2
    %vm2419 = vcmp.lt.s32.totalorder %v2398, 3
    %vm2420 = vcmp.lt.s32.totalorder %v2398, 4
    %v2421 = vsel %vm2417, %v2401, %v2404
    %v2422 = vsel %vm2420, %v2410, 2102212464
    %v2423 = vsel %vm2419, %v2407, %v2422
    %v2424 = vsel %vm2418, %v2421, %v2423
    %v2425 = vsel %vm2417, %v2404, %v2407
    %v2426 = vsel %vm2420, %v2413, 920167782
    %v2427 = vsel %vm2419, %v2410, %v2426
    %v2428 = vsel %vm2418, %v2425, %v2427
    %v2429 = vsel %vm2417, %v2407, %v2410
    %v2430 = vsel %vm2420, %v2416, 1326507024
    %v2431 = vsel %vm2419, %v2413, %v2430
    %v2432 = vsel %vm2418, %v2429, %v2431
    %v2433 = vshll.u32 %v2393, 8
    %v2434 = vand.u32 %v2433, 65535
    %v2435 = vshrl.u32 %v2433, 16
    %v2436 = vand.u32 %v2432, 65535
    %v2437 = vshrl.u32 %v2432, 16
    %v2438 = vmul.u32 %v2434, %v2436
    %v2439 = vmul.u32 %v2434, %v2437
    %v2440 = vmul.u32 %v2435, %v2436
    %v2441 = vmul.u32 %v2435, %v2437
    %v2442 = vshll.u32 %v2439, 16
    %v2443 = vshrl.u32 %v2439, 16
    %v2444 = vshll.u32 %v2440, 16
    %v2445 = vshrl.u32 %v2440, 16
    %vm2446 = vc.u32 %v2438, %v2442
    %v2447 = vsel %vm2446, 1, 0
    %v2448 = vadd.s32 %v2438, %v2442
    %v2449 = vadd.s32 %v2441, %v2447
    %vm2450 = vc.u32 %v2448, %v2444
    %v2451 = vsel %vm2450, 1, 0
    %v2452 = vadd.s32 %v2448, %v2444
    %v2453 = vadd.s32 %v2449, %v2451
    %v2454 = vadd.s32 %v2453, %v2443
    %v2455 = vadd.s32 %v2454, %v2445
    %v2456 = vand.u32 %v2433, 65535
    %v2457 = vshrl.u32 %v2433, 16
    %v2458 = vand.u32 %v2428, 65535
    %v2459 = vshrl.u32 %v2428, 16
    %v2460 = vmul.u32 %v2456, %v2458
    %v2461 = vmul.u32 %v2456, %v2459
    %v2462 = vmul.u32 %v2457, %v2458
    %v2463 = vmul.u32 %v2457, %v2459
    %v2464 = vshll.u32 %v2461, 16
    %v2465 = vshrl.u32 %v2461, 16
    %v2466 = vshll.u32 %v2462, 16
    %v2467 = vshrl.u32 %v2462, 16
    %vm2468 = vc.u32 %v2460, %v2464
    %v2469 = vsel %vm2468, 1, 0
    %v2470 = vadd.s32 %v2460, %v2464
    %v2471 = vadd.s32 %v2463, %v2469
    %vm2472 = vc.u32 %v2470, %v2466
    %v2473 = vsel %vm2472, 1, 0
    %v2474 = vadd.s32 %v2470, %v2466
    %v2475 = vadd.s32 %v2471, %v2473
    %v2476 = vadd.s32 %v2475, %v2465
    %v2477 = vadd.s32 %v2476, %v2467
    %v2478 = vmul.u32 %v2433, %v2424
    %v2479 = vadd.s32 %v2455, %v2474
    %vm2480 = vc.u32 %v2455, %v2474
    %v2481 = vadd.s32 %v2477, 1
    %v2482 = vsel %vm2480, %v2481, %v2477
    %v2483 = vadd.s32 %v2478, %v2482
    %v2484 = vadd.s32 %v2483, 536870912
    %v2485 = vshrl.u32 %v2484, 30
    %v2486 = vshll.u32 %v2485, 30
    %v2487 = vsub.s32 %v2483, %v2486
    %vm2488 = vcmp.lt.s32.totalorder %v2487, 0
    %v2489 = vsub.s32 0, %v2487
    %v2490 = vsel %vm2488, %v2489, %v2487
    %v2491 = vclz %v2490
    %v2492 = vsub.s32 %v2491, 2
    %vm2493 = vcmp.gt.s32.totalorder 0, %v2492
    %v2494 = vsel %vm2493, 0, %v2492
    %v2495 = vsub.s32 32, %v2494
    %v2496 = vshll.u32 %v2487, %v2494
    %v2497 = vshrl.u32 %v2479, %v2495
    %v2498 = vor.u32 %v2496, %v2497
    %v2499 = vsub.s32 4294967266, %v2494
    %v2500 = vadd.s32 %v2499, 127
    %v2501 = vshll.u32 %v2500, 23
    %v2502 = vor.u32 4788187, %v2501
    %v2503 = vand.u32 2147483647, %v2502
    %v2505 = vcvt.s32.f32 %v2498
    %v2506 = vmul.f32 %v2505, %v2503
    %v2507 = vxor.u32 %v2506, 2147483648
    %v2508 = vsel %vm2387, %v2507, %v2506
    %v2509 = vsub.s32 4, %v2485
    %v2510 = vsel %vm2387, %v2509, %v2485
    %v2511 = vsel %vm2386, %v678, %v2508
    %v2512 = vsel %vm2386, 0, %v2510
    %v2513 = vmul.f32 %v2511, %v2511
    %v2514 = vmul.f32 %v2513, -0.001358992
    %v2515 = vadd.f32 %v2514, 0.041655596
    %v2516 = vmul.f32 %v2513, %v2515
    %v2517 = vadd.f32 %v2516, -0.4999988
    %v2518 = vmul.f32 %v2513, %v2517
    %v2519 = vadd.f32 1.0, %v2518
    %v2520 = vmul.f32 %v2511, %v2511
    %v2521 = vmul.f32 %v2520, -0.00019511016
    %v2522 = vadd.f32 %v2521, 0.008332121
    %v2523 = vmul.f32 %v2520, %v2522
    %v2524 = vadd.f32 %v2523, -0.16666654
    %v2525 = vmul.f32 %v2520, %v2524
    %v2526 = vadd.f32 %v2525, 1.0
    %v2527 = vmul.f32 %v2526, %v2511
    %vm2528 = vweird.f32 %v678
    %v2529 = vand.u32 %v2512, 3
    %vm2530 = vcmp.lt.s32.totalorder %v2529, 2
    %vm2531 = vcmp.eq.s32.totalorder %v2529, 0
    %v2532 = vxor.u32 %v2527, 2147483648
    %v2533 = vsel %vm2531, %v2519, %v2532
    %vm2534 = vcmp.eq.s32.totalorder %v2529, 2
    %v2535 = vxor.u32 %v2519, 2147483648
    %v2536 = vsel %vm2534, %v2535, %v2527
    %v2537 = vsel %vm2530, %v2533, %v2536
    %v2538 = vsel %vm2528, nan, %v2537
    %v2539 = vand.u32 2147483647, %v679
    %vm2540 = vcmp.le.f32.partialorder %v2539, 0.7853982
    %vm2541 = vcmp.lt.s32.totalorder %v679, 0
    %v2542 = vand.u32 %v679, 2139095040
    %v2543 = vshrl.u32 %v2542, 23
    %v2544 = vsub.s32 %v2543, 127
    %v2545 = vand.u32 2147483647, %v679
    %v2546 = vand.u32 %v2545, 8388607
    %v2547 = vor.u32 %v2546, 8388608
    %v2548 = vsub.s32 0, %v2547
    %v2549 = vadd.s32 %v2544, 1
    %vm2550 = vcmp.gt.s32.totalorder %v2549, 0
    %v2551 = vsel %vm2550, %v2549, 0
    %v2552 = vshrl.u32 %v2551, 5
    %v2553 = vand.u32 %v2551, 31
    %v2554 = vsub.s32 32, %v2553
    %v2555 = vshrl.u32 683565275, %v2554
    %v2556 = vshll.u32 683565275, %v2553
    %v2557 = vshrl.u32 2475754826, %v2554
    %v2558 = vor.u32 %v2556, %v2557
    %v2559 = vshll.u32 2475754826, %v2553
    %v2560 = vshrl.u32 2131351028, %v2554
    %v2561 = vor.u32 %v2559, %v2560
    %v2562 = vshll.u32 2131351028, %v2553
    %v2563 = vshrl.u32 2102212464, %v2554
    %v2564 = vor.u32 %v2562, %v2563
    %v2565 = vshll.u32 2102212464, %v2553
    %v2566 = vshrl.u32 920167782, %v2554
    %v2567 = vor.u32 %v2565, %v2566
    %v2568 = vshll.u32 920167782, %v2553
    %v2569 = vshrl.u32 1326507024, %v2554
    %v2570 = vor.u32 %v2568, %v2569
    %vm2571 = vcmp.lt.s32.totalorder %v2552, 1
    %vm2572 = vcmp.lt.s32.totalorder %v2552, 2
    %vm2573 = vcmp.lt.s32.totalorder %v2552, 3
    %vm2574 = vcmp.lt.s32.totalorder %v2552, 4
    %v2575 = vsel %vm2571, %v2555, %v2558
    %v2576 = vsel %vm2574, %v2564, 2102212464
    %v2577 = vsel %vm2573, %v2561, %v2576
    %v2578 = vsel %vm2572, %v2575, %v2577
    %v2579 = vsel %vm2571, %v2558, %v2561
    %v2580 = vsel %vm2574, %v2567, 920167782
    %v2581 = vsel %vm2573, %v2564, %v2580
    %v2582 = vsel %vm2572, %v2579, %v2581
    %v2583 = vsel %vm2571, %v2561, %v2564
    %v2584 = vsel %vm2574, %v2570, 1326507024
    %v2585 = vsel %vm2573, %v2567, %v2584
    %v2586 = vsel %vm2572, %v2583, %v2585
    %v2587 = vshll.u32 %v2547, 8
    %v2588 = vand.u32 %v2587, 65535
    %v2589 = vshrl.u32 %v2587, 16
    %v2590 = vand.u32 %v2586, 65535
    %v2591 = vshrl.u32 %v2586, 16
    %v2592 = vmul.u32 %v2588, %v2590
    %v2593 = vmul.u32 %v2588, %v2591
    %v2594 = vmul.u32 %v2589, %v2590
    %v2595 = vmul.u32 %v2589, %v2591
    %v2596 = vshll.u32 %v2593, 16
    %v2597 = vshrl.u32 %v2593, 16
    %v2598 = vshll.u32 %v2594, 16
    %v2599 = vshrl.u32 %v2594, 16
    %vm2600 = vc.u32 %v2592, %v2596
    %v2601 = vsel %vm2600, 1, 0
    %v2602 = vadd.s32 %v2592, %v2596
    %v2603 = vadd.s32 %v2595, %v2601
    %vm2604 = vc.u32 %v2602, %v2598
    %v2605 = vsel %vm2604, 1, 0
    %v2606 = vadd.s32 %v2602, %v2598
    %v2607 = vadd.s32 %v2603, %v2605
    %v2608 = vadd.s32 %v2607, %v2597
    %v2609 = vadd.s32 %v2608, %v2599
    %v2610 = vand.u32 %v2587, 65535
    %v2611 = vshrl.u32 %v2587, 16
    %v2612 = vand.u32 %v2582, 65535
    %v2613 = vshrl.u32 %v2582, 16
    %v2614 = vmul.u32 %v2610, %v2612
    %v2615 = vmul.u32 %v2610, %v2613
    %v2616 = vmul.u32 %v2611, %v2612
    %v2617 = vmul.u32 %v2611, %v2613
    %v2618 = vshll.u32 %v2615, 16
    %v2619 = vshrl.u32 %v2615, 16
    %v2620 = vshll.u32 %v2616, 16
    %v2621 = vshrl.u32 %v2616, 16
    %vm2622 = vc.u32 %v2614, %v2618
    %v2623 = vsel %vm2622, 1, 0
    %v2624 = vadd.s32 %v2614, %v2618
    %v2625 = vadd.s32 %v2617, %v2623
    %vm2626 = vc.u32 %v2624, %v2620
    %v2627 = vsel %vm2626, 1, 0
    %v2628 = vadd.s32 %v2624, %v2620
    %v2629 = vadd.s32 %v2625, %v2627
    %v2630 = vadd.s32 %v2629, %v2619
    %v2631 = vadd.s32 %v2630, %v2621
    %v2632 = vmul.u32 %v2587, %v2578
    %v2633 = vadd.s32 %v2609, %v2628
    %vm2634 = vc.u32 %v2609, %v2628
    %v2635 = vadd.s32 %v2631, 1
    %v2636 = vsel %vm2634, %v2635, %v2631
    %v2637 = vadd.s32 %v2632, %v2636
    %v2638 = vadd.s32 %v2637, 536870912
    %v2639 = vshrl.u32 %v2638, 30
    %v2640 = vshll.u32 %v2639, 30
    %v2641 = vsub.s32 %v2637, %v2640
    %vm2642 = vcmp.lt.s32.totalorder %v2641, 0
    %v2643 = vsub.s32 0, %v2641
    %v2644 = vsel %vm2642, %v2643, %v2641
    %v2645 = vclz %v2644
    %v2646 = vsub.s32 %v2645, 2
    %vm2647 = vcmp.gt.s32.totalorder 0, %v2646
    %v2648 = vsel %vm2647, 0, %v2646
    %v2649 = vsub.s32 32, %v2648
    %v2650 = vshll.u32 %v2641, %v2648
    %v2651 = vshrl.u32 %v2633, %v2649
    %v2652 = vor.u32 %v2650, %v2651
    %v2653 = vsub.s32 4294967266, %v2648
    %v2654 = vadd.s32 %v2653, 127
    %v2655 = vshll.u32 %v2654, 23
    %v2656 = vor.u32 4788187, %v2655
    %v2657 = vand.u32 2147483647, %v2656
    %v2659 = vcvt.s32.f32 %v2652
    %v2660 = vmul.f32 %v2659, %v2657
    %v2661 = vxor.u32 %v2660, 2147483648
    %v2662 = vsel %vm2541, %v2661, %v2660
    %v2663 = vsub.s32 4, %v2639
    %v2664 = vsel %vm2541, %v2663, %v2639
    %v2665 = vsel %vm2540, %v679, %v2662
    %v2666 = vsel %vm2540, 0, %v2664
    %v2667 = vmul.f32 %v2665, %v2665
    %v2668 = vmul.f32 %v2667, -0.001358992
    %v2669 = vadd.f32 %v2668, 0.041655596
    %v2670 = vmul.f32 %v2667, %v2669
    %v2671 = vadd.f32 %v2670, -0.4999988
    %v2672 = vmul.f32 %v2667, %v2671
    %v2673 = vadd.f32 1.0, %v2672
    %v2674 = vmul.f32 %v2665, %v2665
    %v2675 = vmul.f32 %v2674, -0.00019511016
    %v2676 = vadd.f32 %v2675, 0.008332121
    %v2677 = vmul.f32 %v2674, %v2676
    %v2678 = vadd.f32 %v2677, -0.16666654
    %v2679 = vmul.f32 %v2674, %v2678
    %v2680 = vadd.f32 %v2679, 1.0
    %v2681 = vmul.f32 %v2680, %v2665
    %vm2682 = vweird.f32 %v679
    %v2683 = vand.u32 %v2666, 3
    %vm2684 = vcmp.lt.s32.totalorder %v2683, 2
    %vm2685 = vcmp.eq.s32.totalorder %v2683, 0
    %v2686 = vxor.u32 %v2681, 2147483648
    %v2687 = vsel %vm2685, %v2673, %v2686
    %vm2688 = vcmp.eq.s32.totalorder %v2683, 2
    %v2689 = vxor.u32 %v2673, 2147483648
    %v2690 = vsel %vm2688, %v2689, %v2681
    %v2691 = vsel %vm2684, %v2687, %v2690
    %v2692 = vsel %vm2682, nan, %v2691
    %v2693 = vand.u32 2147483647, %v680
    %vm2694 = vcmp.le.f32.partialorder %v2693, 0.7853982
    %vm2695 = vcmp.lt.s32.totalorder %v680, 0
    %v2696 = vand.u32 %v680, 2139095040
    %v2697 = vshrl.u32 %v2696, 23
    %v2698 = vsub.s32 %v2697, 127
    %v2699 = vand.u32 2147483647, %v680
    %v2700 = vand.u32 %v2699, 8388607
    %v2701 = vor.u32 %v2700, 8388608
    %v2702 = vsub.s32 0, %v2701
    %v2703 = vadd.s32 %v2698, 1
    %vm2704 = vcmp.gt.s32.totalorder %v2703, 0
    %v2705 = vsel %vm2704, %v2703, 0
    %v2706 = vshrl.u32 %v2705, 5
    %v2707 = vand.u32 %v2705, 31
    %v2708 = vsub.s32 32, %v2707
    %v2709 = vshrl.u32 683565275, %v2708
    %v2710 = vshll.u32 683565275, %v2707
    %v2711 = vshrl.u32 2475754826, %v2708
    %v2712 = vor.u32 %v2710, %v2711
    %v2713 = vshll.u32 2475754826, %v2707
    %v2714 = vshrl.u32 2131351028, %v2708
    %v2715 = vor.u32 %v2713, %v2714
    %v2716 = vshll.u32 2131351028, %v2707
    %v2717 = vshrl.u32 2102212464, %v2708
    %v2718 = vor.u32 %v2716, %v2717
    %v2719 = vshll.u32 2102212464, %v2707
    %v2720 = vshrl.u32 920167782, %v2708
    %v2721 = vor.u32 %v2719, %v2720
    %v2722 = vshll.u32 920167782, %v2707
    %v2723 = vshrl.u32 1326507024, %v2708
    %v2724 = vor.u32 %v2722, %v2723
    %vm2725 = vcmp.lt.s32.totalorder %v2706, 1
    %vm2726 = vcmp.lt.s32.totalorder %v2706, 2
    %vm2727 = vcmp.lt.s32.totalorder %v2706, 3
    %vm2728 = vcmp.lt.s32.totalorder %v2706, 4
    %v2729 = vsel %vm2725, %v2709, %v2712
    %v2730 = vsel %vm2728, %v2718, 2102212464
    %v2731 = vsel %vm2727, %v2715, %v2730
    %v2732 = vsel %vm2726, %v2729, %v2731
    %v2733 = vsel %vm2725, %v2712, %v2715
    %v2734 = vsel %vm2728, %v2721, 920167782
    %v2735 = vsel %vm2727, %v2718, %v2734
    %v2736 = vsel %vm2726, %v2733, %v2735
    %v2737 = vsel %vm2725, %v2715, %v2718
    %v2738 = vsel %vm2728, %v2724, 1326507024
    %v2739 = vsel %vm2727, %v2721, %v2738
    %v2740 = vsel %vm2726, %v2737, %v2739
    %v2741 = vshll.u32 %v2701, 8
    %v2742 = vand.u32 %v2741, 65535
    %v2743 = vshrl.u32 %v2741, 16
    %v2744 = vand.u32 %v2740, 65535
    %v2745 = vshrl.u32 %v2740, 16
    %v2746 = vmul.u32 %v2742, %v2744
    %v2747 = vmul.u32 %v2742, %v2745
    %v2748 = vmul.u32 %v2743, %v2744
    %v2749 = vmul.u32 %v2743, %v2745
    %v2750 = vshll.u32 %v2747, 16
    %v2751 = vshrl.u32 %v2747, 16
    %v2752 = vshll.u32 %v2748, 16
    %v2753 = vshrl.u32 %v2748, 16
    %vm2754 = vc.u32 %v2746, %v2750
    %v2755 = vsel %vm2754, 1, 0
    %v2756 = vadd.s32 %v2746, %v2750
    %v2757 = vadd.s32 %v2749, %v2755
    %vm2758 = vc.u32 %v2756, %v2752
    %v2759 = vsel %vm2758, 1, 0
    %v2760 = vadd.s32 %v2756, %v2752
    %v2761 = vadd.s32 %v2757, %v2759
    %v2762 = vadd.s32 %v2761, %v2751
    %v2763 = vadd.s32 %v2762, %v2753
    %v2764 = vand.u32 %v2741, 65535
    %v2765 = vshrl.u32 %v2741, 16
    %v2766 = vand.u32 %v2736, 65535
    %v2767 = vshrl.u32 %v2736, 16
    %v2768 = vmul.u32 %v2764, %v2766
    %v2769 = vmul.u32 %v2764, %v2767
    %v2770 = vmul.u32 %v2765, %v2766
    %v2771 = vmul.u32 %v2765, %v2767
    %v2772 = vshll.u32 %v2769, 16
    %v2773 = vshrl.u32 %v2769, 16
    %v2774 = vshll.u32 %v2770, 16
    %v2775 = vshrl.u32 %v2770, 16
    %vm2776 = vc.u32 %v2768, %v2772
    %v2777 = vsel %vm2776, 1, 0
    %v2778 = vadd.s32 %v2768, %v2772
    %v2779 = vadd.s32 %v2771, %v2777
    %vm2780 = vc.u32 %v2778, %v2774
    %v2781 = vsel %vm2780, 1, 0
    %v2782 = vadd.s32 %v2778, %v2774
    %v2783 = vadd.s32 %v2779, %v2781
    %v2784 = vadd.s32 %v2783, %v2773
    %v2785 = vadd.s32 %v2784, %v2775
    %v2786 = vmul.u32 %v2741, %v2732
    %v2787 = vadd.s32 %v2763, %v2782
    %vm2788 = vc.u32 %v2763, %v2782
    %v2789 = vadd.s32 %v2785, 1
    %v2790 = vsel %vm2788, %v2789, %v2785
    %v2791 = vadd.s32 %v2786, %v2790
    %v2792 = vadd.s32 %v2791, 536870912
    %v2793 = vshrl.u32 %v2792, 30
    %v2794 = vshll.u32 %v2793, 30
    %v2795 = vsub.s32 %v2791, %v2794
    %vm2796 = vcmp.lt.s32.totalorder %v2795, 0
    %v2797 = vsub.s32 0, %v2795
    %v2798 = vsel %vm2796, %v2797, %v2795
    %v2799 = vclz %v2798
    %v2800 = vsub.s32 %v2799, 2
    %vm2801 = vcmp.gt.s32.totalorder 0, %v2800
    %v2802 = vsel %vm2801, 0, %v2800
    %v2803 = vsub.s32 32, %v2802
    %v2804 = vshll.u32 %v2795, %v2802
    %v2805 = vshrl.u32 %v2787, %v2803
    %v2806 = vor.u32 %v2804, %v2805
    %v2807 = vsub.s32 4294967266, %v2802
    %v2808 = vadd.s32 %v2807, 127
    %v2809 = vshll.u32 %v2808, 23
    %v2810 = vor.u32 4788187, %v2809
    %v2811 = vand.u32 2147483647, %v2810
    %v2813 = vcvt.s32.f32 %v2806
    %v2814 = vmul.f32 %v2813, %v2811
    %v2815 = vxor.u32 %v2814, 2147483648
    %v2816 = vsel %vm2695, %v2815, %v2814
    %v2817 = vsub.s32 4, %v2793
    %v2818 = vsel %vm2695, %v2817, %v2793
    %v2819 = vsel %vm2694, %v680, %v2816
    %v2820 = vsel %vm2694, 0, %v2818
    %v2821 = vmul.f32 %v2819, %v2819
    %v2822 = vmul.f32 %v2821, -0.001358992
    %v2823 = vadd.f32 %v2822, 0.041655596
    %v2824 = vmul.f32 %v2821, %v2823
    %v2825 = vadd.f32 %v2824, -0.4999988
    %v2826 = vmul.f32 %v2821, %v2825
    %v2827 = vadd.f32 1.0, %v2826
    %v2828 = vmul.f32 %v2819, %v2819
    %v2829 = vmul.f32 %v2828, -0.00019511016
    %v2830 = vadd.f32 %v2829, 0.008332121
    %v2831 = vmul.f32 %v2828, %v2830
    %v2832 = vadd.f32 %v2831, -0.16666654
    %v2833 = vmul.f32 %v2828, %v2832
    %v2834 = vadd.f32 %v2833, 1.0
    %v2835 = vmul.f32 %v2834, %v2819
    %vm2836 = vweird.f32 %v680
    %v2837 = vand.u32 %v2820, 3
    %vm2838 = vcmp.lt.s32.totalorder %v2837, 2
    %vm2839 = vcmp.eq.s32.totalorder %v2837, 0
    %v2840 = vxor.u32 %v2835, 2147483648
    %v2841 = vsel %vm2839, %v2827, %v2840
    %vm2842 = vcmp.eq.s32.totalorder %v2837, 2
    %v2843 = vxor.u32 %v2827, 2147483648
    %v2844 = vsel %vm2842, %v2843, %v2835
    %v2845 = vsel %vm2838, %v2841, %v2844
    %v2846 = vsel %vm2836, nan, %v2845
    %v2847 = vand.u32 2147483647, %v681
    %vm2848 = vcmp.le.f32.partialorder %v2847, 0.7853982
    %vm2849 = vcmp.lt.s32.totalorder %v681, 0
    %v2850 = vand.u32 %v681, 2139095040
    %v2851 = vshrl.u32 %v2850, 23
    %v2852 = vsub.s32 %v2851, 127
    %v2853 = vand.u32 2147483647, %v681
    %v2854 = vand.u32 %v2853, 8388607
    %v2855 = vor.u32 %v2854, 8388608
    %v2856 = vsub.s32 0, %v2855
    %v2857 = vadd.s32 %v2852, 1
    %vm2858 = vcmp.gt.s32.totalorder %v2857, 0
    %v2859 = vsel %vm2858, %v2857, 0
    %v2860 = vshrl.u32 %v2859, 5
    %v2861 = vand.u32 %v2859, 31
    %v2862 = vsub.s32 32, %v2861
    %v2863 = vshrl.u32 683565275, %v2862
    %v2864 = vshll.u32 683565275, %v2861
    %v2865 = vshrl.u32 2475754826, %v2862
    %v2866 = vor.u32 %v2864, %v2865
    %v2867 = vshll.u32 2475754826, %v2861
    %v2868 = vshrl.u32 2131351028, %v2862
    %v2869 = vor.u32 %v2867, %v2868
    %v2870 = vshll.u32 2131351028, %v2861
    %v2871 = vshrl.u32 2102212464, %v2862
    %v2872 = vor.u32 %v2870, %v2871
    %v2873 = vshll.u32 2102212464, %v2861
    %v2874 = vshrl.u32 920167782, %v2862
    %v2875 = vor.u32 %v2873, %v2874
    %v2876 = vshll.u32 920167782, %v2861
    %v2877 = vshrl.u32 1326507024, %v2862
    %v2878 = vor.u32 %v2876, %v2877
    %vm2879 = vcmp.lt.s32.totalorder %v2860, 1
    %vm2880 = vcmp.lt.s32.totalorder %v2860, 2
    %vm2881 = vcmp.lt.s32.totalorder %v2860, 3
    %vm2882 = vcmp.lt.s32.totalorder %v2860, 4
    %v2883 = vsel %vm2879, %v2863, %v2866
    %v2884 = vsel %vm2882, %v2872, 2102212464
    %v2885 = vsel %vm2881, %v2869, %v2884
    %v2886 = vsel %vm2880, %v2883, %v2885
    %v2887 = vsel %vm2879, %v2866, %v2869
    %v2888 = vsel %vm2882, %v2875, 920167782
    %v2889 = vsel %vm2881, %v2872, %v2888
    %v2890 = vsel %vm2880, %v2887, %v2889
    %v2891 = vsel %vm2879, %v2869, %v2872
    %v2892 = vsel %vm2882, %v2878, 1326507024
    %v2893 = vsel %vm2881, %v2875, %v2892
    %v2894 = vsel %vm2880, %v2891, %v2893
    %v2895 = vshll.u32 %v2855, 8
    %v2896 = vand.u32 %v2895, 65535
    %v2897 = vshrl.u32 %v2895, 16
    %v2898 = vand.u32 %v2894, 65535
    %v2899 = vshrl.u32 %v2894, 16
    %v2900 = vmul.u32 %v2896, %v2898
    %v2901 = vmul.u32 %v2896, %v2899
    %v2902 = vmul.u32 %v2897, %v2898
    %v2903 = vmul.u32 %v2897, %v2899
    %v2904 = vshll.u32 %v2901, 16
    %v2905 = vshrl.u32 %v2901, 16
    %v2906 = vshll.u32 %v2902, 16
    %v2907 = vshrl.u32 %v2902, 16
    %vm2908 = vc.u32 %v2900, %v2904
    %v2909 = vsel %vm2908, 1, 0
    %v2910 = vadd.s32 %v2900, %v2904
    %v2911 = vadd.s32 %v2903, %v2909
    %vm2912 = vc.u32 %v2910, %v2906
    %v2913 = vsel %vm2912, 1, 0
    %v2914 = vadd.s32 %v2910, %v2906
    %v2915 = vadd.s32 %v2911, %v2913
    %v2916 = vadd.s32 %v2915, %v2905
    %v2917 = vadd.s32 %v2916, %v2907
    %v2918 = vand.u32 %v2895, 65535
    %v2919 = vshrl.u32 %v2895, 16
    %v2920 = vand.u32 %v2890, 65535
    %v2921 = vshrl.u32 %v2890, 16
    %v2922 = vmul.u32 %v2918, %v2920
    %v2923 = vmul.u32 %v2918, %v2921
    %v2924 = vmul.u32 %v2919, %v2920
    %v2925 = vmul.u32 %v2919, %v2921
    %v2926 = vshll.u32 %v2923, 16
    %v2927 = vshrl.u32 %v2923, 16
    %v2928 = vshll.u32 %v2924, 16
    %v2929 = vshrl.u32 %v2924, 16
    %vm2930 = vc.u32 %v2922, %v2926
    %v2931 = vsel %vm2930, 1, 0
    %v2932 = vadd.s32 %v2922, %v2926
    %v2933 = vadd.s32 %v2925, %v2931
    %vm2934 = vc.u32 %v2932, %v2928
    %v2935 = vsel %vm2934, 1, 0
    %v2936 = vadd.s32 %v2932, %v2928
    %v2937 = vadd.s32 %v2933, %v2935
    %v2938 = vadd.s32 %v2937, %v2927
    %v2939 = vadd.s32 %v2938, %v2929
    %v2940 = vmul.u32 %v2895, %v2886
    %v2941 = vadd.s32 %v2917, %v2936
    %vm2942 = vc.u32 %v2917, %v2936
    %v2943 = vadd.s32 %v2939, 1
    %v2944 = vsel %vm2942, %v2943, %v2939
    %v2945 = vadd.s32 %v2940, %v2944
    %v2946 = vadd.s32 %v2945, 536870912
    %v2947 = vshrl.u32 %v2946, 30
    %v2948 = vshll.u32 %v2947, 30
    %v2949 = vsub.s32 %v2945, %v2948
    %vm2950 = vcmp.lt.s32.totalorder %v2949, 0
    %v2951 = vsub.s32 0, %v2949
    %v2952 = vsel %vm2950, %v2951, %v2949
    %v2953 = vclz %v2952
    %v2954 = vsub.s32 %v2953, 2
    %vm2955 = vcmp.gt.s32.totalorder 0, %v2954
    %v2956 = vsel %vm2955, 0, %v2954
    %v2957 = vsub.s32 32, %v2956
    %v2958 = vshll.u32 %v2949, %v2956
    %v2959 = vshrl.u32 %v2941, %v2957
    %v2960 = vor.u32 %v2958, %v2959
    %v2961 = vsub.s32 4294967266, %v2956
    %v2962 = vadd.s32 %v2961, 127
    %v2963 = vshll.u32 %v2962, 23
    %v2964 = vor.u32 4788187, %v2963
    %v2965 = vand.u32 2147483647, %v2964
    %v2967 = vcvt.s32.f32 %v2960
    %v2968 = vmul.f32 %v2967, %v2965
    %v2969 = vxor.u32 %v2968, 2147483648
    %v2970 = vsel %vm2849, %v2969, %v2968
    %v2971 = vsub.s32 4, %v2947
    %v2972 = vsel %vm2849, %v2971, %v2947
    %v2973 = vsel %vm2848, %v681, %v2970
    %v2974 = vsel %vm2848, 0, %v2972
    %v2975 = vmul.f32 %v2973, %v2973
    %v2976 = vmul.f32 %v2975, -0.001358992
    %v2977 = vadd.f32 %v2976, 0.041655596
    %v2978 = vmul.f32 %v2975, %v2977
    %v2979 = vadd.f32 %v2978, -0.4999988
    %v2980 = vmul.f32 %v2975, %v2979
    %v2981 = vadd.f32 1.0, %v2980
    %v2982 = vmul.f32 %v2973, %v2973
    %v2983 = vmul.f32 %v2982, -0.00019511016
    %v2984 = vadd.f32 %v2983, 0.008332121
    %v2985 = vmul.f32 %v2982, %v2984
    %v2986 = vadd.f32 %v2985, -0.16666654
    %v2987 = vmul.f32 %v2982, %v2986
    %v2988 = vadd.f32 %v2987, 1.0
    %v2989 = vmul.f32 %v2988, %v2973
    %vm2990 = vweird.f32 %v681
    %v2991 = vand.u32 %v2974, 3
    %vm2992 = vcmp.lt.s32.totalorder %v2991, 2
    %vm2993 = vcmp.eq.s32.totalorder %v2991, 0
    %v2994 = vxor.u32 %v2989, 2147483648
    %v2995 = vsel %vm2993, %v2981, %v2994
    %vm2996 = vcmp.eq.s32.totalorder %v2991, 2
    %v2997 = vxor.u32 %v2981, 2147483648
    %v2998 = vsel %vm2996, %v2997, %v2989
    %v2999 = vsel %vm2992, %v2995, %v2998
    %v3000 = vsel %vm2990, nan, %v2999
    %v3001 = vand.u32 2147483647, %v682
    %vm3002 = vcmp.le.f32.partialorder %v3001, 0.7853982
    %vm3003 = vcmp.lt.s32.totalorder %v682, 0
    %v3004 = vand.u32 %v682, 2139095040
    %v3005 = vshrl.u32 %v3004, 23
    %v3006 = vsub.s32 %v3005, 127
    %v3007 = vand.u32 2147483647, %v682
    %v3008 = vand.u32 %v3007, 8388607
    %v3009 = vor.u32 %v3008, 8388608
    %v3010 = vsub.s32 0, %v3009
    %v3011 = vadd.s32 %v3006, 1
    %vm3012 = vcmp.gt.s32.totalorder %v3011, 0
    %v3013 = vsel %vm3012, %v3011, 0
    %v3014 = vshrl.u32 %v3013, 5
    %v3015 = vand.u32 %v3013, 31
    %v3016 = vsub.s32 32, %v3015
    %v3017 = vshrl.u32 683565275, %v3016
    %v3018 = vshll.u32 683565275, %v3015
    %v3019 = vshrl.u32 2475754826, %v3016
    %v3020 = vor.u32 %v3018, %v3019
    %v3021 = vshll.u32 2475754826, %v3015
    %v3022 = vshrl.u32 2131351028, %v3016
    %v3023 = vor.u32 %v3021, %v3022
    %v3024 = vshll.u32 2131351028, %v3015
    %v3025 = vshrl.u32 2102212464, %v3016
    %v3026 = vor.u32 %v3024, %v3025
    %v3027 = vshll.u32 2102212464, %v3015
    %v3028 = vshrl.u32 920167782, %v3016
    %v3029 = vor.u32 %v3027, %v3028
    %v3030 = vshll.u32 920167782, %v3015
    %v3031 = vshrl.u32 1326507024, %v3016
    %v3032 = vor.u32 %v3030, %v3031
    %vm3033 = vcmp.lt.s32.totalorder %v3014, 1
    %vm3034 = vcmp.lt.s32.totalorder %v3014, 2
    %vm3035 = vcmp.lt.s32.totalorder %v3014, 3
    %vm3036 = vcmp.lt.s32.totalorder %v3014, 4
    %v3037 = vsel %vm3033, %v3017, %v3020
    %v3038 = vsel %vm3036, %v3026, 2102212464
    %v3039 = vsel %vm3035, %v3023, %v3038
    %v3040 = vsel %vm3034, %v3037, %v3039
    %v3041 = vsel %vm3033, %v3020, %v3023
    %v3042 = vsel %vm3036, %v3029, 920167782
    %v3043 = vsel %vm3035, %v3026, %v3042
    %v3044 = vsel %vm3034, %v3041, %v3043
    %v3045 = vsel %vm3033, %v3023, %v3026
    %v3046 = vsel %vm3036, %v3032, 1326507024
    %v3047 = vsel %vm3035, %v3029, %v3046
    %v3048 = vsel %vm3034, %v3045, %v3047
    %v3049 = vshll.u32 %v3009, 8
    %v3050 = vand.u32 %v3049, 65535
    %v3051 = vshrl.u32 %v3049, 16
    %v3052 = vand.u32 %v3048, 65535
    %v3053 = vshrl.u32 %v3048, 16
    %v3054 = vmul.u32 %v3050, %v3052
    %v3055 = vmul.u32 %v3050, %v3053
    %v3056 = vmul.u32 %v3051, %v3052
    %v3057 = vmul.u32 %v3051, %v3053
    %v3058 = vshll.u32 %v3055, 16
    %v3059 = vshrl.u32 %v3055, 16
    %v3060 = vshll.u32 %v3056, 16
    %v3061 = vshrl.u32 %v3056, 16
    %vm3062 = vc.u32 %v3054, %v3058
    %v3063 = vsel %vm3062, 1, 0
    %v3064 = vadd.s32 %v3054, %v3058
    %v3065 = vadd.s32 %v3057, %v3063
    %vm3066 = vc.u32 %v3064, %v3060
    %v3067 = vsel %vm3066, 1, 0
    %v3068 = vadd.s32 %v3064, %v3060
    %v3069 = vadd.s32 %v3065, %v3067
    %v3070 = vadd.s32 %v3069, %v3059
    %v3071 = vadd.s32 %v3070, %v3061
    %v3072 = vand.u32 %v3049, 65535
    %v3073 = vshrl.u32 %v3049, 16
    %v3074 = vand.u32 %v3044, 65535
    %v3075 = vshrl.u32 %v3044, 16
    %v3076 = vmul.u32 %v3072, %v3074
    %v3077 = vmul.u32 %v3072, %v3075
    %v3078 = vmul.u32 %v3073, %v3074
    %v3079 = vmul.u32 %v3073, %v3075
    %v3080 = vshll.u32 %v3077, 16
    %v3081 = vshrl.u32 %v3077, 16
    %v3082 = vshll.u32 %v3078, 16
    %v3083 = vshrl.u32 %v3078, 16
    %vm3084 = vc.u32 %v3076, %v3080
    %v3085 = vsel %vm3084, 1, 0
    %v3086 = vadd.s32 %v3076, %v3080
    %v3087 = vadd.s32 %v3079, %v3085
    %vm3088 = vc.u32 %v3086, %v3082
    %v3089 = vsel %vm3088, 1, 0
    %v3090 = vadd.s32 %v3086, %v3082
    %v3091 = vadd.s32 %v3087, %v3089
    %v3092 = vadd.s32 %v3091, %v3081
    %v3093 = vadd.s32 %v3092, %v3083
    %v3094 = vmul.u32 %v3049, %v3040
    %v3095 = vadd.s32 %v3071, %v3090
    %vm3096 = vc.u32 %v3071, %v3090
    %v3097 = vadd.s32 %v3093, 1
    %v3098 = vsel %vm3096, %v3097, %v3093
    %v3099 = vadd.s32 %v3094, %v3098
    %v3100 = vadd.s32 %v3099, 536870912
    %v3101 = vshrl.u32 %v3100, 30
    %v3102 = vshll.u32 %v3101, 30
    %v3103 = vsub.s32 %v3099, %v3102
    %vm3104 = vcmp.lt.s32.totalorder %v3103, 0
    %v3105 = vsub.s32 0, %v3103
    %v3106 = vsel %vm3104, %v3105, %v3103
    %v3107 = vclz %v3106
    %v3108 = vsub.s32 %v3107, 2
    %vm3109 = vcmp.gt.s32.totalorder 0, %v3108
    %v3110 = vsel %vm3109, 0, %v3108
    %v3111 = vsub.s32 32, %v3110
    %v3112 = vshll.u32 %v3103, %v3110
    %v3113 = vshrl.u32 %v3095, %v3111
    %v3114 = vor.u32 %v3112, %v3113
    %v3115 = vsub.s32 4294967266, %v3110
    %v3116 = vadd.s32 %v3115, 127
    %v3117 = vshll.u32 %v3116, 23
    %v3118 = vor.u32 4788187, %v3117
    %v3119 = vand.u32 2147483647, %v3118
    %v3121 = vcvt.s32.f32 %v3114
    %v3122 = vmul.f32 %v3121, %v3119
    %v3123 = vxor.u32 %v3122, 2147483648
    %v3124 = vsel %vm3003, %v3123, %v3122
    %v3125 = vsub.s32 4, %v3101
    %v3126 = vsel %vm3003, %v3125, %v3101
    %v3127 = vsel %vm3002, %v682, %v3124
    %v3128 = vsel %vm3002, 0, %v3126
    %v3129 = vmul.f32 %v3127, %v3127
    %v3130 = vmul.f32 %v3129, -0.001358992
    %v3131 = vadd.f32 %v3130, 0.041655596
    %v3132 = vmul.f32 %v3129, %v3131
    %v3133 = vadd.f32 %v3132, -0.4999988
    %v3134 = vmul.f32 %v3129, %v3133
    %v3135 = vadd.f32 1.0, %v3134
    %v3136 = vmul.f32 %v3127, %v3127
    %v3137 = vmul.f32 %v3136, -0.00019511016
    %v3138 = vadd.f32 %v3137, 0.008332121
    %v3139 = vmul.f32 %v3136, %v3138
    %v3140 = vadd.f32 %v3139, -0.16666654
    %v3141 = vmul.f32 %v3136, %v3140
    %v3142 = vadd.f32 %v3141, 1.0
    %v3143 = vmul.f32 %v3142, %v3127
    %vm3144 = vweird.f32 %v682
    %v3145 = vand.u32 %v3128, 3
    %vm3146 = vcmp.lt.s32.totalorder %v3145, 2
    %vm3147 = vcmp.eq.s32.totalorder %v3145, 0
    %v3148 = vxor.u32 %v3143, 2147483648
    %v3149 = vsel %vm3147, %v3135, %v3148
    %vm3150 = vcmp.eq.s32.totalorder %v3145, 2
    %v3151 = vxor.u32 %v3135, 2147483648
    %v3152 = vsel %vm3150, %v3151, %v3143
    %v3153 = vsel %vm3146, %v3149, %v3152
    %v3154 = vsel %vm3144, nan, %v3153
    %3163 = vrot.lane.b32.xlu0 %v2076, 30
    %v3164 = vpop.permute.xlu0 %3163
    %3165 = vrot.lane.b32.xlu0 %v2230, 30
    %v3166 = vpop.permute.xlu0 %3165
    %3167 = vrot.lane.b32.xlu0 %v2384, 30
    %v3168 = vpop.permute.xlu0 %3167
    %3169 = vrot.lane.b32.xlu0 %v2538, 30
    %v3170 = vpop.permute.xlu0 %3169
    %3171 = vrot.lane.b32.xlu0 %v2692, 30
    %v3172 = vpop.permute.xlu0 %3171
    %3173 = vrot.lane.b32.xlu0 %v2846, 30
    %v3174 = vpop.permute.xlu0 %3173
    %3175 = vrot.lane.b32.xlu0 %v3000, 30
    %v3176 = vpop.permute.xlu0 %3175
    %3177 = vrot.lane.b32.xlu0 %v3154, 30
    %v3178 = vpop.permute.xlu0 %3177
    %v3187 = vsel %vm412, %v837, %v3164
    %v3188 = vsel %vm412, %v992, %v3166
    %v3189 = vsel %vm412, %v1147, %v3168
    %v3190 = vsel %vm412, %v1302, %v3170
    %v3191 = vsel %vm412, %v1457, %v3172
    %v3192 = vsel %vm412, %v1612, %v3174
    %v3193 = vsel %vm412, %v1767, %v3176
    %v3194 = vsel %vm412, %v1922, %v3178
    %v3195 = vpack.c.bf16 %v3188, %v3187
    %v3196 = vpack.c.bf16 %v3190, %v3189
    %v3197 = vpack.c.bf16 %v3192, %v3191
    %v3198 = vpack.c.bf16 %v3194, %v3193
    %v3199 = vld [vmem:[%s3] sm:$0xf]
    %v3200 = vld [vmem:[%s3 + $0x4] sm:$0xf]
    %v3201 = vld [vmem:[%s3 + $0x8] sm:$0xf]
    %v3202 = vld [vmem:[%s3 + $0xc] sm:$0xf]
    %v3203 = vld [vmem:[%s3 + $0x10] sm:$0xf]
    %v3204 = vld [vmem:[%s3 + $0x14] sm:$0xf]
    %v3205 = vld [vmem:[%s3 + $0x18] sm:$0xf]
    %v3206 = vld [vmem:[%s3 + $0x1c] sm:$0x3]
    %v3207 = vld [vmem:[%s4] sm:$0x1]
    %v3209 = vperm.slane %v3207, 0
    %v3219 = vunpack.c.l.b16 %v3199
    %v3220 = vunpack.c.l.b16 %v3200
    %v3221 = vunpack.c.l.b16 %v3201
    %v3222 = vunpack.c.l.b16 %v3202
    %v3223 = vunpack.c.l.b16 %v3203
    %v3224 = vunpack.c.l.b16 %v3204
    %v3225 = vunpack.c.l.b16 %v3205
    %v3226 = vunpack.c.l.b16 %v3206
    %v3227 = vpack.c.b16 %v3220, %v3219
    %v3228 = vpack.c.b16 %v3222, %v3221
    %v3229 = vpack.c.b16 %v3224, %v3223
    %v3230 = vpack.c.b16 %v3226, %v3225
    %v3235 = vsel %vm446, %v3195, 0
    %v3238 = vsel %vm446, %v3196, 0
    %v3241 = vsel %vm446, %v3197, 0
    %v3244 = vsel %vm446, %v3198, 0
    %v3247 = vsel %vm450, %v3230, 0
    %3249 = vmatpush.bf16.msra.mxu0 0
    %3250 = vmatpush.bf16.msra.mxu0 0
    %3251 = vmatpush.bf16.msra.mxu0 0
    %3252 = vmatpush.bf16.msra.mxu0 0
    %3253 = vmatpush.bf16.msra.mxu0 %v3247
    %3254 = vmatpush.bf16.msra.mxu0 %v3229
    %3255 = vmatpush.bf16.msra.mxu0 %v3228
    %3256 = vmatpush.bf16.msra.mxu0 %v3227
    %3257 = vmatmul.bf16.gmra.mxu0 %v3235
    %v3258 = vpop.f32.mrf.mxu0
    %v3259 = vadd.f32 %v3209, %v3258
    %v3260 = vpop.f32.mrf.mxu0
    %v3261 = vadd.f32 %v3209, %v3260
    %3262 = vmatmul.bf16.gmra.mxu0 %v3238
    %v3263 = vpop.f32.mrf.mxu0
    %v3264 = vadd.f32 %v3209, %v3263
    %v3265 = vpop.f32.mrf.mxu0
    %v3266 = vadd.f32 %v3209, %v3265
    %3267 = vmatmul.bf16.gmra.mxu0 %v3241
    %v3268 = vpop.f32.mrf.mxu0
    %v3269 = vadd.f32 %v3209, %v3268
    %v3270 = vpop.f32.mrf.mxu0
    %v3271 = vadd.f32 %v3209, %v3270
    %3272 = vmatmul.bf16.gmra.mxu0 %v3244
    %v3273 = vpop.f32.mrf.mxu0
    %v3274 = vadd.f32 %v3209, %v3273
    %v3275 = vpop.f32.mrf.mxu0
    %v3276 = vadd.f32 %v3209, %v3275
    %3277 = vdwg.mxu0
    %v3278 = vmul.f32 %v3259, 10.0
    %v3279 = vmul.f32 %v3261, 10.0
    %v3280 = vmul.f32 %v3264, 10.0
    %v3281 = vmul.f32 %v3266, 10.0
    %v3282 = vmul.f32 %v3269, 10.0
    %v3283 = vmul.f32 %v3271, 10.0
    %v3284 = vmul.f32 %v3274, 10.0
    %v3285 = vmul.f32 %v3276, 10.0
    %vm3286 = vcmp.gt.f32.partialorder %v3278, 20.0
    %vm3287 = vcmp.gt.f32.partialorder %v3279, 20.0
    %vm3288 = vcmp.gt.f32.partialorder %v3280, 20.0
    %vm3289 = vcmp.gt.f32.partialorder %v3281, 20.0
    %vm3290 = vcmp.gt.f32.partialorder %v3282, 20.0
    %vm3291 = vcmp.gt.f32.partialorder %v3283, 20.0
    %vm3292 = vcmp.gt.f32.partialorder %v3284, 20.0
    %vm3293 = vcmp.gt.f32.partialorder %v3285, 20.0
    %v3294 = vmin.f32 %v3278, 20.0
    %v3295 = vmin.f32 %v3279, 20.0
    %v3296 = vmin.f32 %v3280, 20.0
    %v3297 = vmin.f32 %v3281, 20.0
    %v3298 = vmin.f32 %v3282, 20.0
    %v3299 = vmin.f32 %v3283, 20.0
    %v3300 = vmin.f32 %v3284, 20.0
    %v3301 = vmin.f32 %v3285, 20.0
    %v3302 = vmul.f32 %v3294, 1.442695
    %v3303 = vpow.pop %v3302
    %v3304 = vmul.f32 %v3295, 1.442695
    %v3305 = vpow.pop %v3304
    %v3306 = vmul.f32 %v3296, 1.442695
    %v3307 = vpow.pop %v3306
    %v3308 = vmul.f32 %v3297, 1.442695
    %v3309 = vpow.pop %v3308
    %v3310 = vmul.f32 %v3298, 1.442695
    %v3311 = vpow.pop %v3310
    %v3312 = vmul.f32 %v3299, 1.442695
    %v3313 = vpow.pop %v3312
    %v3314 = vmul.f32 %v3300, 1.442695
    %v3315 = vpow.pop %v3314
    %v3316 = vmul.f32 %v3301, 1.442695
    %v3317 = vpow.pop %v3316
    %v3318 = vadd.f32 %v3303, 1.0
    %v3319 = vlog2.pop %v3318
    %v3320 = vmul.f32 %v3319, 0.6931472
    %v3321 = vmul.f32 -0.5, %v3303
    %v3322 = vadd.f32 %v3321, 1.0
    %v3323 = vmul.f32 %v3322, %v3303
    %v3324 = vand.u32 2147483647, %v3303
    %vm3325 = vcmp.lt.f32.partialorder %v3324, 0.0004427343
    %v3326 = vsel %vm3325, %v3323, %v3320
    %v3327 = vadd.f32 %v3305, 1.0
    %v3328 = vlog2.pop %v3327
    %v3329 = vmul.f32 %v3328, 0.6931472
    %v3330 = vmul.f32 -0.5, %v3305
    %v3331 = vadd.f32 %v3330, 1.0
    %v3332 = vmul.f32 %v3331, %v3305
    %v3333 = vand.u32 2147483647, %v3305
    %vm3334 = vcmp.lt.f32.partialorder %v3333, 0.0004427343
    %v3335 = vsel %vm3334, %v3332, %v3329
    %v3336 = vadd.f32 %v3307, 1.0
    %v3337 = vlog2.pop %v3336
    %v3338 = vmul.f32 %v3337, 0.6931472
    %v3339 = vmul.f32 -0.5, %v3307
    %v3340 = vadd.f32 %v3339, 1.0
    %v3341 = vmul.f32 %v3340, %v3307
    %v3342 = vand.u32 2147483647, %v3307
    %vm3343 = vcmp.lt.f32.partialorder %v3342, 0.0004427343
    %v3344 = vsel %vm3343, %v3341, %v3338
    %v3345 = vadd.f32 %v3309, 1.0
    %v3346 = vlog2.pop %v3345
    %v3347 = vmul.f32 %v3346, 0.6931472
    %v3348 = vmul.f32 -0.5, %v3309
    %v3349 = vadd.f32 %v3348, 1.0
    %v3350 = vmul.f32 %v3349, %v3309
    %v3351 = vand.u32 2147483647, %v3309
    %vm3352 = vcmp.lt.f32.partialorder %v3351, 0.0004427343
    %v3353 = vsel %vm3352, %v3350, %v3347
    %v3354 = vadd.f32 %v3311, 1.0
    %v3355 = vlog2.pop %v3354
    %v3356 = vmul.f32 %v3355, 0.6931472
    %v3357 = vmul.f32 -0.5, %v3311
    %v3358 = vadd.f32 %v3357, 1.0
    %v3359 = vmul.f32 %v3358, %v3311
    %v3360 = vand.u32 2147483647, %v3311
    %vm3361 = vcmp.lt.f32.partialorder %v3360, 0.0004427343
    %v3362 = vsel %vm3361, %v3359, %v3356
    %v3363 = vadd.f32 %v3313, 1.0
    %v3364 = vlog2.pop %v3363
    %v3365 = vmul.f32 %v3364, 0.6931472
    %v3366 = vmul.f32 -0.5, %v3313
    %v3367 = vadd.f32 %v3366, 1.0
    %v3368 = vmul.f32 %v3367, %v3313
    %v3369 = vand.u32 2147483647, %v3313
    %vm3370 = vcmp.lt.f32.partialorder %v3369, 0.0004427343
    %v3371 = vsel %vm3370, %v3368, %v3365
    %v3372 = vadd.f32 %v3315, 1.0
    %v3373 = vlog2.pop %v3372
    %v3374 = vmul.f32 %v3373, 0.6931472
    %v3375 = vmul.f32 -0.5, %v3315
    %v3376 = vadd.f32 %v3375, 1.0
    %v3377 = vmul.f32 %v3376, %v3315
    %v3378 = vand.u32 2147483647, %v3315
    %vm3379 = vcmp.lt.f32.partialorder %v3378, 0.0004427343
    %v3380 = vsel %vm3379, %v3377, %v3374
    %v3381 = vadd.f32 %v3317, 1.0
    %v3382 = vlog2.pop %v3381
    %v3383 = vmul.f32 %v3382, 0.6931472
    %v3384 = vmul.f32 -0.5, %v3317
    %v3385 = vadd.f32 %v3384, 1.0
    %v3386 = vmul.f32 %v3385, %v3317
    %v3387 = vand.u32 2147483647, %v3317
    %vm3388 = vcmp.lt.f32.partialorder %v3387, 0.0004427343
    %v3389 = vsel %vm3388, %v3386, %v3383
    %v3390 = vrcp.pop 10.0
    %v3391 = vmul.f32 10.0, %v3390
    %v3392 = vsub.f32 1.0, %v3391
    %v3393 = vmul.f32 %v3390, %v3392
    %v3394 = vadd.f32 %v3390, %v3393
    %vm3395 = vweird.f32 %v3390
    %v3396 = vsel %vm3395, %v3390, %v3394
    %v3397 = vmul.f32 %v3326, %v3396
    %v3398 = vmul.f32 %v3335, %v3396
    %v3399 = vmul.f32 %v3344, %v3396
    %v3400 = vmul.f32 %v3353, %v3396
    %v3401 = vmul.f32 %v3362, %v3396
    %v3402 = vmul.f32 %v3371, %v3396
    %v3403 = vmul.f32 %v3380, %v3396
    %v3404 = vmul.f32 %v3389, %v3396
    %v3405 = vsel %vm3286, %v3259, %v3397
    %v3406 = vsel %vm3287, %v3261, %v3398
    %v3407 = vsel %vm3288, %v3264, %v3399
    %v3408 = vsel %vm3289, %v3266, %v3400
    %v3409 = vsel %vm3290, %v3269, %v3401
    %v3410 = vsel %vm3291, %v3271, %v3402
    %v3411 = vsel %vm3292, %v3274, %v3403
    %v3412 = vsel %vm3293, %v3276, %v3404
    %v3413 = vpack.c.bf16 %v3406, %v3405
    %v3414 = vpack.c.bf16 %v3408, %v3407
    %v3415 = vpack.c.bf16 %v3410, %v3409
    %v3416 = vpack.c.bf16 %v3412, %v3411
    %v3417 = vld [vmem:[%s5] sm:$0xf]
    %v3418 = vld [vmem:[%s5 + $0x4] sm:$0xf]
    %v3419 = vld [vmem:[%s5 + $0x8] sm:$0xf]
    %v3420 = vld [vmem:[%s5 + $0xc] sm:$0xf]
    %v3421 = vld [vmem:[%s5 + $0x10] sm:$0xf]
    %v3422 = vld [vmem:[%s5 + $0x14] sm:$0xf]
    %v3423 = vld [vmem:[%s5 + $0x18] sm:$0xf]
    %v3424 = vld [vmem:[%s5 + $0x1c] sm:$0xf]
    %v3425 = vld [vmem:[%s6] sm:$0x1]
    %v3427 = vperm.slane %v3425, 0
    %v3437 = vunpack.c.l.b16 %v3417
    %v3438 = vunpack.c.l.b16 %v3418
    %v3439 = vunpack.c.l.b16 %v3419
    %v3440 = vunpack.c.l.b16 %v3420
    %v3441 = vunpack.c.l.b16 %v3421
    %v3442 = vunpack.c.l.b16 %v3422
    %v3443 = vunpack.c.l.b16 %v3423
    %v3444 = vunpack.c.l.b16 %v3424
    %v3445 = vpack.c.b16 %v3438, %v3437
    %v3446 = vpack.c.b16 %v3440, %v3439
    %v3447 = vpack.c.b16 %v3442, %v3441
    %v3448 = vpack.c.b16 %v3444, %v3443
    %vm3453 = vcmask 523264
    %v3455 = vsel %vm3453, %v3413, 0
    %v3458 = vsel %vm3453, %v3414, 0
    %v3461 = vsel %vm3453, %v3415, 0
    %v3464 = vsel %vm3453, %v3416, 0
    %3466 = vmatpush.bf16.msra.mxu0 0
    %3467 = vmatpush.bf16.msra.mxu0 0
    %3468 = vmatpush.bf16.msra.mxu0 0
    %3469 = vmatpush.bf16.msra.mxu0 0
    %3470 = vmatpush.bf16.msra.mxu0 %v3448
    %3471 = vmatpush.bf16.msra.mxu0 %v3447
    %3472 = vmatpush.bf16.msra.mxu0 %v3446
    %3473 = vmatpush.bf16.msra.mxu0 %v3445
    %3474 = vmatmul.bf16.gmra.mxu0 %v3455
    %v3475 = vpop.f32.mrf.mxu0
    %v3476 = vadd.f32 %v3427, %v3475
    %v3477 = vpop.f32.mrf.mxu0
    %v3478 = vadd.f32 %v3427, %v3477
    %3479 = vmatmul.bf16.gmra.mxu0 %v3458
    %v3480 = vpop.f32.mrf.mxu0
    %v3481 = vadd.f32 %v3427, %v3480
    %v3482 = vpop.f32.mrf.mxu0
    %v3483 = vadd.f32 %v3427, %v3482
    %3484 = vmatmul.bf16.gmra.mxu0 %v3461
    %v3485 = vpop.f32.mrf.mxu0
    %v3486 = vadd.f32 %v3427, %v3485
    %v3487 = vpop.f32.mrf.mxu0
    %v3488 = vadd.f32 %v3427, %v3487
    %3489 = vmatmul.bf16.gmra.mxu0 %v3464
    %v3490 = vpop.f32.mrf.mxu0
    %v3491 = vadd.f32 %v3427, %v3490
    %v3492 = vpop.f32.mrf.mxu0
    %v3493 = vadd.f32 %v3427, %v3492
    %3494 = vdwg.mxu0
    %v3495 = vmul.f32 %v3476, 10.0
    %v3496 = vmul.f32 %v3478, 10.0
    %v3497 = vmul.f32 %v3481, 10.0
    %v3498 = vmul.f32 %v3483, 10.0
    %v3499 = vmul.f32 %v3486, 10.0
    %v3500 = vmul.f32 %v3488, 10.0
    %v3501 = vmul.f32 %v3491, 10.0
    %v3502 = vmul.f32 %v3493, 10.0
    %vm3503 = vcmp.gt.f32.partialorder %v3495, 20.0
    %vm3504 = vcmp.gt.f32.partialorder %v3496, 20.0
    %vm3505 = vcmp.gt.f32.partialorder %v3497, 20.0
    %vm3506 = vcmp.gt.f32.partialorder %v3498, 20.0
    %vm3507 = vcmp.gt.f32.partialorder %v3499, 20.0
    %vm3508 = vcmp.gt.f32.partialorder %v3500, 20.0
    %vm3509 = vcmp.gt.f32.partialorder %v3501, 20.0
    %vm3510 = vcmp.gt.f32.partialorder %v3502, 20.0
    %v3511 = vmin.f32 %v3495, 20.0
    %v3512 = vmin.f32 %v3496, 20.0
    %v3513 = vmin.f32 %v3497, 20.0
    %v3514 = vmin.f32 %v3498, 20.0
    %v3515 = vmin.f32 %v3499, 20.0
    %v3516 = vmin.f32 %v3500, 20.0
    %v3517 = vmin.f32 %v3501, 20.0
    %v3518 = vmin.f32 %v3502, 20.0
    %v3519 = vmul.f32 %v3511, 1.442695
    %v3520 = vpow.pop %v3519
    %v3521 = vmul.f32 %v3512, 1.442695
    %v3522 = vpow.pop %v3521
    %v3523 = vmul.f32 %v3513, 1.442695
    %v3524 = vpow.pop %v3523
    %v3525 = vmul.f32 %v3514, 1.442695
    %v3526 = vpow.pop %v3525
    %v3527 = vmul.f32 %v3515, 1.442695
    %v3528 = vpow.pop %v3527
    %v3529 = vmul.f32 %v3516, 1.442695
    %v3530 = vpow.pop %v3529
    %v3531 = vmul.f32 %v3517, 1.442695
    %v3532 = vpow.pop %v3531
    %v3533 = vmul.f32 %v3518, 1.442695
    %v3534 = vpow.pop %v3533
    %v3535 = vadd.f32 %v3520, 1.0
    %v3536 = vlog2.pop %v3535
    %v3537 = vmul.f32 %v3536, 0.6931472
    %v3538 = vmul.f32 -0.5, %v3520
    %v3539 = vadd.f32 %v3538, 1.0
    %v3540 = vmul.f32 %v3539, %v3520
    %v3541 = vand.u32 2147483647, %v3520
    %vm3542 = vcmp.lt.f32.partialorder %v3541, 0.0004427343
    %v3543 = vsel %vm3542, %v3540, %v3537
    %v3544 = vadd.f32 %v3522, 1.0
    %v3545 = vlog2.pop %v3544
    %v3546 = vmul.f32 %v3545, 0.6931472
    %v3547 = vmul.f32 -0.5, %v3522
    %v3548 = vadd.f32 %v3547, 1.0
    %v3549 = vmul.f32 %v3548, %v3522
    %v3550 = vand.u32 2147483647, %v3522
    %vm3551 = vcmp.lt.f32.partialorder %v3550, 0.0004427343
    %v3552 = vsel %vm3551, %v3549, %v3546
    %v3553 = vadd.f32 %v3524, 1.0
    %v3554 = vlog2.pop %v3553
    %v3555 = vmul.f32 %v3554, 0.6931472
    %v3556 = vmul.f32 -0.5, %v3524
    %v3557 = vadd.f32 %v3556, 1.0
    %v3558 = vmul.f32 %v3557, %v3524
    %v3559 = vand.u32 2147483647, %v3524
    %vm3560 = vcmp.lt.f32.partialorder %v3559, 0.0004427343
    %v3561 = vsel %vm3560, %v3558, %v3555
    %v3562 = vadd.f32 %v3526, 1.0
    %v3563 = vlog2.pop %v3562
    %v3564 = vmul.f32 %v3563, 0.6931472
    %v3565 = vmul.f32 -0.5, %v3526
    %v3566 = vadd.f32 %v3565, 1.0
    %v3567 = vmul.f32 %v3566, %v3526
    %v3568 = vand.u32 2147483647, %v3526
    %vm3569 = vcmp.lt.f32.partialorder %v3568, 0.0004427343
    %v3570 = vsel %vm3569, %v3567, %v3564
    %v3571 = vadd.f32 %v3528, 1.0
    %v3572 = vlog2.pop %v3571
    %v3573 = vmul.f32 %v3572, 0.6931472
    %v3574 = vmul.f32 -0.5, %v3528
    %v3575 = vadd.f32 %v3574, 1.0
    %v3576 = vmul.f32 %v3575, %v3528
    %v3577 = vand.u32 2147483647, %v3528
    %vm3578 = vcmp.lt.f32.partialorder %v3577, 0.0004427343
    %v3579 = vsel %vm3578, %v3576, %v3573
    %v3580 = vadd.f32 %v3530, 1.0
    %v3581 = vlog2.pop %v3580
    %v3582 = vmul.f32 %v3581, 0.6931472
    %v3583 = vmul.f32 -0.5, %v3530
    %v3584 = vadd.f32 %v3583, 1.0
    %v3585 = vmul.f32 %v3584, %v3530
    %v3586 = vand.u32 2147483647, %v3530
    %vm3587 = vcmp.lt.f32.partialorder %v3586, 0.0004427343
    %v3588 = vsel %vm3587, %v3585, %v3582
    %v3589 = vadd.f32 %v3532, 1.0
    %v3590 = vlog2.pop %v3589
    %v3591 = vmul.f32 %v3590, 0.6931472
    %v3592 = vmul.f32 -0.5, %v3532
    %v3593 = vadd.f32 %v3592, 1.0
    %v3594 = vmul.f32 %v3593, %v3532
    %v3595 = vand.u32 2147483647, %v3532
    %vm3596 = vcmp.lt.f32.partialorder %v3595, 0.0004427343
    %v3597 = vsel %vm3596, %v3594, %v3591
    %v3598 = vadd.f32 %v3534, 1.0
    %v3599 = vlog2.pop %v3598
    %v3600 = vmul.f32 %v3599, 0.6931472
    %v3601 = vmul.f32 -0.5, %v3534
    %v3602 = vadd.f32 %v3601, 1.0
    %v3603 = vmul.f32 %v3602, %v3534
    %v3604 = vand.u32 2147483647, %v3534
    %vm3605 = vcmp.lt.f32.partialorder %v3604, 0.0004427343
    %v3606 = vsel %vm3605, %v3603, %v3600
    %v3607 = vmul.f32 %v3543, %v3396
    %v3608 = vmul.f32 %v3552, %v3396
    %v3609 = vmul.f32 %v3561, %v3396
    %v3610 = vmul.f32 %v3570, %v3396
    %v3611 = vmul.f32 %v3579, %v3396
    %v3612 = vmul.f32 %v3588, %v3396
    %v3613 = vmul.f32 %v3597, %v3396
    %v3614 = vmul.f32 %v3606, %v3396
    %v3615 = vsel %vm3503, %v3476, %v3607
    %v3616 = vsel %vm3504, %v3478, %v3608
    %v3617 = vsel %vm3505, %v3481, %v3609
    %v3618 = vsel %vm3506, %v3483, %v3610
    %v3619 = vsel %vm3507, %v3486, %v3611
    %v3620 = vsel %vm3508, %v3488, %v3612
    %v3621 = vsel %vm3509, %v3491, %v3613
    %v3622 = vsel %vm3510, %v3493, %v3614
    %v3623 = vld [vmem:[%s10] sm:$0x1]
    %v3625 = vperm.slane %v3623, 0
    %v3627 = vmul.f32 %v3615, %v3625
    %v3628 = vmul.f32 %v3616, %v3625
    %v3629 = vmul.f32 %v3617, %v3625
    %v3630 = vmul.f32 %v3618, %v3625
    %v3631 = vmul.f32 %v3619, %v3625
    %v3632 = vmul.f32 %v3620, %v3625
    %v3633 = vmul.f32 %v3621, %v3625
    %v3634 = vmul.f32 %v3622, %v3625
    %v3635 = vsel %vm3453, %v3627, 0.0
    %3636 = vadd.xlane.f32.xlu0 %v3635
    %v3637 = vpop.xlane.xlu0 %3636
    %v3638 = vsel %vm3453, %v3628, 0.0
    %3639 = vadd.xlane.f32.xlu0 %v3638
    %v3640 = vpop.xlane.xlu0 %3639
    %v3641 = vsel %vm3453, %v3629, 0.0
    %3642 = vadd.xlane.f32.xlu0 %v3641
    %v3643 = vpop.xlane.xlu0 %3642
    %v3644 = vsel %vm3453, %v3630, 0.0
    %3645 = vadd.xlane.f32.xlu0 %v3644
    %v3646 = vpop.xlane.xlu0 %3645
    %v3647 = vsel %vm3453, %v3631, 0.0
    %3648 = vadd.xlane.f32.xlu0 %v3647
    %v3649 = vpop.xlane.xlu0 %3648
    %v3650 = vsel %vm3453, %v3632, 0.0
    %3651 = vadd.xlane.f32.xlu0 %v3650
    %v3652 = vpop.xlane.xlu0 %3651
    %v3653 = vsel %vm3453, %v3633, 0.0
    %3654 = vadd.xlane.f32.xlu0 %v3653
    %v3655 = vpop.xlane.xlu0 %3654
    %v3656 = vsel %vm3453, %v3634, 0.0
    %3657 = vadd.xlane.f32.xlu0 %v3656
    %v3658 = vpop.xlane.xlu0 %3657
    %v3659 = vld [vmem:[#allocation2] sm:$0x1]
    %v3661 = vperm.slane %v3659, 0
    %v3663 = vadd.f32 %v3637, %v3661
    %v3664 = vadd.f32 %v3640, %v3661
    %v3665 = vadd.f32 %v3643, %v3661
    %v3666 = vadd.f32 %v3646, %v3661
    %v3667 = vadd.f32 %v3649, %v3661
    %v3668 = vadd.f32 %v3652, %v3661
    %v3669 = vadd.f32 %v3655, %v3661
    %v3670 = vadd.f32 %v3658, %v3661
    %v3671 = vmul.f32 %v3663, 10.0
    %v3672 = vmul.f32 %v3664, 10.0
    %v3673 = vmul.f32 %v3665, 10.0
    %v3674 = vmul.f32 %v3666, 10.0
    %v3675 = vmul.f32 %v3667, 10.0
    %v3676 = vmul.f32 %v3668, 10.0
    %v3677 = vmul.f32 %v3669, 10.0
    %v3678 = vmul.f32 %v3670, 10.0
    %vm3679 = vcmp.gt.f32.partialorder %v3671, 20.0
    %vm3680 = vcmp.gt.f32.partialorder %v3672, 20.0
    %vm3681 = vcmp.gt.f32.partialorder %v3673, 20.0
    %vm3682 = vcmp.gt.f32.partialorder %v3674, 20.0
    %vm3683 = vcmp.gt.f32.partialorder %v3675, 20.0
    %vm3684 = vcmp.gt.f32.partialorder %v3676, 20.0
    %vm3685 = vcmp.gt.f32.partialorder %v3677, 20.0
    %vm3686 = vcmp.gt.f32.partialorder %v3678, 20.0
    %v3687 = vmin.f32 %v3671, 20.0
    %v3688 = vmin.f32 %v3672, 20.0
    %v3689 = vmin.f32 %v3673, 20.0
    %v3690 = vmin.f32 %v3674, 20.0
    %v3691 = vmin.f32 %v3675, 20.0
    %v3692 = vmin.f32 %v3676, 20.0
    %v3693 = vmin.f32 %v3677, 20.0
    %v3694 = vmin.f32 %v3678, 20.0
    %v3695 = vmul.f32 %v3687, 1.442695
    %v3696 = vpow.pop %v3695
    %v3697 = vmul.f32 %v3688, 1.442695
    %v3698 = vpow.pop %v3697
    %v3699 = vmul.f32 %v3689, 1.442695
    %v3700 = vpow.pop %v3699
    %v3701 = vmul.f32 %v3690, 1.442695
    %v3702 = vpow.pop %v3701
    %v3703 = vmul.f32 %v3691, 1.442695
    %v3704 = vpow.pop %v3703
    %v3705 = vmul.f32 %v3692, 1.442695
    %v3706 = vpow.pop %v3705
    %v3707 = vmul.f32 %v3693, 1.442695
    %v3708 = vpow.pop %v3707
    %v3709 = vmul.f32 %v3694, 1.442695
    %v3710 = vpow.pop %v3709
    %v3711 = vadd.f32 %v3696, 1.0
    %v3712 = vlog2.pop %v3711
    %v3713 = vmul.f32 %v3712, 0.6931472
    %v3714 = vmul.f32 -0.5, %v3696
    %v3715 = vadd.f32 %v3714, 1.0
    %v3716 = vmul.f32 %v3715, %v3696
    %v3717 = vand.u32 2147483647, %v3696
    %vm3718 = vcmp.lt.f32.partialorder %v3717, 0.0004427343
    %v3719 = vsel %vm3718, %v3716, %v3713
    %v3720 = vadd.f32 %v3698, 1.0
    %v3721 = vlog2.pop %v3720
    %v3722 = vmul.f32 %v3721, 0.6931472
    %v3723 = vmul.f32 -0.5, %v3698
    %v3724 = vadd.f32 %v3723, 1.0
    %v3725 = vmul.f32 %v3724, %v3698
    %v3726 = vand.u32 2147483647, %v3698
    %vm3727 = vcmp.lt.f32.partialorder %v3726, 0.0004427343
    %v3728 = vsel %vm3727, %v3725, %v3722
    %v3729 = vadd.f32 %v3700, 1.0
    %v3730 = vlog2.pop %v3729
    %v3731 = vmul.f32 %v3730, 0.6931472
    %v3732 = vmul.f32 -0.5, %v3700
    %v3733 = vadd.f32 %v3732, 1.0
    %v3734 = vmul.f32 %v3733, %v3700
    %v3735 = vand.u32 2147483647, %v3700
    %vm3736 = vcmp.lt.f32.partialorder %v3735, 0.0004427343
    %v3737 = vsel %vm3736, %v3734, %v3731
    %v3738 = vadd.f32 %v3702, 1.0
    %v3739 = vlog2.pop %v3738
    %v3740 = vmul.f32 %v3739, 0.6931472
    %v3741 = vmul.f32 -0.5, %v3702
    %v3742 = vadd.f32 %v3741, 1.0
    %v3743 = vmul.f32 %v3742, %v3702
    %v3744 = vand.u32 2147483647, %v3702
    %vm3745 = vcmp.lt.f32.partialorder %v3744, 0.0004427343
    %v3746 = vsel %vm3745, %v3743, %v3740
    %v3747 = vadd.f32 %v3704, 1.0
    %v3748 = vlog2.pop %v3747
    %v3749 = vmul.f32 %v3748, 0.6931472
    %v3750 = vmul.f32 -0.5, %v3704
    %v3751 = vadd.f32 %v3750, 1.0
    %v3752 = vmul.f32 %v3751, %v3704
    %v3753 = vand.u32 2147483647, %v3704
    %vm3754 = vcmp.lt.f32.partialorder %v3753, 0.0004427343
    %v3755 = vsel %vm3754, %v3752, %v3749
    %v3756 = vadd.f32 %v3706, 1.0
    %v3757 = vlog2.pop %v3756
    %v3758 = vmul.f32 %v3757, 0.6931472
    %v3759 = vmul.f32 -0.5, %v3706
    %v3760 = vadd.f32 %v3759, 1.0
    %v3761 = vmul.f32 %v3760, %v3706
    %v3762 = vand.u32 2147483647, %v3706
    %vm3763 = vcmp.lt.f32.partialorder %v3762, 0.0004427343
    %v3764 = vsel %vm3763, %v3761, %v3758
    %v3765 = vadd.f32 %v3708, 1.0
    %v3766 = vlog2.pop %v3765
    %v3767 = vmul.f32 %v3766, 0.6931472
    %v3768 = vmul.f32 -0.5, %v3708
    %v3769 = vadd.f32 %v3768, 1.0
    %v3770 = vmul.f32 %v3769, %v3708
    %v3771 = vand.u32 2147483647, %v3708
    %vm3772 = vcmp.lt.f32.partialorder %v3771, 0.0004427343
    %v3773 = vsel %vm3772, %v3770, %v3767
    %v3774 = vadd.f32 %v3710, 1.0
    %v3775 = vlog2.pop %v3774
    %v3776 = vmul.f32 %v3775, 0.6931472
    %v3777 = vmul.f32 -0.5, %v3710
    %v3778 = vadd.f32 %v3777, 1.0
    %v3779 = vmul.f32 %v3778, %v3710
    %v3780 = vand.u32 2147483647, %v3710
    %vm3781 = vcmp.lt.f32.partialorder %v3780, 0.0004427343
    %v3782 = vsel %vm3781, %v3779, %v3776
    %v3783 = vmul.f32 %v3719, %v3396
    %v3784 = vmul.f32 %v3728, %v3396
    %v3785 = vmul.f32 %v3737, %v3396
    %v3786 = vmul.f32 %v3746, %v3396
    %v3787 = vmul.f32 %v3755, %v3396
    %v3788 = vmul.f32 %v3764, %v3396
    %v3789 = vmul.f32 %v3773, %v3396
    %v3790 = vmul.f32 %v3782, %v3396
    %v3791 = vsel %vm3679, %v3663, %v3783
    %v3792 = vsel %vm3680, %v3664, %v3784
    %v3793 = vsel %vm3681, %v3665, %v3785
    %v3794 = vsel %vm3682, %v3666, %v3786
    %v3795 = vsel %vm3683, %v3667, %v3787
    %v3796 = vsel %vm3684, %v3668, %v3788
    %v3797 = vsel %vm3685, %v3669, %v3789
    %v3798 = vsel %vm3686, %v3670, %v3790
    %v3799 = vsub.f32 0.0, %v3791
    %v3800 = vsub.f32 0.0, %v3792
    %v3801 = vsub.f32 0.0, %v3793
    %v3802 = vsub.f32 0.0, %v3794
    %v3803 = vsub.f32 0.0, %v3795
    %v3804 = vsub.f32 0.0, %v3796
    %v3805 = vsub.f32 0.0, %v3797
    %v3806 = vsub.f32 0.0, %v3798
    %v3807 = vmul.f32 %v3799, 1.442695
    %v3808 = vpow.pop %v3807
    %v3809 = vmul.f32 %v3800, 1.442695
    %v3810 = vpow.pop %v3809
    %v3811 = vmul.f32 %v3801, 1.442695
    %v3812 = vpow.pop %v3811
    %v3813 = vmul.f32 %v3802, 1.442695
    %v3814 = vpow.pop %v3813
    %v3815 = vmul.f32 %v3803, 1.442695
    %v3816 = vpow.pop %v3815
    %v3817 = vmul.f32 %v3804, 1.442695
    %v3818 = vpow.pop %v3817
    %v3819 = vmul.f32 %v3805, 1.442695
    %v3820 = vpow.pop %v3819
    %v3821 = vmul.f32 %v3806, 1.442695
    %v3822 = vpow.pop %v3821
    %v3823 = vsub.f32 1.0, %v3808
    %v3824 = vsub.f32 1.0, %v3810
    %v3825 = vsub.f32 1.0, %v3812
    %v3826 = vsub.f32 1.0, %v3814
    %v3827 = vsub.f32 1.0, %v3816
    %v3828 = vsub.f32 1.0, %v3818
    %v3829 = vsub.f32 1.0, %v3820
    %v3830 = vsub.f32 1.0, %v3822
    %v3831 = vpack.c.bf16 %v3616, %v3615
    %v3832 = vpack.c.bf16 %v3618, %v3617
    %v3833 = vpack.c.bf16 %v3620, %v3619
    %v3834 = vpack.c.bf16 %v3622, %v3621
    %v3835 = vld [vmem:[%s7] sm:$0xf]
    %v3836 = vld [vmem:[%s7 + $0x4] sm:$0xf]
    %v3837 = vld [vmem:[%s7 + $0x8] sm:$0xf]
    %v3838 = vld [vmem:[%s7 + $0xc] sm:$0xf]
    %v3839 = vld [vmem:[%s7 + $0x10] sm:$0xf]
    %v3840 = vld [vmem:[%s7 + $0x14] sm:$0xf]
    %v3841 = vld [vmem:[%s7 + $0x18] sm:$0xf]
    %v3842 = vld [vmem:[%s7 + $0x1c] sm:$0xf]
    %v3843 = vld [vmem:[%s8] sm:$0x1]
    %v3845 = vperm.slane %v3843, 0
    %v3855 = vunpack.c.l.b16 %v3835
    %v3856 = vunpack.c.l.b16 %v3836
    %v3857 = vunpack.c.l.b16 %v3837
    %v3858 = vunpack.c.l.b16 %v3838
    %v3859 = vunpack.c.l.b16 %v3839
    %v3860 = vunpack.c.l.b16 %v3840
    %v3861 = vunpack.c.l.b16 %v3841
    %v3862 = vunpack.c.l.b16 %v3842
    %v3863 = vpack.c.b16 %v3856, %v3855
    %v3864 = vpack.c.b16 %v3858, %v3857
    %v3865 = vpack.c.b16 %v3860, %v3859
    %v3866 = vpack.c.b16 %v3862, %v3861
    %v3872 = vsel %vm3453, %v3831, 0
    %v3875 = vsel %vm3453, %v3832, 0
    %v3878 = vsel %vm3453, %v3833, 0
    %v3881 = vsel %vm3453, %v3834, 0
    %3883 = vmatpush.bf16.msra.mxu0 0
    %3884 = vmatpush.bf16.msra.mxu0 0
    %3885 = vmatpush.bf16.msra.mxu0 0
    %3886 = vmatpush.bf16.msra.mxu0 0
    %3887 = vmatpush.bf16.msra.mxu0 %v3866
    %3888 = vmatpush.bf16.msra.mxu0 %v3865
    %3889 = vmatpush.bf16.msra.mxu0 %v3864
    %3890 = vmatpush.bf16.msra.mxu0 %v3863
    %3891 = vmatmul.bf16.gmra.mxu0 %v3872
    %v3892 = vpop.f32.mrf.mxu0
    %v3893 = vadd.f32 %v3845, %v3892
    %v3894 = vpop.f32.mrf.mxu0
    %v3895 = vadd.f32 %v3845, %v3894
    %3896 = vmatmul.bf16.gmra.mxu0 %v3875
    %v3897 = vpop.f32.mrf.mxu0
    %v3898 = vadd.f32 %v3845, %v3897
    %v3899 = vpop.f32.mrf.mxu0
    %v3900 = vadd.f32 %v3845, %v3899
    %3901 = vmatmul.bf16.gmra.mxu0 %v3878
    %v3902 = vpop.f32.mrf.mxu0
    %v3903 = vadd.f32 %v3845, %v3902
    %v3904 = vpop.f32.mrf.mxu0
    %v3905 = vadd.f32 %v3845, %v3904
    %3906 = vmatmul.bf16.gmra.mxu0 %v3881
    %v3907 = vpop.f32.mrf.mxu0
    %v3908 = vadd.f32 %v3845, %v3907
    %v3909 = vpop.f32.mrf.mxu0
    %v3910 = vadd.f32 %v3845, %v3909
    %3911 = vdwg.mxu0
    %v3913 = vrot.slane %v464, 1
    %v3914 = vrot.slane %v464, 2
    %v3915 = vrot.slane %v464, 3
    %v3916 = vrot.slane %v464, 4
    %v3917 = vrot.slane %v464, 5
    %v3918 = vrot.slane %v464, 6
    %v3919 = vrot.slane %v464, 7
    %v3920 = vperm.slane %v464, 0
    %v3921 = vperm.slane %v3913, 0
    %v3922 = vperm.slane %v3914, 0
    %v3923 = vperm.slane %v3915, 0
    %v3924 = vperm.slane %v3916, 0
    %v3925 = vperm.slane %v3917, 0
    %v3926 = vperm.slane %v3918, 0
    %v3927 = vperm.slane %v3919, 0
    %v3936 = vadd.f32 %v3893, %v3920
    %v3937 = vadd.f32 %v3895, %v3921
    %v3938 = vadd.f32 %v3898, %v3922
    %v3939 = vadd.f32 %v3900, %v3923
    %v3940 = vadd.f32 %v3903, %v3924
    %v3941 = vadd.f32 %v3905, %v3925
    %v3942 = vadd.f32 %v3908, %v3926
    %v3943 = vadd.f32 %v3910, %v3927
    %v3944 = vmul.f32 %v3936, 10.0
    %v3945 = vmul.f32 %v3937, 10.0
    %v3946 = vmul.f32 %v3938, 10.0
    %v3947 = vmul.f32 %v3939, 10.0
    %v3948 = vmul.f32 %v3940, 10.0
    %v3949 = vmul.f32 %v3941, 10.0
    %v3950 = vmul.f32 %v3942, 10.0
    %v3951 = vmul.f32 %v3943, 10.0
    %vm3952 = vcmp.gt.f32.partialorder %v3944, 20.0
    %vm3953 = vcmp.gt.f32.partialorder %v3945, 20.0
    %vm3954 = vcmp.gt.f32.partialorder %v3946, 20.0
    %vm3955 = vcmp.gt.f32.partialorder %v3947, 20.0
    %vm3956 = vcmp.gt.f32.partialorder %v3948, 20.0
    %vm3957 = vcmp.gt.f32.partialorder %v3949, 20.0
    %vm3958 = vcmp.gt.f32.partialorder %v3950, 20.0
    %vm3959 = vcmp.gt.f32.partialorder %v3951, 20.0
    %v3960 = vmin.f32 %v3944, 20.0
    %v3961 = vmin.f32 %v3945, 20.0
    %v3962 = vmin.f32 %v3946, 20.0
    %v3963 = vmin.f32 %v3947, 20.0
    %v3964 = vmin.f32 %v3948, 20.0
    %v3965 = vmin.f32 %v3949, 20.0
    %v3966 = vmin.f32 %v3950, 20.0
    %v3967 = vmin.f32 %v3951, 20.0
    %v3968 = vmul.f32 %v3960, 1.442695
    %v3969 = vpow.pop %v3968
    %v3970 = vmul.f32 %v3961, 1.442695
    %v3971 = vpow.pop %v3970
    %v3972 = vmul.f32 %v3962, 1.442695
    %v3973 = vpow.pop %v3972
    %v3974 = vmul.f32 %v3963, 1.442695
    %v3975 = vpow.pop %v3974
    %v3976 = vmul.f32 %v3964, 1.442695
    %v3977 = vpow.pop %v3976
    %v3978 = vmul.f32 %v3965, 1.442695
    %v3979 = vpow.pop %v3978
    %v3980 = vmul.f32 %v3966, 1.442695
    %v3981 = vpow.pop %v3980
    %v3982 = vmul.f32 %v3967, 1.442695
    %v3983 = vpow.pop %v3982
    %v3984 = vadd.f32 %v3969, 1.0
    %v3985 = vlog2.pop %v3984
    %v3986 = vmul.f32 %v3985, 0.6931472
    %v3987 = vmul.f32 -0.5, %v3969
    %v3988 = vadd.f32 %v3987, 1.0
    %v3989 = vmul.f32 %v3988, %v3969
    %v3990 = vand.u32 2147483647, %v3969
    %vm3991 = vcmp.lt.f32.partialorder %v3990, 0.0004427343
    %v3992 = vsel %vm3991, %v3989, %v3986
    %v3993 = vadd.f32 %v3971, 1.0
    %v3994 = vlog2.pop %v3993
    %v3995 = vmul.f32 %v3994, 0.6931472
    %v3996 = vmul.f32 -0.5, %v3971
    %v3997 = vadd.f32 %v3996, 1.0
    %v3998 = vmul.f32 %v3997, %v3971
    %v3999 = vand.u32 2147483647, %v3971
    %vm4000 = vcmp.lt.f32.partialorder %v3999, 0.0004427343
    %v4001 = vsel %vm4000, %v3998, %v3995
    %v4002 = vadd.f32 %v3973, 1.0
    %v4003 = vlog2.pop %v4002
    %v4004 = vmul.f32 %v4003, 0.6931472
    %v4005 = vmul.f32 -0.5, %v3973
    %v4006 = vadd.f32 %v4005, 1.0
    %v4007 = vmul.f32 %v4006, %v3973
    %v4008 = vand.u32 2147483647, %v3973
    %vm4009 = vcmp.lt.f32.partialorder %v4008, 0.0004427343
    %v4010 = vsel %vm4009, %v4007, %v4004
    %v4011 = vadd.f32 %v3975, 1.0
    %v4012 = vlog2.pop %v4011
    %v4013 = vmul.f32 %v4012, 0.6931472
    %v4014 = vmul.f32 -0.5, %v3975
    %v4015 = vadd.f32 %v4014, 1.0
    %v4016 = vmul.f32 %v4015, %v3975
    %v4017 = vand.u32 2147483647, %v3975
    %vm4018 = vcmp.lt.f32.partialorder %v4017, 0.0004427343
    %v4019 = vsel %vm4018, %v4016, %v4013
    %v4020 = vadd.f32 %v3977, 1.0
    %v4021 = vlog2.pop %v4020
    %v4022 = vmul.f32 %v4021, 0.6931472
    %v4023 = vmul.f32 -0.5, %v3977
    %v4024 = vadd.f32 %v4023, 1.0
    %v4025 = vmul.f32 %v4024, %v3977
    %v4026 = vand.u32 2147483647, %v3977
    %vm4027 = vcmp.lt.f32.partialorder %v4026, 0.0004427343
    %v4028 = vsel %vm4027, %v4025, %v4022
    %v4029 = vadd.f32 %v3979, 1.0
    %v4030 = vlog2.pop %v4029
    %v4031 = vmul.f32 %v4030, 0.6931472
    %v4032 = vmul.f32 -0.5, %v3979
    %v4033 = vadd.f32 %v4032, 1.0
    %v4034 = vmul.f32 %v4033, %v3979
    %v4035 = vand.u32 2147483647, %v3979
    %vm4036 = vcmp.lt.f32.partialorder %v4035, 0.0004427343
    %v4037 = vsel %vm4036, %v4034, %v4031
    %v4038 = vadd.f32 %v3981, 1.0
    %v4039 = vlog2.pop %v4038
    %v4040 = vmul.f32 %v4039, 0.6931472
    %v4041 = vmul.f32 -0.5, %v3981
    %v4042 = vadd.f32 %v4041, 1.0
    %v4043 = vmul.f32 %v4042, %v3981
    %v4044 = vand.u32 2147483647, %v3981
    %vm4045 = vcmp.lt.f32.partialorder %v4044, 0.0004427343
    %v4046 = vsel %vm4045, %v4043, %v4040
    %v4047 = vadd.f32 %v3983, 1.0
    %v4048 = vlog2.pop %v4047
    %v4049 = vmul.f32 %v4048, 0.6931472
    %v4050 = vmul.f32 -0.5, %v3983
    %v4051 = vadd.f32 %v4050, 1.0
    %v4052 = vmul.f32 %v4051, %v3983
    %v4053 = vand.u32 2147483647, %v3983
    %vm4054 = vcmp.lt.f32.partialorder %v4053, 0.0004427343
    %v4055 = vsel %vm4054, %v4052, %v4049
    %v4056 = vmul.f32 %v3992, %v3396
    %v4057 = vmul.f32 %v4001, %v3396
    %v4058 = vmul.f32 %v4010, %v3396
    %v4059 = vmul.f32 %v4019, %v3396
    %v4060 = vmul.f32 %v4028, %v3396
    %v4061 = vmul.f32 %v4037, %v3396
    %v4062 = vmul.f32 %v4046, %v3396
    %v4063 = vmul.f32 %v4055, %v3396
    %v4064 = vsel %vm3952, %v3936, %v4056
    %v4065 = vsel %vm3953, %v3937, %v4057
    %v4066 = vsel %vm3954, %v3938, %v4058
    %v4067 = vsel %vm3955, %v3939, %v4059
    %v4068 = vsel %vm3956, %v3940, %v4060
    %v4069 = vsel %vm3957, %v3941, %v4061
    %v4070 = vsel %vm3958, %v3942, %v4062
    %v4071 = vsel %vm3959, %v3943, %v4063
    %v4072 = vpack.c.bf16 %v4065, %v4064
    %v4073 = vpack.c.bf16 %v4067, %v4066
    %v4074 = vpack.c.bf16 %v4069, %v4068
    %v4075 = vpack.c.bf16 %v4071, %v4070
    %v4076 = vld [vmem:[%s12] sm:$0xf]
    %v4077 = vld [vmem:[%s12 + $0x4] sm:$0xf]
    %v4078 = vld [vmem:[%s12 + $0x8] sm:$0xf]
    %v4079 = vld [vmem:[%s12 + $0xc] sm:$0xf]
    %v4080 = vld [vmem:[%s12 + $0x10] sm:$0xf]
    %v4081 = vld [vmem:[%s12 + $0x14] sm:$0xf]
    %v4082 = vld [vmem:[%s12 + $0x18] sm:$0xf]
    %v4083 = vld [vmem:[%s12 + $0x1c] sm:$0xf]
    %v4084 = vld [vmem:[%s13] sm:$0x1]
    %v4086 = vperm.slane %v4084, 0
    %v4096 = vunpack.c.l.b16 %v4076
    %v4097 = vunpack.c.l.b16 %v4077
    %v4098 = vunpack.c.l.b16 %v4078
    %v4099 = vunpack.c.l.b16 %v4079
    %v4100 = vunpack.c.l.b16 %v4080
    %v4101 = vunpack.c.l.b16 %v4081
    %v4102 = vunpack.c.l.b16 %v4082
    %v4103 = vunpack.c.l.b16 %v4083
    %v4104 = vpack.c.b16 %v4097, %v4096
    %v4105 = vpack.c.b16 %v4099, %v4098
    %v4106 = vpack.c.b16 %v4101, %v4100
    %v4107 = vpack.c.b16 %v4103, %v4102
    %v4113 = vsel %vm3453, %v4072, 0
    %v4116 = vsel %vm3453, %v4073, 0
    %v4119 = vsel %vm3453, %v4074, 0
    %v4122 = vsel %vm3453, %v4075, 0
    %4124 = vmatpush.bf16.msra.mxu0 0
    %4125 = vmatpush.bf16.msra.mxu0 0
    %4126 = vmatpush.bf16.msra.mxu0 0
    %4127 = vmatpush.bf16.msra.mxu0 0
    %4128 = vmatpush.bf16.msra.mxu0 %v4107
    %4129 = vmatpush.bf16.msra.mxu0 %v4106
    %4130 = vmatpush.bf16.msra.mxu0 %v4105
    %4131 = vmatpush.bf16.msra.mxu0 %v4104
    %4132 = vmatmul.bf16.gmra.mxu0 %v4113
    %v4133 = vpop.f32.mrf.mxu0
    %v4134 = vadd.f32 %v4086, %v4133
    %v4135 = vpop.f32.mrf.mxu0
    %v4136 = vadd.f32 %v4086, %v4135
    %4137 = vmatmul.bf16.gmra.mxu0 %v4116
    %v4138 = vpop.f32.mrf.mxu0
    %v4139 = vadd.f32 %v4086, %v4138
    %v4140 = vpop.f32.mrf.mxu0
    %v4141 = vadd.f32 %v4086, %v4140
    %4142 = vmatmul.bf16.gmra.mxu0 %v4119
    %v4143 = vpop.f32.mrf.mxu0
    %v4144 = vadd.f32 %v4086, %v4143
    %v4145 = vpop.f32.mrf.mxu0
    %v4146 = vadd.f32 %v4086, %v4145
    %4147 = vmatmul.bf16.gmra.mxu0 %v4122
    %v4148 = vpop.f32.mrf.mxu0
    %v4149 = vadd.f32 %v4086, %v4148
    %v4150 = vpop.f32.mrf.mxu0
    %v4151 = vadd.f32 %v4086, %v4150
    %4152 = vdwg.mxu0
    %v4153 = vxor.u32 %v4134, 2147483648
    %v4154 = vxor.u32 %v4136, 2147483648
    %v4155 = vxor.u32 %v4139, 2147483648
    %v4156 = vxor.u32 %v4141, 2147483648
    %v4157 = vxor.u32 %v4144, 2147483648
    %v4158 = vxor.u32 %v4146, 2147483648
    %v4159 = vxor.u32 %v4149, 2147483648
    %v4160 = vxor.u32 %v4151, 2147483648
    %v4161 = vmul.f32 %v4153, 1.442695
    %v4162 = vpow.pop %v4161
    %v4163 = vmul.f32 %v4154, 1.442695
    %v4164 = vpow.pop %v4163
    %v4165 = vmul.f32 %v4155, 1.442695
    %v4166 = vpow.pop %v4165
    %v4167 = vmul.f32 %v4156, 1.442695
    %v4168 = vpow.pop %v4167
    %v4169 = vmul.f32 %v4157, 1.442695
    %v4170 = vpow.pop %v4169
    %v4171 = vmul.f32 %v4158, 1.442695
    %v4172 = vpow.pop %v4171
    %v4173 = vmul.f32 %v4159, 1.442695
    %v4174 = vpow.pop %v4173
    %v4175 = vmul.f32 %v4160, 1.442695
    %v4176 = vpow.pop %v4175
    %v4177 = vadd.f32 %v4162, 1.0
    %v4178 = vadd.f32 %v4164, 1.0
    %v4179 = vadd.f32 %v4166, 1.0
    %v4180 = vadd.f32 %v4168, 1.0
    %v4181 = vadd.f32 %v4170, 1.0
    %v4182 = vadd.f32 %v4172, 1.0
    %v4183 = vadd.f32 %v4174, 1.0
    %v4184 = vadd.f32 %v4176, 1.0
    %v4185 = vrcp.pop %v4177
    %v4186 = vmul.f32 %v4177, %v4185
    %v4187 = vsub.f32 1.0, %v4186
    %v4188 = vmul.f32 %v4185, %v4187
    %v4189 = vadd.f32 %v4185, %v4188
    %vm4190 = vweird.f32 %v4177
    %vm4191 = vweird.f32 %v4185
    %vm4192 = vmor %vm4190, %vm4191
    %v4193 = vsel %vm4192, %v4185, %v4189
    %v4194 = vand.u32 2147483647, %v4177
    %vm4195 = vcmp.eq.f32.partialorder %v4194, 8.507059e+37
    %v4196 = vand.u32 %v4177, 2147483648
    %v4197 = vor.u32 1.1754944e-38, %v4196
    %v4198 = vsel %vm4195, %v4197, %v4193
    %v4199 = vmul.f32 1.0, %v4198
    %v4200 = vrcp.pop %v4178
    %v4201 = vmul.f32 %v4178, %v4200
    %v4202 = vsub.f32 1.0, %v4201
    %v4203 = vmul.f32 %v4200, %v4202
    %v4204 = vadd.f32 %v4200, %v4203
    %vm4205 = vweird.f32 %v4178
    %vm4206 = vweird.f32 %v4200
    %vm4207 = vmor %vm4205, %vm4206
    %v4208 = vsel %vm4207, %v4200, %v4204
    %v4209 = vand.u32 2147483647, %v4178
    %vm4210 = vcmp.eq.f32.partialorder %v4209, 8.507059e+37
    %v4211 = vand.u32 %v4178, 2147483648
    %v4212 = vor.u32 1.1754944e-38, %v4211
    %v4213 = vsel %vm4210, %v4212, %v4208
    %v4214 = vmul.f32 1.0, %v4213
    %v4215 = vrcp.pop %v4179
    %v4216 = vmul.f32 %v4179, %v4215
    %v4217 = vsub.f32 1.0, %v4216
    %v4218 = vmul.f32 %v4215, %v4217
    %v4219 = vadd.f32 %v4215, %v4218
    %vm4220 = vweird.f32 %v4179
    %vm4221 = vweird.f32 %v4215
    %vm4222 = vmor %vm4220, %vm4221
    %v4223 = vsel %vm4222, %v4215, %v4219
    %v4224 = vand.u32 2147483647, %v4179
    %vm4225 = vcmp.eq.f32.partialorder %v4224, 8.507059e+37
    %v4226 = vand.u32 %v4179, 2147483648
    %v4227 = vor.u32 1.1754944e-38, %v4226
    %v4228 = vsel %vm4225, %v4227, %v4223
    %v4229 = vmul.f32 1.0, %v4228
    %v4230 = vrcp.pop %v4180
    %v4231 = vmul.f32 %v4180, %v4230
    %v4232 = vsub.f32 1.0, %v4231
    %v4233 = vmul.f32 %v4230, %v4232
    %v4234 = vadd.f32 %v4230, %v4233
    %vm4235 = vweird.f32 %v4180
    %vm4236 = vweird.f32 %v4230
    %vm4237 = vmor %vm4235, %vm4236
    %v4238 = vsel %vm4237, %v4230, %v4234
    %v4239 = vand.u32 2147483647, %v4180
    %vm4240 = vcmp.eq.f32.partialorder %v4239, 8.507059e+37
    %v4241 = vand.u32 %v4180, 2147483648
    %v4242 = vor.u32 1.1754944e-38, %v4241
    %v4243 = vsel %vm4240, %v4242, %v4238
    %v4244 = vmul.f32 1.0, %v4243
    %v4245 = vrcp.pop %v4181
    %v4246 = vmul.f32 %v4181, %v4245
    %v4247 = vsub.f32 1.0, %v4246
    %v4248 = vmul.f32 %v4245, %v4247
    %v4249 = vadd.f32 %v4245, %v4248
    %vm4250 = vweird.f32 %v4181
    %vm4251 = vweird.f32 %v4245
    %vm4252 = vmor %vm4250, %vm4251
    %v4253 = vsel %vm4252, %v4245, %v4249
    %v4254 = vand.u32 2147483647, %v4181
    %vm4255 = vcmp.eq.f32.partialorder %v4254, 8.507059e+37
    %v4256 = vand.u32 %v4181, 2147483648
    %v4257 = vor.u32 1.1754944e-38, %v4256
    %v4258 = vsel %vm4255, %v4257, %v4253
    %v4259 = vmul.f32 1.0, %v4258
    %v4260 = vrcp.pop %v4182
    %v4261 = vmul.f32 %v4182, %v4260
    %v4262 = vsub.f32 1.0, %v4261
    %v4263 = vmul.f32 %v4260, %v4262
    %v4264 = vadd.f32 %v4260, %v4263
    %vm4265 = vweird.f32 %v4182
    %vm4266 = vweird.f32 %v4260
    %vm4267 = vmor %vm4265, %vm4266
    %v4268 = vsel %vm4267, %v4260, %v4264
    %v4269 = vand.u32 2147483647, %v4182
    %vm4270 = vcmp.eq.f32.partialorder %v4269, 8.507059e+37
    %v4271 = vand.u32 %v4182, 2147483648
    %v4272 = vor.u32 1.1754944e-38, %v4271
    %v4273 = vsel %vm4270, %v4272, %v4268
    %v4274 = vmul.f32 1.0, %v4273
    %v4275 = vrcp.pop %v4183
    %v4276 = vmul.f32 %v4183, %v4275
    %v4277 = vsub.f32 1.0, %v4276
    %v4278 = vmul.f32 %v4275, %v4277
    %v4279 = vadd.f32 %v4275, %v4278
    %vm4280 = vweird.f32 %v4183
    %vm4281 = vweird.f32 %v4275
    %vm4282 = vmor %vm4280, %vm4281
    %v4283 = vsel %vm4282, %v4275, %v4279
    %v4284 = vand.u32 2147483647, %v4183
    %vm4285 = vcmp.eq.f32.partialorder %v4284, 8.507059e+37
    %v4286 = vand.u32 %v4183, 2147483648
    %v4287 = vor.u32 1.1754944e-38, %v4286
    %v4288 = vsel %vm4285, %v4287, %v4283
    %v4289 = vmul.f32 1.0, %v4288
    %v4290 = vrcp.pop %v4184
    %v4291 = vmul.f32 %v4184, %v4290
    %v4292 = vsub.f32 1.0, %v4291
    %v4293 = vmul.f32 %v4290, %v4292
    %v4294 = vadd.f32 %v4290, %v4293
    %vm4295 = vweird.f32 %v4184
    %vm4296 = vweird.f32 %v4290
    %vm4297 = vmor %vm4295, %vm4296
    %v4298 = vsel %vm4297, %v4290, %v4294
    %v4299 = vand.u32 2147483647, %v4184
    %vm4300 = vcmp.eq.f32.partialorder %v4299, 8.507059e+37
    %v4301 = vand.u32 %v4184, 2147483648
    %v4302 = vor.u32 1.1754944e-38, %v4301
    %v4303 = vsel %vm4300, %v4302, %v4298
    %v4304 = vmul.f32 1.0, %v4303
    %4313 = vrot.lane.b32.xlu0 %v4199, 1
    %v4314 = vpop.permute.xlu0 %4313
    %4315 = vrot.lane.b32.xlu0 %v4214, 1
    %v4316 = vpop.permute.xlu0 %4315
    %4317 = vrot.lane.b32.xlu0 %v4229, 1
    %v4318 = vpop.permute.xlu0 %4317
    %4319 = vrot.lane.b32.xlu0 %v4244, 1
    %v4320 = vpop.permute.xlu0 %4319
    %4321 = vrot.lane.b32.xlu0 %v4259, 1
    %v4322 = vpop.permute.xlu0 %4321
    %4323 = vrot.lane.b32.xlu0 %v4274, 1
    %v4324 = vpop.permute.xlu0 %4323
    %4325 = vrot.lane.b32.xlu0 %v4289, 1
    %v4326 = vpop.permute.xlu0 %4325
    %4327 = vrot.lane.b32.xlu0 %v4304, 1
    %v4328 = vpop.permute.xlu0 %4327
    %vm4337 = vcmask 7168
    %v4338 = vsel %vm4337, %v3823, %v4314
    %v4339 = vsel %vm4337, %v3824, %v4316
    %v4340 = vsel %vm4337, %v3825, %v4318
    %v4341 = vsel %vm4337, %v3826, %v4320
    %v4342 = vsel %vm4337, %v3827, %v4322
    %v4343 = vsel %vm4337, %v3828, %v4324
    %v4344 = vsel %vm4337, %v3829, %v4326
    %v4345 = vsel %vm4337, %v3830, %v4328
    %vm4346 = vcmask 31744
    %4347 = vst.msk [vmem:[%s14] sm:$0xff] %vm4346, %v4338
    %4348 = vst.msk [vmem:[%s14 + $0x8] sm:$0xff] %vm4346, %v4339
    %4349 = vst.msk [vmem:[%s14 + $0x10] sm:$0xff] %vm4346, %v4340
    %4350 = vst.msk [vmem:[%s14 + $0x18] sm:$0xff] %vm4346, %v4341
    %4351 = vst.msk [vmem:[%s14 + $0x20] sm:$0xff] %vm4346, %v4342
    %4352 = vst.msk [vmem:[%s14 + $0x28] sm:$0xff] %vm4346, %v4343
    %4353 = vst.msk [vmem:[%s14 + $0x30] sm:$0xff] %vm4346, %v4344
    %4354 = vst.msk [vmem:[%s14 + $0x38] sm:$0xff] %vm4346, %v4345
    // Predicated region
    $region62: #{tpu_custom_call.1} parent=1 // pred_check
      _
    $region63: #{tpu_custom_call.1} parent=1 // pred_check_branch
      %4356 = sbr.rel (0) target = $region65
    $region64: #{tpu_custom_call.1} parent=1 // pred_region
      _
    $region65: #{tpu_custom_call.1} parent=1 // pred_fallthru
      _
    // Predicated region
    $region66: #{tpu_custom_call.1} parent=1 // pred_check
      _
    $region67: #{tpu_custom_call.1} parent=1 // pred_check_branch
      %4358 = sbr.rel (0) target = $region69
    $region68: #{tpu_custom_call.1} parent=1 // pred_region
      _
    $region69: #{tpu_custom_call.1} parent=1 // pred_fallthru
      _
    %4359 = vsyncpa [#allocation4], 1

</llo_original>
